<compile_context>
chip_gen: v7x
topology: tpu7x:2x2x1
jax: 0.10.0
libtpu: 0.0.40
codegen_flags: <defaults>
</compile_context>

<pallas_src>
import functools

import jax
import jax.numpy as jnp
from jax import lax
from jax.experimental import pallas as pl
from jax.experimental.pallas import tpu as pltpu

LN_EPS = 1e-6  # timm ViT LayerNorm eps


# ----------------------------------------------------------------------------
# Fused ViT forward kernel
# ----------------------------------------------------------------------------

def _vit_kernel(patches_ref, w_patch_ref, b_patch_ref, cls_pos_ref,
                ln1_g_ref, ln1_b_ref, w_qkv_ref, b_qkv_ref,
                w_proj_ref, b_proj_ref, ln2_g_ref, ln2_b_ref,
                w_fc1_ref, b_fc1_ref, w_fc2_ref, b_fc2_ref,
                lnf_g_ref, lnf_b_ref, w_head_ref, b_head_ref,
                o_ref, *, B, P, S, D, H, L):
    Dh = D // H
    scale = Dh ** -0.5  # static python float

    def layer_norm(x, g, b):
        mu = jnp.mean(x, axis=-1, keepdims=True)
        xc = x - mu
        var = jnp.mean(xc * xc, axis=-1, keepdims=True)
        return xc * lax.rsqrt(var + LN_EPS) * g + b

    def dense(x, w, b):
        # bf16 MXU matmul with f32 accumulation; batch folded into M.
        y = jnp.dot(x.astype(jnp.bfloat16), w,
                    preferred_element_type=jnp.float32)
        return y + b

    # --- patch embedding: (B*P, C*ph*pw) @ (C*ph*pw, D) ------------------------
    pt = dense(patches_ref[...], w_patch_ref[...], b_patch_ref[...])   # (B*P, D)

    # --- prepend cls token, add positional embedding (row 0 of cls_pos is
    #     cls_token + pos[0]; rows 1.. are pos for patch tokens) ---------------
    cls_pos = cls_pos_ref[...]                                         # (S, D)
    tok_rows = []
    for b in range(B):                                                 # B static
        tok_rows.append(cls_pos[0:1, :])
        tok_rows.append(pt[b * P:(b + 1) * P, :] + cls_pos[1:, :])
    x = jnp.concatenate(tok_rows, axis=0)                              # (B*S, D)

    # --- transformer encoder blocks (static unroll over depth) ----------------
    for l in range(L):
        # -- multi-head self-attention --
        xn = layer_norm(x, ln1_g_ref[l], ln1_b_ref[l])
        qkv = dense(xn, w_qkv_ref[l], b_qkv_ref[l])                    # (B*S, 3D)
        # TODO(synk): attention uses a static python loop over (batch, head)
        # (B*H = 4 tiny dots here); at realistic B/H a batched 3-D einsum
        # formulation would keep the MXU better occupied.
        batch_out = []
        for b in range(B):
            qkv_b = qkv[b * S:(b + 1) * S, :]                          # (S, 3D)
            head_out = []
            for h in range(H):
                q = qkv_b[:, h * Dh:(h + 1) * Dh].astype(jnp.bfloat16)
                k = qkv_b[:, D + h * Dh:D + (h + 1) * Dh].astype(jnp.bfloat16)
                v = qkv_b[:, 2 * D + h * Dh:2 * D + (h + 1) * Dh].astype(jnp.bfloat16)
                s = lax.dot_general(q, k, (((1,), (1,)), ((), ())),
                                    preferred_element_type=jnp.float32)
                s = s * scale                                          # (S, S)
                s = s - jnp.max(s, axis=-1, keepdims=True)
                e = jnp.exp(s)
                p = e * pl.reciprocal(jnp.sum(e, axis=-1, keepdims=True),
                                      approx=True)
                head_out.append(jnp.dot(p.astype(jnp.bfloat16), v,
                                        preferred_element_type=jnp.float32))
            batch_out.append(jnp.concatenate(head_out, axis=-1))       # (S, D)
        attn = jnp.concatenate(batch_out, axis=0)                      # (B*S, D)
        x = x + dense(attn, w_proj_ref[l], b_proj_ref[l])

        # -- MLP --
        xn = layer_norm(x, ln2_g_ref[l], ln2_b_ref[l])
        h1 = dense(xn, w_fc1_ref[l], b_fc1_ref[l])                     # (B*S, 4D)
        # TODO(synk): timm ViT uses exact erf-GELU; tanh-approx GELU used here.
        h1 = jax.nn.gelu(h1, approximate=True)
        x = x + dense(h1, w_fc2_ref[l], b_fc2_ref[l])

    # --- final LayerNorm, take cls token, linear head (lane-padded to 128) ----
    xn = layer_norm(x, lnf_g_ref[...], lnf_b_ref[...])
    cls = jnp.concatenate([xn[b * S:b * S + 1, :] for b in range(B)], axis=0)
    o_ref[...] = dense(cls, w_head_ref[...], b_head_ref[...])          # (B, 128)


# ----------------------------------------------------------------------------
# Wrapper
# ----------------------------------------------------------------------------

def vit_forward(x, params, *, patch, num_heads, depth, num_classes):
    B, C, Himg, Wimg = x.shape
    gh, gw = Himg // patch, Wimg // patch
    P = gh * gw
    S = P + 1
    D = params['cls_pos'].shape[1]

    # TODO(synk): patch im2col (pure reshape/transpose layout plumbing) kept in
    # plain JAX; the patch projection matmul itself runs inside the fused kernel.
    patches = x.reshape(B, C, gh, patch, gw, patch)
    patches = jnp.transpose(patches, (0, 2, 4, 1, 3, 5))
    patches = patches.reshape(B * P, C * patch * patch)                # (B*P, 768)

    kern = functools.partial(_vit_kernel, B=B, P=P, S=S, D=D,
                             H=num_heads, L=depth)
    out_pad = pl.pallas_call(
        kern,
        out_shape=jax.ShapeDtypeStruct((B, params['w_head'].shape[1]),
                                       jnp.float32),
        compiler_params=pltpu.CompilerParams(
            vmem_limit_bytes=32 * 1024 * 1024),
    )(patches,
      params['w_patch'], params['b_patch'], params['cls_pos'],
      params['ln1_g'], params['ln1_b'], params['w_qkv'], params['b_qkv'],
      params['w_proj'], params['b_proj'], params['ln2_g'], params['ln2_b'],
      params['w_fc1'], params['b_fc1'], params['w_fc2'], params['b_fc2'],
      params['lnf_g'], params['lnf_b'], params['w_head'], params['b_head'])
    return out_pad[:, :num_classes]


# ----------------------------------------------------------------------------
# Deterministic parameter init (matches the ViT structure; weights pre-cast
# to bf16 for the MXU, biases / LN params kept f32)
# ----------------------------------------------------------------------------

def init_params(key, *, in_chans, patch, img, dim, depth, mlp_ratio,
                num_classes, head_pad=128):
    P = (img // patch) ** 2
    S = P + 1
    pd = in_chans * patch * patch
    hidden = dim * mlp_ratio
    keys = iter(jax.random.split(key, 32))

    def w(shape, scale=0.05):
        return scale * jax.random.normal(next(keys), shape, jnp.float32)

    p = {}
    p['w_patch'] = w((pd, dim)).astype(jnp.bfloat16)
    p['b_patch'] = w((1, dim), 0.01)
    cls = w((1, dim))
    pos = w((S, dim))
    p['cls_pos'] = pos.at[0:1, :].add(cls)                # row 0 = cls + pos[0]

    p['ln1_g'] = jnp.ones((depth, 1, dim), jnp.float32)
    p['ln1_b'] = jnp.zeros((depth, 1, dim), jnp.float32)
    p['ln2_g'] = jnp.ones((depth, 1, dim), jnp.float32)
    p['ln2_b'] = jnp.zeros((depth, 1, dim), jnp.float32)

    p['w_qkv'] = w((depth, dim, 3 * dim)).astype(jnp.bfloat16)
    p['b_qkv'] = w((depth, 1, 3 * dim), 0.01)
    p['w_proj'] = w((depth, dim, dim)).astype(jnp.bfloat16)
    p['b_proj'] = w((depth, 1, dim), 0.01)
    p['w_fc1'] = w((depth, dim, hidden)).astype(jnp.bfloat16)
    p['b_fc1'] = w((depth, 1, hidden), 0.01)
    p['w_fc2'] = w((depth, hidden, dim)).astype(jnp.bfloat16)
    p['b_fc2'] = w((depth, 1, dim), 0.01)

    p['lnf_g'] = jnp.ones((1, dim), jnp.float32)
    p['lnf_b'] = jnp.zeros((1, dim), jnp.float32)

    # head, lane-padded to 128 for a dense store; sliced back in the wrapper
    wh = w((dim, num_classes))
    bh = w((1, num_classes), 0.01)
    p['w_head'] = (jnp.zeros((dim, head_pad), jnp.float32)
                   .at[:, :num_classes].set(wh).astype(jnp.bfloat16))
    p['b_head'] = (jnp.zeros((1, head_pad), jnp.float32)
                   .at[:, :num_classes].set(bh))
    return p


if __name__ == "__main__":
    B, CIN, IMG = 2, 3, 32       # batch, channels, image size (patch16 -> 4 patches)
    PATCH = 16
    DIM, HEADS, DEPTH, MLP_RATIO = 64, 2, 2, 4
    NUM_CLASSES = 8

    key = jax.random.PRNGKey(0)
    kx, kp = jax.random.split(key)
    x = jax.random.normal(kx, (B, CIN, IMG, IMG), jnp.float32)
    params = init_params(kp, in_chans=CIN, patch=PATCH, img=IMG, dim=DIM,
                         depth=DEPTH, mlp_ratio=MLP_RATIO,
                         num_classes=NUM_CLASSES)

    fwd = jax.jit(functools.partial(vit_forward, patch=PATCH, num_heads=HEADS,
                                    depth=DEPTH, num_classes=NUM_CLASSES))
    out = jax.block_until_ready(fwd(x, params))
    assert out.shape == (B, NUM_CLASSES), out.shape
    assert bool(jnp.all(jnp.isfinite(out)))
    print("KERNEL_OK")
</pallas_src>

<mosaic_0001>
module attributes {stable_mosaic.version = 11 : i64} {
  func.func @_vit_kernel(%arg0: memref<8x768xf32, #tpu.memory_space<vmem>>, %arg1: memref<768x64xbf16, #tpu.memory_space<vmem>>, %arg2: memref<1x64xf32, #tpu.memory_space<vmem>>, %arg3: memref<5x64xf32, #tpu.memory_space<vmem>>, %arg4: memref<2x1x64xf32, #tpu.memory_space<vmem>>, %arg5: memref<2x1x64xf32, #tpu.memory_space<vmem>>, %arg6: memref<2x64x192xbf16, #tpu.memory_space<vmem>>, %arg7: memref<2x1x192xf32, #tpu.memory_space<vmem>>, %arg8: memref<2x64x64xbf16, #tpu.memory_space<vmem>>, %arg9: memref<2x1x64xf32, #tpu.memory_space<vmem>>, %arg10: memref<2x1x64xf32, #tpu.memory_space<vmem>>, %arg11: memref<2x1x64xf32, #tpu.memory_space<vmem>>, %arg12: memref<2x64x256xbf16, #tpu.memory_space<vmem>>, %arg13: memref<2x1x256xf32, #tpu.memory_space<vmem>>, %arg14: memref<2x256x64xbf16, #tpu.memory_space<vmem>>, %arg15: memref<2x1x64xf32, #tpu.memory_space<vmem>>, %arg16: memref<1x64xf32, #tpu.memory_space<vmem>>, %arg17: memref<1x64xf32, #tpu.memory_space<vmem>>, %arg18: memref<64x128xbf16, #tpu.memory_space<vmem>>, %arg19: memref<1x128xf32, #tpu.memory_space<vmem>>, %arg20: memref<2x128xf32, #tpu.memory_space<vmem>>) attributes {dimension_semantics = [], scalar_prefetch = 0 : i64, scratch_operands = 0 : i64, tpu.core_type = #tpu.core_type<tc>} {
    %c0 = arith.constant 0 : index
    %c0_0 = arith.constant 0 : index
    %0 = vector.load %arg0[%c0, %c0_0] : memref<8x768xf32, #tpu.memory_space<vmem>>, vector<8x768xf32>
    %c0_1 = arith.constant 0 : index
    %c0_2 = arith.constant 0 : index
    %1 = vector.load %arg1[%c0_1, %c0_2] : memref<768x64xbf16, #tpu.memory_space<vmem>>, vector<768x64xbf16>
    %c0_3 = arith.constant 0 : index
    %c0_4 = arith.constant 0 : index
    %2 = vector.load %arg2[%c0_3, %c0_4] : memref<1x64xf32, #tpu.memory_space<vmem>>, vector<1x64xf32>
    %3 = arith.truncf %0 : vector<8x768xf32> to vector<8x768xbf16>
    %cst = arith.constant dense<0.000000e+00> : vector<8x64xf32>
    %4 = tpu.matmul %3, %1, %cst {dimension_numbers = #tpu.dot_dimension_numbers<[1], [0], [0], [1], [0, 0, 1, 1], [], []>} : vector<8x768xbf16>, vector<768x64xbf16>, vector<8x64xf32> -> vector<8x64xf32>
    %5 = vector.broadcast %2 : vector<1x64xf32> to vector<8x64xf32>
    %6 = arith.addf %4, %5 : vector<8x64xf32>
    %c0_5 = arith.constant 0 : index
    %c0_6 = arith.constant 0 : index
    %7 = vector.load %arg3[%c0_5, %c0_6] : memref<5x64xf32, #tpu.memory_space<vmem>>, vector<5x64xf32>
    %8 = vector.extract_strided_slice %7 {offsets = [0, 0], sizes = [1, 64], strides = [1, 1]} : vector<5x64xf32> to vector<1x64xf32>
    %9 = vector.extract_strided_slice %6 {offsets = [0, 0], sizes = [4, 64], strides = [1, 1]} : vector<8x64xf32> to vector<4x64xf32>
    %10 = vector.extract_strided_slice %7 {offsets = [1, 0], sizes = [4, 64], strides = [1, 1]} : vector<5x64xf32> to vector<4x64xf32>
    %11 = arith.addf %9, %10 : vector<4x64xf32>
    %12 = vector.extract_strided_slice %7 {offsets = [0, 0], sizes = [1, 64], strides = [1, 1]} : vector<5x64xf32> to vector<1x64xf32>
    %13 = vector.extract_strided_slice %6 {offsets = [4, 0], sizes = [4, 64], strides = [1, 1]} : vector<8x64xf32> to vector<4x64xf32>
    %14 = vector.extract_strided_slice %7 {offsets = [1, 0], sizes = [4, 64], strides = [1, 1]} : vector<5x64xf32> to vector<4x64xf32>
    %15 = arith.addf %13, %14 : vector<4x64xf32>
    %16 = tpu.concatenate %8, %11, %12, %15 in 0 : vector<1x64xf32>, vector<4x64xf32>, vector<1x64xf32>, vector<4x64xf32> -> vector<10x64xf32>
    %c0_7 = arith.constant 0 : index
    %c0_8 = arith.constant 0 : index
    %c0_9 = arith.constant 0 : index
    %17 = vector.load %arg4[%c0_7, %c0_8, %c0_9] : memref<2x1x64xf32, #tpu.memory_space<vmem>>, vector<1x1x64xf32>
    %18 = vector.shape_cast %17 : vector<1x1x64xf32> to vector<1x64xf32>
    %c0_10 = arith.constant 0 : index
    %c0_11 = arith.constant 0 : index
    %c0_12 = arith.constant 0 : index
    %19 = vector.load %arg5[%c0_10, %c0_11, %c0_12] : memref<2x1x64xf32, #tpu.memory_space<vmem>>, vector<1x1x64xf32>
    %20 = vector.shape_cast %19 : vector<1x1x64xf32> to vector<1x64xf32>
    %cst_13 = arith.constant dense<0.000000e+00> : vector<10xf32>
    %21 = vector.multi_reduction <add>, %16, %cst_13 [1] : vector<10x64xf32> to vector<10xf32>
    %22 = vector.shape_cast %21 : vector<10xf32> to vector<10x1xf32>
    %cst_14 = arith.constant 6.400000e+01 : f32
    %23 = vector.broadcast %cst_14 : f32 to vector<10x1xf32>
    %24 = arith.divf %22, %23 : vector<10x1xf32>
    %25 = vector.broadcast %24 : vector<10x1xf32> to vector<10x64xf32>
    %26 = arith.subf %16, %25 : vector<10x64xf32>
    %27 = arith.mulf %26, %26 : vector<10x64xf32>
    %cst_15 = arith.constant dense<0.000000e+00> : vector<10xf32>
    %28 = vector.multi_reduction <add>, %27, %cst_15 [1] : vector<10x64xf32> to vector<10xf32>
    %29 = vector.shape_cast %28 : vector<10xf32> to vector<10x1xf32>
    %cst_16 = arith.constant 6.400000e+01 : f32
    %30 = vector.broadcast %cst_16 : f32 to vector<10x1xf32>
    %31 = arith.divf %29, %30 : vector<10x1xf32>
    %cst_17 = arith.constant 9.99999997E-7 : f32
    %32 = vector.broadcast %cst_17 : f32 to vector<10x1xf32>
    %33 = arith.addf %31, %32 : vector<10x1xf32>
    %34 = math.rsqrt %33 : vector<10x1xf32>
    %35 = vector.broadcast %34 : vector<10x1xf32> to vector<10x64xf32>
    %36 = arith.mulf %26, %35 : vector<10x64xf32>
    %37 = vector.broadcast %18 : vector<1x64xf32> to vector<10x64xf32>
    %38 = arith.mulf %36, %37 : vector<10x64xf32>
    %39 = vector.broadcast %20 : vector<1x64xf32> to vector<10x64xf32>
    %40 = arith.addf %38, %39 : vector<10x64xf32>
    %c0_18 = arith.constant 0 : index
    %c0_19 = arith.constant 0 : index
    %c0_20 = arith.constant 0 : index
    %41 = vector.load %arg6[%c0_18, %c0_19, %c0_20] : memref<2x64x192xbf16, #tpu.memory_space<vmem>>, vector<1x64x192xbf16>
    %42 = vector.shape_cast %41 : vector<1x64x192xbf16> to vector<64x192xbf16>
    %c0_21 = arith.constant 0 : index
    %c0_22 = arith.constant 0 : index
    %c0_23 = arith.constant 0 : index
    %43 = vector.load %arg7[%c0_21, %c0_22, %c0_23] : memref<2x1x192xf32, #tpu.memory_space<vmem>>, vector<1x1x192xf32>
    %44 = vector.shape_cast %43 : vector<1x1x192xf32> to vector<1x192xf32>
    %45 = arith.truncf %40 : vector<10x64xf32> to vector<10x64xbf16>
    %cst_24 = arith.constant dense<0.000000e+00> : vector<10x192xf32>
    %46 = tpu.matmul %45, %42, %cst_24 {dimension_numbers = #tpu.dot_dimension_numbers<[1], [0], [0], [1], [0, 0, 1, 1], [], []>} : vector<10x64xbf16>, vector<64x192xbf16>, vector<10x192xf32> -> vector<10x192xf32>
    %47 = vector.broadcast %44 : vector<1x192xf32> to vector<10x192xf32>
    %48 = arith.addf %46, %47 : vector<10x192xf32>
    %49 = vector.extract_strided_slice %48 {offsets = [0, 0], sizes = [5, 192], strides = [1, 1]} : vector<10x192xf32> to vector<5x192xf32>
    %50 = vector.extract_strided_slice %49 {offsets = [0, 0], sizes = [5, 32], strides = [1, 1]} : vector<5x192xf32> to vector<5x32xf32>
    %51 = arith.truncf %50 : vector<5x32xf32> to vector<5x32xbf16>
    %52 = vector.extract_strided_slice %49 {offsets = [0, 64], sizes = [5, 32], strides = [1, 1]} : vector<5x192xf32> to vector<5x32xf32>
    %53 = arith.truncf %52 : vector<5x32xf32> to vector<5x32xbf16>
    %54 = vector.extract_strided_slice %49 {offsets = [0, 128], sizes = [5, 32], strides = [1, 1]} : vector<5x192xf32> to vector<5x32xf32>
    %55 = arith.truncf %54 : vector<5x32xf32> to vector<5x32xbf16>
    %cst_25 = arith.constant dense<0.000000e+00> : vector<5x5xf32>
    %56 = tpu.matmul %51, %53, %cst_25 {dimension_numbers = #tpu.dot_dimension_numbers<[1], [1], [0], [0], [0, 0, 1, 0], [], []>} : vector<5x32xbf16>, vector<5x32xbf16>, vector<5x5xf32> -> vector<5x5xf32>
    %cst_26 = arith.constant 0.176776692 : f32
    %57 = vector.broadcast %cst_26 : f32 to vector<5x5xf32>
    %58 = arith.mulf %56, %57 : vector<5x5xf32>
    %cst_27 = arith.constant dense<0xFF800000> : vector<5xf32>
    %59 = vector.multi_reduction <maximumf>, %58, %cst_27 [1] : vector<5x5xf32> to vector<5xf32>
    %60 = vector.shape_cast %59 : vector<5xf32> to vector<5x1xf32>
    %61 = vector.broadcast %60 : vector<5x1xf32> to vector<5x5xf32>
    %62 = arith.subf %58, %61 : vector<5x5xf32>
    %63 = math.exp %62 : vector<5x5xf32>
    %cst_28 = arith.constant dense<0.000000e+00> : vector<5xf32>
    %64 = vector.multi_reduction <add>, %63, %cst_28 [1] : vector<5x5xf32> to vector<5xf32>
    %65 = vector.shape_cast %64 : vector<5xf32> to vector<5x1xf32>
    %66 = tpu.reciprocal %65 {approx = true} : vector<5x1xf32> -> vector<5x1xf32>
    %67 = vector.broadcast %66 : vector<5x1xf32> to vector<5x5xf32>
    %68 = arith.mulf %63, %67 : vector<5x5xf32>
    %69 = arith.truncf %68 : vector<5x5xf32> to vector<5x5xbf16>
    %cst_29 = arith.constant dense<0.000000e+00> : vector<5x32xf32>
    %70 = tpu.matmul %69, %55, %cst_29 {dimension_numbers = #tpu.dot_dimension_numbers<[1], [0], [0], [1], [0, 0, 1, 1], [], []>} : vector<5x5xbf16>, vector<5x32xbf16>, vector<5x32xf32> -> vector<5x32xf32>
    %71 = vector.extract_strided_slice %49 {offsets = [0, 32], sizes = [5, 32], strides = [1, 1]} : vector<5x192xf32> to vector<5x32xf32>
    %72 = arith.truncf %71 : vector<5x32xf32> to vector<5x32xbf16>
    %73 = vector.extract_strided_slice %49 {offsets = [0, 96], sizes = [5, 32], strides = [1, 1]} : vector<5x192xf32> to vector<5x32xf32>
    %74 = arith.truncf %73 : vector<5x32xf32> to vector<5x32xbf16>
    %75 = vector.extract_strided_slice %49 {offsets = [0, 160], sizes = [5, 32], strides = [1, 1]} : vector<5x192xf32> to vector<5x32xf32>
    %76 = arith.truncf %75 : vector<5x32xf32> to vector<5x32xbf16>
    %cst_30 = arith.constant dense<0.000000e+00> : vector<5x5xf32>
    %77 = tpu.matmul %72, %74, %cst_30 {dimension_numbers = #tpu.dot_dimension_numbers<[1], [1], [0], [0], [0, 0, 1, 0], [], []>} : vector<5x32xbf16>, vector<5x32xbf16>, vector<5x5xf32> -> vector<5x5xf32>
    %cst_31 = arith.constant 0.176776692 : f32
    %78 = vector.broadcast %cst_31 : f32 to vector<5x5xf32>
    %79 = arith.mulf %77, %78 : vector<5x5xf32>
    %cst_32 = arith.constant dense<0xFF800000> : vector<5xf32>
    %80 = vector.multi_reduction <maximumf>, %79, %cst_32 [1] : vector<5x5xf32> to vector<5xf32>
    %81 = vector.shape_cast %80 : vector<5xf32> to vector<5x1xf32>
    %82 = vector.broadcast %81 : vector<5x1xf32> to vector<5x5xf32>
    %83 = arith.subf %79, %82 : vector<5x5xf32>
    %84 = math.exp %83 : vector<5x5xf32>
    %cst_33 = arith.constant dense<0.000000e+00> : vector<5xf32>
    %85 = vector.multi_reduction <add>, %84, %cst_33 [1] : vector<5x5xf32> to vector<5xf32>
    %86 = vector.shape_cast %85 : vector<5xf32> to vector<5x1xf32>
    %87 = tpu.reciprocal %86 {approx = true} : vector<5x1xf32> -> vector<5x1xf32>
    %88 = vector.broadcast %87 : vector<5x1xf32> to vector<5x5xf32>
    %89 = arith.mulf %84, %88 : vector<5x5xf32>
    %90 = arith.truncf %89 : vector<5x5xf32> to vector<5x5xbf16>
    %cst_34 = arith.constant dense<0.000000e+00> : vector<5x32xf32>
    %91 = tpu.matmul %90, %76, %cst_34 {dimension_numbers = #tpu.dot_dimension_numbers<[1], [0], [0], [1], [0, 0, 1, 1], [], []>} : vector<5x5xbf16>, vector<5x32xbf16>, vector<5x32xf32> -> vector<5x32xf32>
    %92 = tpu.concatenate %70, %91 in 1 : vector<5x32xf32>, vector<5x32xf32> -> vector<5x64xf32>
    %93 = vector.extract_strided_slice %48 {offsets = [5, 0], sizes = [5, 192], strides = [1, 1]} : vector<10x192xf32> to vector<5x192xf32>
    %94 = vector.extract_strided_slice %93 {offsets = [0, 0], sizes = [5, 32], strides = [1, 1]} : vector<5x192xf32> to vector<5x32xf32>
    %95 = arith.truncf %94 : vector<5x32xf32> to vector<5x32xbf16>
    %96 = vector.extract_strided_slice %93 {offsets = [0, 64], sizes = [5, 32], strides = [1, 1]} : vector<5x192xf32> to vector<5x32xf32>
    %97 = arith.truncf %96 : vector<5x32xf32> to vector<5x32xbf16>
    %98 = vector.extract_strided_slice %93 {offsets = [0, 128], sizes = [5, 32], strides = [1, 1]} : vector<5x192xf32> to vector<5x32xf32>
    %99 = arith.truncf %98 : vector<5x32xf32> to vector<5x32xbf16>
    %cst_35 = arith.constant dense<0.000000e+00> : vector<5x5xf32>
    %100 = tpu.matmul %95, %97, %cst_35 {dimension_numbers = #tpu.dot_dimension_numbers<[1], [1], [0], [0], [0, 0, 1, 0], [], []>} : vector<5x32xbf16>, vector<5x32xbf16>, vector<5x5xf32> -> vector<5x5xf32>
    %cst_36 = arith.constant 0.176776692 : f32
    %101 = vector.broadcast %cst_36 : f32 to vector<5x5xf32>
    %102 = arith.mulf %100, %101 : vector<5x5xf32>
    %cst_37 = arith.constant dense<0xFF800000> : vector<5xf32>
    %103 = vector.multi_reduction <maximumf>, %102, %cst_37 [1] : vector<5x5xf32> to vector<5xf32>
    %104 = vector.shape_cast %103 : vector<5xf32> to vector<5x1xf32>
    %105 = vector.broadcast %104 : vector<5x1xf32> to vector<5x5xf32>
    %106 = arith.subf %102, %105 : vector<5x5xf32>
    %107 = math.exp %106 : vector<5x5xf32>
    %cst_38 = arith.constant dense<0.000000e+00> : vector<5xf32>
    %108 = vector.multi_reduction <add>, %107, %cst_38 [1] : vector<5x5xf32> to vector<5xf32>
    %109 = vector.shape_cast %108 : vector<5xf32> to vector<5x1xf32>
    %110 = tpu.reciprocal %109 {approx = true} : vector<5x1xf32> -> vector<5x1xf32>
    %111 = vector.broadcast %110 : vector<5x1xf32> to vector<5x5xf32>
    %112 = arith.mulf %107, %111 : vector<5x5xf32>
    %113 = arith.truncf %112 : vector<5x5xf32> to vector<5x5xbf16>
    %cst_39 = arith.constant dense<0.000000e+00> : vector<5x32xf32>
    %114 = tpu.matmul %113, %99, %cst_39 {dimension_numbers = #tpu.dot_dimension_numbers<[1], [0], [0], [1], [0, 0, 1, 1], [], []>} : vector<5x5xbf16>, vector<5x32xbf16>, vector<5x32xf32> -> vector<5x32xf32>
    %115 = vector.extract_strided_slice %93 {offsets = [0, 32], sizes = [5, 32], strides = [1, 1]} : vector<5x192xf32> to vector<5x32xf32>
    %116 = arith.truncf %115 : vector<5x32xf32> to vector<5x32xbf16>
    %117 = vector.extract_strided_slice %93 {offsets = [0, 96], sizes = [5, 32], strides = [1, 1]} : vector<5x192xf32> to vector<5x32xf32>
    %118 = arith.truncf %117 : vector<5x32xf32> to vector<5x32xbf16>
    %119 = vector.extract_strided_slice %93 {offsets = [0, 160], sizes = [5, 32], strides = [1, 1]} : vector<5x192xf32> to vector<5x32xf32>
    %120 = arith.truncf %119 : vector<5x32xf32> to vector<5x32xbf16>
    %cst_40 = arith.constant dense<0.000000e+00> : vector<5x5xf32>
    %121 = tpu.matmul %116, %118, %cst_40 {dimension_numbers = #tpu.dot_dimension_numbers<[1], [1], [0], [0], [0, 0, 1, 0], [], []>} : vector<5x32xbf16>, vector<5x32xbf16>, vector<5x5xf32> -> vector<5x5xf32>
    %cst_41 = arith.constant 0.176776692 : f32
    %122 = vector.broadcast %cst_41 : f32 to vector<5x5xf32>
    %123 = arith.mulf %121, %122 : vector<5x5xf32>
    %cst_42 = arith.constant dense<0xFF800000> : vector<5xf32>
    %124 = vector.multi_reduction <maximumf>, %123, %cst_42 [1] : vector<5x5xf32> to vector<5xf32>
    %125 = vector.shape_cast %124 : vector<5xf32> to vector<5x1xf32>
    %126 = vector.broadcast %125 : vector<5x1xf32> to vector<5x5xf32>
    %127 = arith.subf %123, %126 : vector<5x5xf32>
    %128 = math.exp %127 : vector<5x5xf32>
    %cst_43 = arith.constant dense<0.000000e+00> : vector<5xf32>
    %129 = vector.multi_reduction <add>, %128, %cst_43 [1] : vector<5x5xf32> to vector<5xf32>
    %130 = vector.shape_cast %129 : vector<5xf32> to vector<5x1xf32>
    %131 = tpu.reciprocal %130 {approx = true} : vector<5x1xf32> -> vector<5x1xf32>
    %132 = vector.broadcast %131 : vector<5x1xf32> to vector<5x5xf32>
    %133 = arith.mulf %128, %132 : vector<5x5xf32>
    %134 = arith.truncf %133 : vector<5x5xf32> to vector<5x5xbf16>
    %cst_44 = arith.constant dense<0.000000e+00> : vector<5x32xf32>
    %135 = tpu.matmul %134, %120, %cst_44 {dimension_numbers = #tpu.dot_dimension_numbers<[1], [0], [0], [1], [0, 0, 1, 1], [], []>} : vector<5x5xbf16>, vector<5x32xbf16>, vector<5x32xf32> -> vector<5x32xf32>
    %136 = tpu.concatenate %114, %135 in 1 : vector<5x32xf32>, vector<5x32xf32> -> vector<5x64xf32>
    %137 = tpu.concatenate %92, %136 in 0 : vector<5x64xf32>, vector<5x64xf32> -> vector<10x64xf32>
    %c0_45 = arith.constant 0 : index
    %c0_46 = arith.constant 0 : index
    %c0_47 = arith.constant 0 : index
    %138 = vector.load %arg8[%c0_45, %c0_46, %c0_47] : memref<2x64x64xbf16, #tpu.memory_space<vmem>>, vector<1x64x64xbf16>
    %139 = vector.shape_cast %138 : vector<1x64x64xbf16> to vector<64x64xbf16>
    %c0_48 = arith.constant 0 : index
    %c0_49 = arith.constant 0 : index
    %c0_50 = arith.constant 0 : index
    %140 = vector.load %arg9[%c0_48, %c0_49, %c0_50] : memref<2x1x64xf32, #tpu.memory_space<vmem>>, vector<1x1x64xf32>
    %141 = vector.shape_cast %140 : vector<1x1x64xf32> to vector<1x64xf32>
    %142 = arith.truncf %137 : vector<10x64xf32> to vector<10x64xbf16>
    %cst_51 = arith.constant dense<0.000000e+00> : vector<10x64xf32>
    %143 = tpu.matmul %142, %139, %cst_51 {dimension_numbers = #tpu.dot_dimension_numbers<[1], [0], [0], [1], [0, 0, 1, 1], [], []>} : vector<10x64xbf16>, vector<64x64xbf16>, vector<10x64xf32> -> vector<10x64xf32>
    %144 = vector.broadcast %141 : vector<1x64xf32> to vector<10x64xf32>
    %145 = arith.addf %143, %144 : vector<10x64xf32>
    %146 = arith.addf %16, %145 : vector<10x64xf32>
    %c0_52 = arith.constant 0 : index
    %c0_53 = arith.constant 0 : index
    %c0_54 = arith.constant 0 : index
    %147 = vector.load %arg10[%c0_52, %c0_53, %c0_54] : memref<2x1x64xf32, #tpu.memory_space<vmem>>, vector<1x1x64xf32>
    %148 = vector.shape_cast %147 : vector<1x1x64xf32> to vector<1x64xf32>
    %c0_55 = arith.constant 0 : index
    %c0_56 = arith.constant 0 : index
    %c0_57 = arith.constant 0 : index
    %149 = vector.load %arg11[%c0_55, %c0_56, %c0_57] : memref<2x1x64xf32, #tpu.memory_space<vmem>>, vector<1x1x64xf32>
    %150 = vector.shape_cast %149 : vector<1x1x64xf32> to vector<1x64xf32>
    %cst_58 = arith.constant dense<0.000000e+00> : vector<10xf32>
    %151 = vector.multi_reduction <add>, %146, %cst_58 [1] : vector<10x64xf32> to vector<10xf32>
    %152 = vector.shape_cast %151 : vector<10xf32> to vector<10x1xf32>
    %cst_59 = arith.constant 6.400000e+01 : f32
    %153 = vector.broadcast %cst_59 : f32 to vector<10x1xf32>
    %154 = arith.divf %152, %153 : vector<10x1xf32>
    %155 = vector.broadcast %154 : vector<10x1xf32> to vector<10x64xf32>
    %156 = arith.subf %146, %155 : vector<10x64xf32>
    %157 = arith.mulf %156, %156 : vector<10x64xf32>
    %cst_60 = arith.constant dense<0.000000e+00> : vector<10xf32>
    %158 = vector.multi_reduction <add>, %157, %cst_60 [1] : vector<10x64xf32> to vector<10xf32>
    %159 = vector.shape_cast %158 : vector<10xf32> to vector<10x1xf32>
    %cst_61 = arith.constant 6.400000e+01 : f32
    %160 = vector.broadcast %cst_61 : f32 to vector<10x1xf32>
    %161 = arith.divf %159, %160 : vector<10x1xf32>
    %cst_62 = arith.constant 9.99999997E-7 : f32
    %162 = vector.broadcast %cst_62 : f32 to vector<10x1xf32>
    %163 = arith.addf %161, %162 : vector<10x1xf32>
    %164 = math.rsqrt %163 : vector<10x1xf32>
    %165 = vector.broadcast %164 : vector<10x1xf32> to vector<10x64xf32>
    %166 = arith.mulf %156, %165 : vector<10x64xf32>
    %167 = vector.broadcast %148 : vector<1x64xf32> to vector<10x64xf32>
    %168 = arith.mulf %166, %167 : vector<10x64xf32>
    %169 = vector.broadcast %150 : vector<1x64xf32> to vector<10x64xf32>
    %170 = arith.addf %168, %169 : vector<10x64xf32>
    %c0_63 = arith.constant 0 : index
    %c0_64 = arith.constant 0 : index
    %c0_65 = arith.constant 0 : index
    %171 = vector.load %arg12[%c0_63, %c0_64, %c0_65] : memref<2x64x256xbf16, #tpu.memory_space<vmem>>, vector<1x64x256xbf16>
    %172 = vector.shape_cast %171 : vector<1x64x256xbf16> to vector<64x256xbf16>
    %c0_66 = arith.constant 0 : index
    %c0_67 = arith.constant 0 : index
    %c0_68 = arith.constant 0 : index
    %173 = vector.load %arg13[%c0_66, %c0_67, %c0_68] : memref<2x1x256xf32, #tpu.memory_space<vmem>>, vector<1x1x256xf32>
    %174 = vector.shape_cast %173 : vector<1x1x256xf32> to vector<1x256xf32>
    %175 = arith.truncf %170 : vector<10x64xf32> to vector<10x64xbf16>
    %cst_69 = arith.constant dense<0.000000e+00> : vector<10x256xf32>
    %176 = tpu.matmul %175, %172, %cst_69 {dimension_numbers = #tpu.dot_dimension_numbers<[1], [0], [0], [1], [0, 0, 1, 1], [], []>} : vector<10x64xbf16>, vector<64x256xbf16>, vector<10x256xf32> -> vector<10x256xf32>
    %177 = vector.broadcast %174 : vector<1x256xf32> to vector<10x256xf32>
    %178 = arith.addf %176, %177 : vector<10x256xf32>
    %179 = arith.mulf %178, %178 : vector<10x256xf32>
    %180 = arith.mulf %178, %179 : vector<10x256xf32>
    %cst_70 = arith.constant 4.471500e-02 : f32
    %181 = vector.broadcast %cst_70 : f32 to vector<10x256xf32>
    %182 = arith.mulf %181, %180 : vector<10x256xf32>
    %183 = arith.addf %178, %182 : vector<10x256xf32>
    %cst_71 = arith.constant 0.797884583 : f32
    %184 = vector.broadcast %cst_71 : f32 to vector<10x256xf32>
    %185 = arith.mulf %184, %183 : vector<10x256xf32>
    %186 = math.tanh %185 : vector<10x256xf32>
    %cst_72 = arith.constant 1.000000e+00 : f32
    %187 = vector.broadcast %cst_72 : f32 to vector<10x256xf32>
    %188 = arith.addf %187, %186 : vector<10x256xf32>
    %cst_73 = arith.constant 5.000000e-01 : f32
    %189 = vector.broadcast %cst_73 : f32 to vector<10x256xf32>
    %190 = arith.mulf %189, %188 : vector<10x256xf32>
    %191 = arith.mulf %178, %190 : vector<10x256xf32>
    %c0_74 = arith.constant 0 : index
    %c0_75 = arith.constant 0 : index
    %c0_76 = arith.constant 0 : index
    %192 = vector.load %arg14[%c0_74, %c0_75, %c0_76] : memref<2x256x64xbf16, #tpu.memory_space<vmem>>, vector<1x256x64xbf16>
    %193 = vector.shape_cast %192 : vector<1x256x64xbf16> to vector<256x64xbf16>
    %c0_77 = arith.constant 0 : index
    %c0_78 = arith.constant 0 : index
    %c0_79 = arith.constant 0 : index
    %194 = vector.load %arg15[%c0_77, %c0_78, %c0_79] : memref<2x1x64xf32, #tpu.memory_space<vmem>>, vector<1x1x64xf32>
    %195 = vector.shape_cast %194 : vector<1x1x64xf32> to vector<1x64xf32>
    %196 = arith.truncf %191 : vector<10x256xf32> to vector<10x256xbf16>
    %cst_80 = arith.constant dense<0.000000e+00> : vector<10x64xf32>
    %197 = tpu.matmul %196, %193, %cst_80 {dimension_numbers = #tpu.dot_dimension_numbers<[1], [0], [0], [1], [0, 0, 1, 1], [], []>} : vector<10x256xbf16>, vector<256x64xbf16>, vector<10x64xf32> -> vector<10x64xf32>
    %198 = vector.broadcast %195 : vector<1x64xf32> to vector<10x64xf32>
    %199 = arith.addf %197, %198 : vector<10x64xf32>
    %200 = arith.addf %146, %199 : vector<10x64xf32>
    %c1 = arith.constant 1 : index
    %c0_81 = arith.constant 0 : index
    %c0_82 = arith.constant 0 : index
    %201 = vector.load %arg4[%c1, %c0_81, %c0_82] : memref<2x1x64xf32, #tpu.memory_space<vmem>>, vector<1x1x64xf32>
    %202 = vector.shape_cast %201 : vector<1x1x64xf32> to vector<1x64xf32>
    %c1_83 = arith.constant 1 : index
    %c0_84 = arith.constant 0 : index
    %c0_85 = arith.constant 0 : index
    %203 = vector.load %arg5[%c1_83, %c0_84, %c0_85] : memref<2x1x64xf32, #tpu.memory_space<vmem>>, vector<1x1x64xf32>
    %204 = vector.shape_cast %203 : vector<1x1x64xf32> to vector<1x64xf32>
    %cst_86 = arith.constant dense<0.000000e+00> : vector<10xf32>
    %205 = vector.multi_reduction <add>, %200, %cst_86 [1] : vector<10x64xf32> to vector<10xf32>
    %206 = vector.shape_cast %205 : vector<10xf32> to vector<10x1xf32>
    %cst_87 = arith.constant 6.400000e+01 : f32
    %207 = vector.broadcast %cst_87 : f32 to vector<10x1xf32>
    %208 = arith.divf %206, %207 : vector<10x1xf32>
    %209 = vector.broadcast %208 : vector<10x1xf32> to vector<10x64xf32>
    %210 = arith.subf %200, %209 : vector<10x64xf32>
    %211 = arith.mulf %210, %210 : vector<10x64xf32>
    %cst_88 = arith.constant dense<0.000000e+00> : vector<10xf32>
    %212 = vector.multi_reduction <add>, %211, %cst_88 [1] : vector<10x64xf32> to vector<10xf32>
    %213 = vector.shape_cast %212 : vector<10xf32> to vector<10x1xf32>
    %cst_89 = arith.constant 6.400000e+01 : f32
    %214 = vector.broadcast %cst_89 : f32 to vector<10x1xf32>
    %215 = arith.divf %213, %214 : vector<10x1xf32>
    %cst_90 = arith.constant 9.99999997E-7 : f32
    %216 = vector.broadcast %cst_90 : f32 to vector<10x1xf32>
    %217 = arith.addf %215, %216 : vector<10x1xf32>
    %218 = math.rsqrt %217 : vector<10x1xf32>
    %219 = vector.broadcast %218 : vector<10x1xf32> to vector<10x64xf32>
    %220 = arith.mulf %210, %219 : vector<10x64xf32>
    %221 = vector.broadcast %202 : vector<1x64xf32> to vector<10x64xf32>
    %222 = arith.mulf %220, %221 : vector<10x64xf32>
    %223 = vector.broadcast %204 : vector<1x64xf32> to vector<10x64xf32>
    %224 = arith.addf %222, %223 : vector<10x64xf32>
    %c1_91 = arith.constant 1 : index
    %c0_92 = arith.constant 0 : index
    %c0_93 = arith.constant 0 : index
    %225 = vector.load %arg6[%c1_91, %c0_92, %c0_93] : memref<2x64x192xbf16, #tpu.memory_space<vmem>>, vector<1x64x192xbf16>
    %226 = vector.shape_cast %225 : vector<1x64x192xbf16> to vector<64x192xbf16>
    %c1_94 = arith.constant 1 : index
    %c0_95 = arith.constant 0 : index
    %c0_96 = arith.constant 0 : index
    %227 = vector.load %arg7[%c1_94, %c0_95, %c0_96] : memref<2x1x192xf32, #tpu.memory_space<vmem>>, vector<1x1x192xf32>
    %228 = vector.shape_cast %227 : vector<1x1x192xf32> to vector<1x192xf32>
    %229 = arith.truncf %224 : vector<10x64xf32> to vector<10x64xbf16>
    %cst_97 = arith.constant dense<0.000000e+00> : vector<10x192xf32>
    %230 = tpu.matmul %229, %226, %cst_97 {dimension_numbers = #tpu.dot_dimension_numbers<[1], [0], [0], [1], [0, 0, 1, 1], [], []>} : vector<10x64xbf16>, vector<64x192xbf16>, vector<10x192xf32> -> vector<10x192xf32>
    %231 = vector.broadcast %228 : vector<1x192xf32> to vector<10x192xf32>
    %232 = arith.addf %230, %231 : vector<10x192xf32>
    %233 = vector.extract_strided_slice %232 {offsets = [0, 0], sizes = [5, 192], strides = [1, 1]} : vector<10x192xf32> to vector<5x192xf32>
    %234 = vector.extract_strided_slice %233 {offsets = [0, 0], sizes = [5, 32], strides = [1, 1]} : vector<5x192xf32> to vector<5x32xf32>
    %235 = arith.truncf %234 : vector<5x32xf32> to vector<5x32xbf16>
    %236 = vector.extract_strided_slice %233 {offsets = [0, 64], sizes = [5, 32], strides = [1, 1]} : vector<5x192xf32> to vector<5x32xf32>
    %237 = arith.truncf %236 : vector<5x32xf32> to vector<5x32xbf16>
    %238 = vector.extract_strided_slice %233 {offsets = [0, 128], sizes = [5, 32], strides = [1, 1]} : vector<5x192xf32> to vector<5x32xf32>
    %239 = arith.truncf %238 : vector<5x32xf32> to vector<5x32xbf16>
    %cst_98 = arith.constant dense<0.000000e+00> : vector<5x5xf32>
    %240 = tpu.matmul %235, %237, %cst_98 {dimension_numbers = #tpu.dot_dimension_numbers<[1], [1], [0], [0], [0, 0, 1, 0], [], []>} : vector<5x32xbf16>, vector<5x32xbf16>, vector<5x5xf32> -> vector<5x5xf32>
    %cst_99 = arith.constant 0.176776692 : f32
    %241 = vector.broadcast %cst_99 : f32 to vector<5x5xf32>
    %242 = arith.mulf %240, %241 : vector<5x5xf32>
    %cst_100 = arith.constant dense<0xFF800000> : vector<5xf32>
    %243 = vector.multi_reduction <maximumf>, %242, %cst_100 [1] : vector<5x5xf32> to vector<5xf32>
    %244 = vector.shape_cast %243 : vector<5xf32> to vector<5x1xf32>
    %245 = vector.broadcast %244 : vector<5x1xf32> to vector<5x5xf32>
    %246 = arith.subf %242, %245 : vector<5x5xf32>
    %247 = math.exp %246 : vector<5x5xf32>
    %cst_101 = arith.constant dense<0.000000e+00> : vector<5xf32>
    %248 = vector.multi_reduction <add>, %247, %cst_101 [1] : vector<5x5xf32> to vector<5xf32>
    %249 = vector.shape_cast %248 : vector<5xf32> to vector<5x1xf32>
    %250 = tpu.reciprocal %249 {approx = true} : vector<5x1xf32> -> vector<5x1xf32>
    %251 = vector.broadcast %250 : vector<5x1xf32> to vector<5x5xf32>
    %252 = arith.mulf %247, %251 : vector<5x5xf32>
    %253 = arith.truncf %252 : vector<5x5xf32> to vector<5x5xbf16>
    %cst_102 = arith.constant dense<0.000000e+00> : vector<5x32xf32>
    %254 = tpu.matmul %253, %239, %cst_102 {dimension_numbers = #tpu.dot_dimension_numbers<[1], [0], [0], [1], [0, 0, 1, 1], [], []>} : vector<5x5xbf16>, vector<5x32xbf16>, vector<5x32xf32> -> vector<5x32xf32>
    %255 = vector.extract_strided_slice %233 {offsets = [0, 32], sizes = [5, 32], strides = [1, 1]} : vector<5x192xf32> to vector<5x32xf32>
    %256 = arith.truncf %255 : vector<5x32xf32> to vector<5x32xbf16>
    %257 = vector.extract_strided_slice %233 {offsets = [0, 96], sizes = [5, 32], strides = [1, 1]} : vector<5x192xf32> to vector<5x32xf32>
    %258 = arith.truncf %257 : vector<5x32xf32> to vector<5x32xbf16>
    %259 = vector.extract_strided_slice %233 {offsets = [0, 160], sizes = [5, 32], strides = [1, 1]} : vector<5x192xf32> to vector<5x32xf32>
    %260 = arith.truncf %259 : vector<5x32xf32> to vector<5x32xbf16>
    %cst_103 = arith.constant dense<0.000000e+00> : vector<5x5xf32>
    %261 = tpu.matmul %256, %258, %cst_103 {dimension_numbers = #tpu.dot_dimension_numbers<[1], [1], [0], [0], [0, 0, 1, 0], [], []>} : vector<5x32xbf16>, vector<5x32xbf16>, vector<5x5xf32> -> vector<5x5xf32>
    %cst_104 = arith.constant 0.176776692 : f32
    %262 = vector.broadcast %cst_104 : f32 to vector<5x5xf32>
    %263 = arith.mulf %261, %262 : vector<5x5xf32>
    %cst_105 = arith.constant dense<0xFF800000> : vector<5xf32>
    %264 = vector.multi_reduction <maximumf>, %263, %cst_105 [1] : vector<5x5xf32> to vector<5xf32>
    %265 = vector.shape_cast %264 : vector<5xf32> to vector<5x1xf32>
    %266 = vector.broadcast %265 : vector<5x1xf32> to vector<5x5xf32>
    %267 = arith.subf %263, %266 : vector<5x5xf32>
    %268 = math.exp %267 : vector<5x5xf32>
    %cst_106 = arith.constant dense<0.000000e+00> : vector<5xf32>
    %269 = vector.multi_reduction <add>, %268, %cst_106 [1] : vector<5x5xf32> to vector<5xf32>
    %270 = vector.shape_cast %269 : vector<5xf32> to vector<5x1xf32>
    %271 = tpu.reciprocal %270 {approx = true} : vector<5x1xf32> -> vector<5x1xf32>
    %272 = vector.broadcast %271 : vector<5x1xf32> to vector<5x5xf32>
    %273 = arith.mulf %268, %272 : vector<5x5xf32>
    %274 = arith.truncf %273 : vector<5x5xf32> to vector<5x5xbf16>
    %cst_107 = arith.constant dense<0.000000e+00> : vector<5x32xf32>
    %275 = tpu.matmul %274, %260, %cst_107 {dimension_numbers = #tpu.dot_dimension_numbers<[1], [0], [0], [1], [0, 0, 1, 1], [], []>} : vector<5x5xbf16>, vector<5x32xbf16>, vector<5x32xf32> -> vector<5x32xf32>
    %276 = tpu.concatenate %254, %275 in 1 : vector<5x32xf32>, vector<5x32xf32> -> vector<5x64xf32>
    %277 = vector.extract_strided_slice %232 {offsets = [5, 0], sizes = [5, 192], strides = [1, 1]} : vector<10x192xf32> to vector<5x192xf32>
    %278 = vector.extract_strided_slice %277 {offsets = [0, 0], sizes = [5, 32], strides = [1, 1]} : vector<5x192xf32> to vector<5x32xf32>
    %279 = arith.truncf %278 : vector<5x32xf32> to vector<5x32xbf16>
    %280 = vector.extract_strided_slice %277 {offsets = [0, 64], sizes = [5, 32], strides = [1, 1]} : vector<5x192xf32> to vector<5x32xf32>
    %281 = arith.truncf %280 : vector<5x32xf32> to vector<5x32xbf16>
    %282 = vector.extract_strided_slice %277 {offsets = [0, 128], sizes = [5, 32], strides = [1, 1]} : vector<5x192xf32> to vector<5x32xf32>
    %283 = arith.truncf %282 : vector<5x32xf32> to vector<5x32xbf16>
    %cst_108 = arith.constant dense<0.000000e+00> : vector<5x5xf32>
    %284 = tpu.matmul %279, %281, %cst_108 {dimension_numbers = #tpu.dot_dimension_numbers<[1], [1], [0], [0], [0, 0, 1, 0], [], []>} : vector<5x32xbf16>, vector<5x32xbf16>, vector<5x5xf32> -> vector<5x5xf32>
    %cst_109 = arith.constant 0.176776692 : f32
    %285 = vector.broadcast %cst_109 : f32 to vector<5x5xf32>
    %286 = arith.mulf %284, %285 : vector<5x5xf32>
    %cst_110 = arith.constant dense<0xFF800000> : vector<5xf32>
    %287 = vector.multi_reduction <maximumf>, %286, %cst_110 [1] : vector<5x5xf32> to vector<5xf32>
    %288 = vector.shape_cast %287 : vector<5xf32> to vector<5x1xf32>
    %289 = vector.broadcast %288 : vector<5x1xf32> to vector<5x5xf32>
    %290 = arith.subf %286, %289 : vector<5x5xf32>
    %291 = math.exp %290 : vector<5x5xf32>
    %cst_111 = arith.constant dense<0.000000e+00> : vector<5xf32>
    %292 = vector.multi_reduction <add>, %291, %cst_111 [1] : vector<5x5xf32> to vector<5xf32>
    %293 = vector.shape_cast %292 : vector<5xf32> to vector<5x1xf32>
    %294 = tpu.reciprocal %293 {approx = true} : vector<5x1xf32> -> vector<5x1xf32>
    %295 = vector.broadcast %294 : vector<5x1xf32> to vector<5x5xf32>
    %296 = arith.mulf %291, %295 : vector<5x5xf32>
    %297 = arith.truncf %296 : vector<5x5xf32> to vector<5x5xbf16>
    %cst_112 = arith.constant dense<0.000000e+00> : vector<5x32xf32>
    %298 = tpu.matmul %297, %283, %cst_112 {dimension_numbers = #tpu.dot_dimension_numbers<[1], [0], [0], [1], [0, 0, 1, 1], [], []>} : vector<5x5xbf16>, vector<5x32xbf16>, vector<5x32xf32> -> vector<5x32xf32>
    %299 = vector.extract_strided_slice %277 {offsets = [0, 32], sizes = [5, 32], strides = [1, 1]} : vector<5x192xf32> to vector<5x32xf32>
    %300 = arith.truncf %299 : vector<5x32xf32> to vector<5x32xbf16>
    %301 = vector.extract_strided_slice %277 {offsets = [0, 96], sizes = [5, 32], strides = [1, 1]} : vector<5x192xf32> to vector<5x32xf32>
    %302 = arith.truncf %301 : vector<5x32xf32> to vector<5x32xbf16>
    %303 = vector.extract_strided_slice %277 {offsets = [0, 160], sizes = [5, 32], strides = [1, 1]} : vector<5x192xf32> to vector<5x32xf32>
    %304 = arith.truncf %303 : vector<5x32xf32> to vector<5x32xbf16>
    %cst_113 = arith.constant dense<0.000000e+00> : vector<5x5xf32>
    %305 = tpu.matmul %300, %302, %cst_113 {dimension_numbers = #tpu.dot_dimension_numbers<[1], [1], [0], [0], [0, 0, 1, 0], [], []>} : vector<5x32xbf16>, vector<5x32xbf16>, vector<5x5xf32> -> vector<5x5xf32>
    %cst_114 = arith.constant 0.176776692 : f32
    %306 = vector.broadcast %cst_114 : f32 to vector<5x5xf32>
    %307 = arith.mulf %305, %306 : vector<5x5xf32>
    %cst_115 = arith.constant dense<0xFF800000> : vector<5xf32>
    %308 = vector.multi_reduction <maximumf>, %307, %cst_115 [1] : vector<5x5xf32> to vector<5xf32>
    %309 = vector.shape_cast %308 : vector<5xf32> to vector<5x1xf32>
    %310 = vector.broadcast %309 : vector<5x1xf32> to vector<5x5xf32>
    %311 = arith.subf %307, %310 : vector<5x5xf32>
    %312 = math.exp %311 : vector<5x5xf32>
    %cst_116 = arith.constant dense<0.000000e+00> : vector<5xf32>
    %313 = vector.multi_reduction <add>, %312, %cst_116 [1] : vector<5x5xf32> to vector<5xf32>
    %314 = vector.shape_cast %313 : vector<5xf32> to vector<5x1xf32>
    %315 = tpu.reciprocal %314 {approx = true} : vector<5x1xf32> -> vector<5x1xf32>
    %316 = vector.broadcast %315 : vector<5x1xf32> to vector<5x5xf32>
    %317 = arith.mulf %312, %316 : vector<5x5xf32>
    %318 = arith.truncf %317 : vector<5x5xf32> to vector<5x5xbf16>
    %cst_117 = arith.constant dense<0.000000e+00> : vector<5x32xf32>
    %319 = tpu.matmul %318, %304, %cst_117 {dimension_numbers = #tpu.dot_dimension_numbers<[1], [0], [0], [1], [0, 0, 1, 1], [], []>} : vector<5x5xbf16>, vector<5x32xbf16>, vector<5x32xf32> -> vector<5x32xf32>
    %320 = tpu.concatenate %298, %319 in 1 : vector<5x32xf32>, vector<5x32xf32> -> vector<5x64xf32>
    %321 = tpu.concatenate %276, %320 in 0 : vector<5x64xf32>, vector<5x64xf32> -> vector<10x64xf32>
    %c1_118 = arith.constant 1 : index
    %c0_119 = arith.constant 0 : index
    %c0_120 = arith.constant 0 : index
    %322 = vector.load %arg8[%c1_118, %c0_119, %c0_120] : memref<2x64x64xbf16, #tpu.memory_space<vmem>>, vector<1x64x64xbf16>
    %323 = vector.shape_cast %322 : vector<1x64x64xbf16> to vector<64x64xbf16>
    %c1_121 = arith.constant 1 : index
    %c0_122 = arith.constant 0 : index
    %c0_123 = arith.constant 0 : index
    %324 = vector.load %arg9[%c1_121, %c0_122, %c0_123] : memref<2x1x64xf32, #tpu.memory_space<vmem>>, vector<1x1x64xf32>
    %325 = vector.shape_cast %324 : vector<1x1x64xf32> to vector<1x64xf32>
    %326 = arith.truncf %321 : vector<10x64xf32> to vector<10x64xbf16>
    %cst_124 = arith.constant dense<0.000000e+00> : vector<10x64xf32>
    %327 = tpu.matmul %326, %323, %cst_124 {dimension_numbers = #tpu.dot_dimension_numbers<[1], [0], [0], [1], [0, 0, 1, 1], [], []>} : vector<10x64xbf16>, vector<64x64xbf16>, vector<10x64xf32> -> vector<10x64xf32>
    %328 = vector.broadcast %325 : vector<1x64xf32> to vector<10x64xf32>
    %329 = arith.addf %327, %328 : vector<10x64xf32>
    %330 = arith.addf %200, %329 : vector<10x64xf32>
    %c1_125 = arith.constant 1 : index
    %c0_126 = arith.constant 0 : index
    %c0_127 = arith.constant 0 : index
    %331 = vector.load %arg10[%c1_125, %c0_126, %c0_127] : memref<2x1x64xf32, #tpu.memory_space<vmem>>, vector<1x1x64xf32>
    %332 = vector.shape_cast %331 : vector<1x1x64xf32> to vector<1x64xf32>
    %c1_128 = arith.constant 1 : index
    %c0_129 = arith.constant 0 : index
    %c0_130 = arith.constant 0 : index
    %333 = vector.load %arg11[%c1_128, %c0_129, %c0_130] : memref<2x1x64xf32, #tpu.memory_space<vmem>>, vector<1x1x64xf32>
    %334 = vector.shape_cast %333 : vector<1x1x64xf32> to vector<1x64xf32>
    %cst_131 = arith.constant dense<0.000000e+00> : vector<10xf32>
    %335 = vector.multi_reduction <add>, %330, %cst_131 [1] : vector<10x64xf32> to vector<10xf32>
    %336 = vector.shape_cast %335 : vector<10xf32> to vector<10x1xf32>
    %cst_132 = arith.constant 6.400000e+01 : f32
    %337 = vector.broadcast %cst_132 : f32 to vector<10x1xf32>
    %338 = arith.divf %336, %337 : vector<10x1xf32>
    %339 = vector.broadcast %338 : vector<10x1xf32> to vector<10x64xf32>
    %340 = arith.subf %330, %339 : vector<10x64xf32>
    %341 = arith.mulf %340, %340 : vector<10x64xf32>
    %cst_133 = arith.constant dense<0.000000e+00> : vector<10xf32>
    %342 = vector.multi_reduction <add>, %341, %cst_133 [1] : vector<10x64xf32> to vector<10xf32>
    %343 = vector.shape_cast %342 : vector<10xf32> to vector<10x1xf32>
    %cst_134 = arith.constant 6.400000e+01 : f32
    %344 = vector.broadcast %cst_134 : f32 to vector<10x1xf32>
    %345 = arith.divf %343, %344 : vector<10x1xf32>
    %cst_135 = arith.constant 9.99999997E-7 : f32
    %346 = vector.broadcast %cst_135 : f32 to vector<10x1xf32>
    %347 = arith.addf %345, %346 : vector<10x1xf32>
    %348 = math.rsqrt %347 : vector<10x1xf32>
    %349 = vector.broadcast %348 : vector<10x1xf32> to vector<10x64xf32>
    %350 = arith.mulf %340, %349 : vector<10x64xf32>
    %351 = vector.broadcast %332 : vector<1x64xf32> to vector<10x64xf32>
    %352 = arith.mulf %350, %351 : vector<10x64xf32>
    %353 = vector.broadcast %334 : vector<1x64xf32> to vector<10x64xf32>
    %354 = arith.addf %352, %353 : vector<10x64xf32>
    %c1_136 = arith.constant 1 : index
    %c0_137 = arith.constant 0 : index
    %c0_138 = arith.constant 0 : index
    %355 = vector.load %arg12[%c1_136, %c0_137, %c0_138] : memref<2x64x256xbf16, #tpu.memory_space<vmem>>, vector<1x64x256xbf16>
    %356 = vector.shape_cast %355 : vector<1x64x256xbf16> to vector<64x256xbf16>
    %c1_139 = arith.constant 1 : index
    %c0_140 = arith.constant 0 : index
    %c0_141 = arith.constant 0 : index
    %357 = vector.load %arg13[%c1_139, %c0_140, %c0_141] : memref<2x1x256xf32, #tpu.memory_space<vmem>>, vector<1x1x256xf32>
    %358 = vector.shape_cast %357 : vector<1x1x256xf32> to vector<1x256xf32>
    %359 = arith.truncf %354 : vector<10x64xf32> to vector<10x64xbf16>
    %cst_142 = arith.constant dense<0.000000e+00> : vector<10x256xf32>
    %360 = tpu.matmul %359, %356, %cst_142 {dimension_numbers = #tpu.dot_dimension_numbers<[1], [0], [0], [1], [0, 0, 1, 1], [], []>} : vector<10x64xbf16>, vector<64x256xbf16>, vector<10x256xf32> -> vector<10x256xf32>
    %361 = vector.broadcast %358 : vector<1x256xf32> to vector<10x256xf32>
    %362 = arith.addf %360, %361 : vector<10x256xf32>
    %363 = arith.mulf %362, %362 : vector<10x256xf32>
    %364 = arith.mulf %362, %363 : vector<10x256xf32>
    %cst_143 = arith.constant 4.471500e-02 : f32
    %365 = vector.broadcast %cst_143 : f32 to vector<10x256xf32>
    %366 = arith.mulf %365, %364 : vector<10x256xf32>
    %367 = arith.addf %362, %366 : vector<10x256xf32>
    %cst_144 = arith.constant 0.797884583 : f32
    %368 = vector.broadcast %cst_144 : f32 to vector<10x256xf32>
    %369 = arith.mulf %368, %367 : vector<10x256xf32>
    %370 = math.tanh %369 : vector<10x256xf32>
    %cst_145 = arith.constant 1.000000e+00 : f32
    %371 = vector.broadcast %cst_145 : f32 to vector<10x256xf32>
    %372 = arith.addf %371, %370 : vector<10x256xf32>
    %cst_146 = arith.constant 5.000000e-01 : f32
    %373 = vector.broadcast %cst_146 : f32 to vector<10x256xf32>
    %374 = arith.mulf %373, %372 : vector<10x256xf32>
    %375 = arith.mulf %362, %374 : vector<10x256xf32>
    %c1_147 = arith.constant 1 : index
    %c0_148 = arith.constant 0 : index
    %c0_149 = arith.constant 0 : index
    %376 = vector.load %arg14[%c1_147, %c0_148, %c0_149] : memref<2x256x64xbf16, #tpu.memory_space<vmem>>, vector<1x256x64xbf16>
    %377 = vector.shape_cast %376 : vector<1x256x64xbf16> to vector<256x64xbf16>
    %c1_150 = arith.constant 1 : index
    %c0_151 = arith.constant 0 : index
    %c0_152 = arith.constant 0 : index
    %378 = vector.load %arg15[%c1_150, %c0_151, %c0_152] : memref<2x1x64xf32, #tpu.memory_space<vmem>>, vector<1x1x64xf32>
    %379 = vector.shape_cast %378 : vector<1x1x64xf32> to vector<1x64xf32>
    %380 = arith.truncf %375 : vector<10x256xf32> to vector<10x256xbf16>
    %cst_153 = arith.constant dense<0.000000e+00> : vector<10x64xf32>
    %381 = tpu.matmul %380, %377, %cst_153 {dimension_numbers = #tpu.dot_dimension_numbers<[1], [0], [0], [1], [0, 0, 1, 1], [], []>} : vector<10x256xbf16>, vector<256x64xbf16>, vector<10x64xf32> -> vector<10x64xf32>
    %382 = vector.broadcast %379 : vector<1x64xf32> to vector<10x64xf32>
    %383 = arith.addf %381, %382 : vector<10x64xf32>
    %384 = arith.addf %330, %383 : vector<10x64xf32>
    %c0_154 = arith.constant 0 : index
    %c0_155 = arith.constant 0 : index
    %385 = vector.load %arg16[%c0_154, %c0_155] : memref<1x64xf32, #tpu.memory_space<vmem>>, vector<1x64xf32>
    %c0_156 = arith.constant 0 : index
    %c0_157 = arith.constant 0 : index
    %386 = vector.load %arg17[%c0_156, %c0_157] : memref<1x64xf32, #tpu.memory_space<vmem>>, vector<1x64xf32>
    %cst_158 = arith.constant dense<0.000000e+00> : vector<10xf32>
    %387 = vector.multi_reduction <add>, %384, %cst_158 [1] : vector<10x64xf32> to vector<10xf32>
    %388 = vector.shape_cast %387 : vector<10xf32> to vector<10x1xf32>
    %cst_159 = arith.constant 6.400000e+01 : f32
    %389 = vector.broadcast %cst_159 : f32 to vector<10x1xf32>
    %390 = arith.divf %388, %389 : vector<10x1xf32>
    %391 = vector.broadcast %390 : vector<10x1xf32> to vector<10x64xf32>
    %392 = arith.subf %384, %391 : vector<10x64xf32>
    %393 = arith.mulf %392, %392 : vector<10x64xf32>
    %cst_160 = arith.constant dense<0.000000e+00> : vector<10xf32>
    %394 = vector.multi_reduction <add>, %393, %cst_160 [1] : vector<10x64xf32> to vector<10xf32>
    %395 = vector.shape_cast %394 : vector<10xf32> to vector<10x1xf32>
    %cst_161 = arith.constant 6.400000e+01 : f32
    %396 = vector.broadcast %cst_161 : f32 to vector<10x1xf32>
    %397 = arith.divf %395, %396 : vector<10x1xf32>
    %cst_162 = arith.constant 9.99999997E-7 : f32
    %398 = vector.broadcast %cst_162 : f32 to vector<10x1xf32>
    %399 = arith.addf %397, %398 : vector<10x1xf32>
    %400 = math.rsqrt %399 : vector<10x1xf32>
    %401 = vector.broadcast %400 : vector<10x1xf32> to vector<10x64xf32>
    %402 = arith.mulf %392, %401 : vector<10x64xf32>
    %403 = vector.broadcast %385 : vector<1x64xf32> to vector<10x64xf32>
    %404 = arith.mulf %402, %403 : vector<10x64xf32>
    %405 = vector.broadcast %386 : vector<1x64xf32> to vector<10x64xf32>
    %406 = arith.addf %404, %405 : vector<10x64xf32>
    %407 = vector.extract_strided_slice %406 {offsets = [0, 0], sizes = [1, 64], strides = [1, 1]} : vector<10x64xf32> to vector<1x64xf32>
    %408 = vector.extract_strided_slice %406 {offsets = [5, 0], sizes = [1, 64], strides = [1, 1]} : vector<10x64xf32> to vector<1x64xf32>
    %409 = tpu.concatenate %407, %408 in 0 : vector<1x64xf32>, vector<1x64xf32> -> vector<2x64xf32>
    %c0_163 = arith.constant 0 : index
    %c0_164 = arith.constant 0 : index
    %410 = vector.load %arg18[%c0_163, %c0_164] : memref<64x128xbf16, #tpu.memory_space<vmem>>, vector<64x128xbf16>
    %c0_165 = arith.constant 0 : index
    %c0_166 = arith.constant 0 : index
    %411 = vector.load %arg19[%c0_165, %c0_166] : memref<1x128xf32, #tpu.memory_space<vmem>>, vector<1x128xf32>
    %412 = arith.truncf %409 : vector<2x64xf32> to vector<2x64xbf16>
    %cst_167 = arith.constant dense<0.000000e+00> : vector<2x128xf32>
    %413 = tpu.matmul %412, %410, %cst_167 {dimension_numbers = #tpu.dot_dimension_numbers<[1], [0], [0], [1], [0, 0, 1, 1], [], []>} : vector<2x64xbf16>, vector<64x128xbf16>, vector<2x128xf32> -> vector<2x128xf32>
    %414 = vector.broadcast %411 : vector<1x128xf32> to vector<2x128xf32>
    %415 = arith.addf %413, %414 : vector<2x128xf32>
    %c0_168 = arith.constant 0 : index
    %c0_169 = arith.constant 0 : index
    %416 = vector.load %arg20[%c0_168, %c0_169] : memref<2x128xf32, #tpu.memory_space<vmem>>, vector<2x128xf32>
    tpu.vector_store %arg20[%c0_168, %c0_169], %415 {strides = array<i32>} : memref<2x128xf32, #tpu.memory_space<vmem>>, vector<2x128xf32>,
    return
  }
}

</mosaic_0001>

<llo_original>
// kernel: vit_forward.1
$region0: #{vit_forward.1}
  #allocation0 [shape = 'u32[]', space=smem, size = 0x4, offset = 0x4, fixed_abs, tag = 'smem constant byte address 0x4 - core index']
  #allocation1 [shape = 'u32[144,128]{1,0:T(1,128)}', space=vmem, size = 0x12000, scoped, tag = 'internal scratch']
  %s0 = inlined_call_operand.vmem [shape: f32[8,768], index: 0, kind: input, shape index: {}]
  %s1 = inlined_call_operand.vmem [shape: bf16[768,64], index: 1, kind: input, shape index: {}]
  %s2 = inlined_call_operand.vmem [shape: f32[1,64], index: 2, kind: input, shape index: {}]
  %s3 = inlined_call_operand.vmem [shape: f32[5,64], index: 3, kind: input, shape index: {}]
  %s4 = inlined_call_operand.vmem [shape: f32[2,1,64], index: 4, kind: input, shape index: {}]
  %s5 = inlined_call_operand.vmem [shape: f32[2,1,64], index: 5, kind: input, shape index: {}]
  %s6 = inlined_call_operand.vmem [shape: bf16[2,64,192], index: 6, kind: input, shape index: {}]
  %s7 = inlined_call_operand.vmem [shape: f32[2,1,192], index: 7, kind: input, shape index: {}]
  %s8 = inlined_call_operand.vmem [shape: bf16[2,64,64], index: 8, kind: input, shape index: {}]
  %s9 = inlined_call_operand.vmem [shape: f32[2,1,64], index: 9, kind: input, shape index: {}]
  %s10 = inlined_call_operand.vmem [shape: f32[2,1,64], index: 10, kind: input, shape index: {}]
  %s11 = inlined_call_operand.vmem [shape: f32[2,1,64], index: 11, kind: input, shape index: {}]
  %s12 = inlined_call_operand.vmem [shape: bf16[2,64,256], index: 12, kind: input, shape index: {}]
  %s13 = inlined_call_operand.vmem [shape: f32[2,1,256], index: 13, kind: input, shape index: {}]
  %s14 = inlined_call_operand.vmem [shape: bf16[2,256,64], index: 14, kind: input, shape index: {}]
  %s15 = inlined_call_operand.vmem [shape: f32[2,1,64], index: 15, kind: input, shape index: {}]
  %s16 = inlined_call_operand.vmem [shape: f32[1,64], index: 16, kind: input, shape index: {}]
  %s17 = inlined_call_operand.vmem [shape: f32[1,64], index: 17, kind: input, shape index: {}]
  %s18 = inlined_call_operand.vmem [shape: bf16[64,128], index: 18, kind: input, shape index: {}]
  %s19 = inlined_call_operand.vmem [shape: f32[1,128], index: 19, kind: input, shape index: {}]
  %s20 = inlined_call_operand.hbm [shape: f32[2,128], index: 20, kind: output, shape index: {}]
  %s21 = sld [smem:[#allocation0]]
  $region90: #{vit_forward.1} parent=0
    _
  %s23 = ssub.s32 1, %s21
  %s24 = scalar_select 0, %s23, %s21
  $region1: #{vit_forward.1} parent=0
    #allocation2 [shape = 'u8[1024]{0}', space=vmem, size = 0x400, scoped, tag = 'output window, operand 0, single buffered']
    #allocation3 [shape = 's32[1]{0}', space=sflag, size = 0x4, scoped, tag = 'scoped memory for vit_forward.1']
    %25 = vsyncpa [#allocation3], 0
    // Predicated region
    $region2: #{vit_forward.1} parent=1 // pred_check
      _
    $region3: #{vit_forward.1} parent=1 // pred_check_branch
      %27 = sbr.rel (0) target = $region5
    $region4: #{vit_forward.1} parent=1 // pred_region
      _
    $region5: #{vit_forward.1} parent=1 // pred_fallthru
      _
    // Predicated region
    $region6: #{vit_forward.1} parent=1 // pred_check
      _
    $region7: #{vit_forward.1} parent=1 // pred_check_branch
      %29 = sbr.rel (0) target = $region9
    $region8: #{vit_forward.1} parent=1 // pred_region
      _
    $region9: #{vit_forward.1} parent=1 // pred_fallthru
      _
    // Predicated region
    $region10: #{vit_forward.1} parent=1 // pred_check
      _
    $region11: #{vit_forward.1} parent=1 // pred_check_branch
      %31 = sbr.rel (0) target = $region13
    $region12: #{vit_forward.1} parent=1 // pred_region
      _
    $region13: #{vit_forward.1} parent=1 // pred_fallthru
      _
    // Predicated region
    $region14: #{vit_forward.1} parent=1 // pred_check
      _
    $region15: #{vit_forward.1} parent=1 // pred_check_branch
      %33 = sbr.rel (0) target = $region17
    $region16: #{vit_forward.1} parent=1 // pred_region
      _
    $region17: #{vit_forward.1} parent=1 // pred_fallthru
      _
    // Predicated region
    $region18: #{vit_forward.1} parent=1 // pred_check
      _
    $region19: #{vit_forward.1} parent=1 // pred_check_branch
      %35 = sbr.rel (0) target = $region21
    $region20: #{vit_forward.1} parent=1 // pred_region
      _
    $region21: #{vit_forward.1} parent=1 // pred_fallthru
      _
    // Predicated region
    $region22: #{vit_forward.1} parent=1 // pred_check
      _
    $region23: #{vit_forward.1} parent=1 // pred_check_branch
      %37 = sbr.rel (0) target = $region25
    $region24: #{vit_forward.1} parent=1 // pred_region
      _
    $region25: #{vit_forward.1} parent=1 // pred_fallthru
      _
    // Predicated region
    $region26: #{vit_forward.1} parent=1 // pred_check
      _
    $region27: #{vit_forward.1} parent=1 // pred_check_branch
      %39 = sbr.rel (0) target = $region29
    $region28: #{vit_forward.1} parent=1 // pred_region
      _
    $region29: #{vit_forward.1} parent=1 // pred_fallthru
      _
    // Predicated region
    $region30: #{vit_forward.1} parent=1 // pred_check
      _
    $region31: #{vit_forward.1} parent=1 // pred_check_branch
      %41 = sbr.rel (0) target = $region33
    $region32: #{vit_forward.1} parent=1 // pred_region
      _
    $region33: #{vit_forward.1} parent=1 // pred_fallthru
      _
    // Predicated region
    $region34: #{vit_forward.1} parent=1 // pred_check
      _
    $region35: #{vit_forward.1} parent=1 // pred_check_branch
      %43 = sbr.rel (0) target = $region37
    $region36: #{vit_forward.1} parent=1 // pred_region
      _
    $region37: #{vit_forward.1} parent=1 // pred_fallthru
      _
    // Predicated region
    $region38: #{vit_forward.1} parent=1 // pred_check
      _
    $region39: #{vit_forward.1} parent=1 // pred_check_branch
      %45 = sbr.rel (0) target = $region41
    $region40: #{vit_forward.1} parent=1 // pred_region
      _
    $region41: #{vit_forward.1} parent=1 // pred_fallthru
      _
    // Predicated region
    $region42: #{vit_forward.1} parent=1 // pred_check
      _
    $region43: #{vit_forward.1} parent=1 // pred_check_branch
      %47 = sbr.rel (0) target = $region45
    $region44: #{vit_forward.1} parent=1 // pred_region
      _
    $region45: #{vit_forward.1} parent=1 // pred_fallthru
      _
    // Predicated region
    $region46: #{vit_forward.1} parent=1 // pred_check
      _
    $region47: #{vit_forward.1} parent=1 // pred_check_branch
      %49 = sbr.rel (0) target = $region49
    $region48: #{vit_forward.1} parent=1 // pred_region
      _
    $region49: #{vit_forward.1} parent=1 // pred_fallthru
      _
    // Predicated region
    $region50: #{vit_forward.1} parent=1 // pred_check
      _
    $region51: #{vit_forward.1} parent=1 // pred_check_branch
      %51 = sbr.rel (0) target = $region53
    $region52: #{vit_forward.1} parent=1 // pred_region
      _
    $region53: #{vit_forward.1} parent=1 // pred_fallthru
      _
    // Predicated region
    $region54: #{vit_forward.1} parent=1 // pred_check
      _
    $region55: #{vit_forward.1} parent=1 // pred_check_branch
      %53 = sbr.rel (0) target = $region57
    $region56: #{vit_forward.1} parent=1 // pred_region
      _
    $region57: #{vit_forward.1} parent=1 // pred_fallthru
      _
    // Predicated region
    $region58: #{vit_forward.1} parent=1 // pred_check
      _
    $region59: #{vit_forward.1} parent=1 // pred_check_branch
      %55 = sbr.rel (0) target = $region61
    $region60: #{vit_forward.1} parent=1 // pred_region
      _
    $region61: #{vit_forward.1} parent=1 // pred_fallthru
      _
    // Predicated region
    $region62: #{vit_forward.1} parent=1 // pred_check
      _
    $region63: #{vit_forward.1} parent=1 // pred_check_branch
      %57 = sbr.rel (0) target = $region65
    $region64: #{vit_forward.1} parent=1 // pred_region
      _
    $region65: #{vit_forward.1} parent=1 // pred_fallthru
      _
    // Predicated region
    $region66: #{vit_forward.1} parent=1 // pred_check
      _
    $region67: #{vit_forward.1} parent=1 // pred_check_branch
      %59 = sbr.rel (0) target = $region69
    $region68: #{vit_forward.1} parent=1 // pred_region
      _
    $region69: #{vit_forward.1} parent=1 // pred_fallthru
      _
    // Predicated region
    $region70: #{vit_forward.1} parent=1 // pred_check
      _
    $region71: #{vit_forward.1} parent=1 // pred_check_branch
      %61 = sbr.rel (0) target = $region73
    $region72: #{vit_forward.1} parent=1 // pred_region
      _
    $region73: #{vit_forward.1} parent=1 // pred_fallthru
      _
    // Predicated region
    $region74: #{vit_forward.1} parent=1 // pred_check
      _
    $region75: #{vit_forward.1} parent=1 // pred_check_branch
      %63 = sbr.rel (0) target = $region77
    $region76: #{vit_forward.1} parent=1 // pred_region
      _
    $region77: #{vit_forward.1} parent=1 // pred_fallthru
      _
    // Predicated region
    $region78: #{vit_forward.1} parent=1 // pred_check
      _
    $region79: #{vit_forward.1} parent=1 // pred_check_branch
      %65 = sbr.rel (0) target = $region81
    $region80: #{vit_forward.1} parent=1 // pred_region
      _
    $region81: #{vit_forward.1} parent=1 // pred_fallthru
      _
    %v67 = vld [vmem:[%s0] sm:$0xff]
    %v68 = vld [vmem:[%s0 + $0x8] sm:$0xff]
    %v69 = vld [vmem:[%s0 + $0x10] sm:$0xff]
    %v70 = vld [vmem:[%s0 + $0x18] sm:$0xff]
    %v71 = vld [vmem:[%s0 + $0x20] sm:$0xff]
    %v72 = vld [vmem:[%s0 + $0x28] sm:$0xff]
    %v73 = vld [vmem:[%s1] sm:$0xf]
    %v74 = vld [vmem:[%s1 + $0x4] sm:$0xf]
    %v75 = vld [vmem:[%s1 + $0x8] sm:$0xf]
    %v76 = vld [vmem:[%s1 + $0xc] sm:$0xf]
    %v77 = vld [vmem:[%s1 + $0x10] sm:$0xf]
    %v78 = vld [vmem:[%s1 + $0x14] sm:$0xf]
    %v79 = vld [vmem:[%s1 + $0x18] sm:$0xf]
    %v80 = vld [vmem:[%s1 + $0x1c] sm:$0xf]
    %v81 = vld [vmem:[%s1 + $0x20] sm:$0xf]
    %v82 = vld [vmem:[%s1 + $0x24] sm:$0xf]
    %v83 = vld [vmem:[%s1 + $0x28] sm:$0xf]
    %v84 = vld [vmem:[%s1 + $0x2c] sm:$0xf]
    %v85 = vld [vmem:[%s1 + $0x30] sm:$0xf]
    %v86 = vld [vmem:[%s1 + $0x34] sm:$0xf]
    %v87 = vld [vmem:[%s1 + $0x38] sm:$0xf]
    %v88 = vld [vmem:[%s1 + $0x3c] sm:$0xf]
    %v89 = vld [vmem:[%s1 + $0x40] sm:$0xf]
    %v90 = vld [vmem:[%s1 + $0x44] sm:$0xf]
    %v91 = vld [vmem:[%s1 + $0x48] sm:$0xf]
    %v92 = vld [vmem:[%s1 + $0x4c] sm:$0xf]
    %v93 = vld [vmem:[%s1 + $0x50] sm:$0xf]
    %v94 = vld [vmem:[%s1 + $0x54] sm:$0xf]
    %v95 = vld [vmem:[%s1 + $0x58] sm:$0xf]
    %v96 = vld [vmem:[%s1 + $0x5c] sm:$0xf]
    %v97 = vld [vmem:[%s1 + $0x60] sm:$0xf]
    %v98 = vld [vmem:[%s1 + $0x64] sm:$0xf]
    %v99 = vld [vmem:[%s1 + $0x68] sm:$0xf]
    %v100 = vld [vmem:[%s1 + $0x6c] sm:$0xf]
    %v101 = vld [vmem:[%s1 + $0x70] sm:$0xf]
    %v102 = vld [vmem:[%s1 + $0x74] sm:$0xf]
    %v103 = vld [vmem:[%s1 + $0x78] sm:$0xf]
    %v104 = vld [vmem:[%s1 + $0x7c] sm:$0xf]
    %v105 = vld [vmem:[%s1 + $0x80] sm:$0xf]
    %v106 = vld [vmem:[%s1 + $0x84] sm:$0xf]
    %v107 = vld [vmem:[%s1 + $0x88] sm:$0xf]
    %v108 = vld [vmem:[%s1 + $0x8c] sm:$0xf]
    %v109 = vld [vmem:[%s1 + $0x90] sm:$0xf]
    %v110 = vld [vmem:[%s1 + $0x94] sm:$0xf]
    %v111 = vld [vmem:[%s1 + $0x98] sm:$0xf]
    %v112 = vld [vmem:[%s1 + $0x9c] sm:$0xf]
    %v113 = vld [vmem:[%s1 + $0xa0] sm:$0xf]
    %v114 = vld [vmem:[%s1 + $0xa4] sm:$0xf]
    %v115 = vld [vmem:[%s1 + $0xa8] sm:$0xf]
    %v116 = vld [vmem:[%s1 + $0xac] sm:$0xf]
    %v117 = vld [vmem:[%s1 + $0xb0] sm:$0xf]
    %v118 = vld [vmem:[%s1 + $0xb4] sm:$0xf]
    %v119 = vld [vmem:[%s1 + $0xb8] sm:$0xf]
    %v120 = vld [vmem:[%s1 + $0xbc] sm:$0xf]
    %v121 = vld [vmem:[%s1 + $0xc0] sm:$0xf]
    %v122 = vld [vmem:[%s1 + $0xc4] sm:$0xf]
    %v123 = vld [vmem:[%s1 + $0xc8] sm:$0xf]
    %v124 = vld [vmem:[%s1 + $0xcc] sm:$0xf]
    %v125 = vld [vmem:[%s1 + $0xd0] sm:$0xf]
    %v126 = vld [vmem:[%s1 + $0xd4] sm:$0xf]
    %v127 = vld [vmem:[%s1 + $0xd8] sm:$0xf]
    %v128 = vld [vmem:[%s1 + $0xdc] sm:$0xf]
    %v129 = vld [vmem:[%s1 + $0xe0] sm:$0xf]
    %v130 = vld [vmem:[%s1 + $0xe4] sm:$0xf]
    %v131 = vld [vmem:[%s1 + $0xe8] sm:$0xf]
    %v132 = vld [vmem:[%s1 + $0xec] sm:$0xf]
    %v133 = vld [vmem:[%s1 + $0xf0] sm:$0xf]
    %v134 = vld [vmem:[%s1 + $0xf4] sm:$0xf]
    %v135 = vld [vmem:[%s1 + $0xf8] sm:$0xf]
    %v136 = vld [vmem:[%s1 + $0xfc] sm:$0xf]
    %v137 = vld [vmem:[%s1 + $0x100] sm:$0xf]
    %v138 = vld [vmem:[%s1 + $0x104] sm:$0xf]
    %v139 = vld [vmem:[%s1 + $0x108] sm:$0xf]
    %v140 = vld [vmem:[%s1 + $0x10c] sm:$0xf]
    %v141 = vld [vmem:[%s1 + $0x110] sm:$0xf]
    %v142 = vld [vmem:[%s1 + $0x114] sm:$0xf]
    %v143 = vld [vmem:[%s1 + $0x118] sm:$0xf]
    %v144 = vld [vmem:[%s1 + $0x11c] sm:$0xf]
    %v145 = vld [vmem:[%s1 + $0x120] sm:$0xf]
    %v146 = vld [vmem:[%s1 + $0x124] sm:$0xf]
    %v147 = vld [vmem:[%s1 + $0x128] sm:$0xf]
    %v148 = vld [vmem:[%s1 + $0x12c] sm:$0xf]
    %v149 = vld [vmem:[%s1 + $0x130] sm:$0xf]
    %v150 = vld [vmem:[%s1 + $0x134] sm:$0xf]
    %v151 = vld [vmem:[%s1 + $0x138] sm:$0xf]
    %v152 = vld [vmem:[%s1 + $0x13c] sm:$0xf]
    %v153 = vld [vmem:[%s1 + $0x140] sm:$0xf]
    %v154 = vld [vmem:[%s1 + $0x144] sm:$0xf]
    %v155 = vld [vmem:[%s1 + $0x148] sm:$0xf]
    %v156 = vld [vmem:[%s1 + $0x14c] sm:$0xf]
    %v157 = vld [vmem:[%s1 + $0x150] sm:$0xf]
    %v158 = vld [vmem:[%s1 + $0x154] sm:$0xf]
    %v159 = vld [vmem:[%s1 + $0x158] sm:$0xf]
    %v160 = vld [vmem:[%s1 + $0x15c] sm:$0xf]
    %v161 = vld [vmem:[%s1 + $0x160] sm:$0xf]
    %v162 = vld [vmem:[%s1 + $0x164] sm:$0xf]
    %v163 = vld [vmem:[%s1 + $0x168] sm:$0xf]
    %v164 = vld [vmem:[%s1 + $0x16c] sm:$0xf]
    %v165 = vld [vmem:[%s1 + $0x170] sm:$0xf]
    %v166 = vld [vmem:[%s1 + $0x174] sm:$0xf]
    %v167 = vld [vmem:[%s1 + $0x178] sm:$0xf]
    %v168 = vld [vmem:[%s1 + $0x17c] sm:$0xf]
    %v169 = vld [vmem:[%s2] sm:$0x1]
    %v170 = vpack.c.bf16 %v67, %v67
    %v171 = vpack.c.bf16 %v68, %v68
    %v172 = vpack.c.bf16 %v69, %v69
    %v173 = vpack.c.bf16 %v70, %v70
    %v174 = vpack.c.bf16 %v71, %v71
    %v175 = vpack.c.bf16 %v72, %v72
    %v177 = vlaneseq
    %v178 = vshrl.u32 %v177, 7
    %v179 = vsub.s32 0, %v178
    %v180 = vrot.slane %v169, %v179
    %v278 = vunpack.c.l.b16 %v73
    %v279 = vunpack.c.l.b16 %v74
    %v280 = vunpack.c.l.b16 %v75
    %v281 = vunpack.c.l.b16 %v76
    %v282 = vunpack.c.l.b16 %v77
    %v283 = vunpack.c.l.b16 %v78
    %v284 = vunpack.c.l.b16 %v79
    %v285 = vunpack.c.l.b16 %v80
    %v286 = vunpack.c.l.b16 %v81
    %v287 = vunpack.c.l.b16 %v82
    %v288 = vunpack.c.l.b16 %v83
    %v289 = vunpack.c.l.b16 %v84
    %v290 = vunpack.c.l.b16 %v85
    %v291 = vunpack.c.l.b16 %v86
    %v292 = vunpack.c.l.b16 %v87
    %v293 = vunpack.c.l.b16 %v88
    %v294 = vunpack.c.l.b16 %v89
    %v295 = vunpack.c.l.b16 %v90
    %v296 = vunpack.c.l.b16 %v91
    %v297 = vunpack.c.l.b16 %v92
    %v298 = vunpack.c.l.b16 %v93
    %v299 = vunpack.c.l.b16 %v94
    %v300 = vunpack.c.l.b16 %v95
    %v301 = vunpack.c.l.b16 %v96
    %v302 = vunpack.c.l.b16 %v97
    %v303 = vunpack.c.l.b16 %v98
    %v304 = vunpack.c.l.b16 %v99
    %v305 = vunpack.c.l.b16 %v100
    %v306 = vunpack.c.l.b16 %v101
    %v307 = vunpack.c.l.b16 %v102
    %v308 = vunpack.c.l.b16 %v103
    %v309 = vunpack.c.l.b16 %v104
    %v310 = vunpack.c.l.b16 %v105
    %v311 = vunpack.c.l.b16 %v106
    %v312 = vunpack.c.l.b16 %v107
    %v313 = vunpack.c.l.b16 %v108
    %v314 = vunpack.c.l.b16 %v109
    %v315 = vunpack.c.l.b16 %v110
    %v316 = vunpack.c.l.b16 %v111
    %v317 = vunpack.c.l.b16 %v112
    %v318 = vunpack.c.l.b16 %v113
    %v319 = vunpack.c.l.b16 %v114
    %v320 = vunpack.c.l.b16 %v115
    %v321 = vunpack.c.l.b16 %v116
    %v322 = vunpack.c.l.b16 %v117
    %v323 = vunpack.c.l.b16 %v118
    %v324 = vunpack.c.l.b16 %v119
    %v325 = vunpack.c.l.b16 %v120
    %v326 = vunpack.c.l.b16 %v121
    %v327 = vunpack.c.l.b16 %v122
    %v328 = vunpack.c.l.b16 %v123
    %v329 = vunpack.c.l.b16 %v124
    %v330 = vunpack.c.l.b16 %v125
    %v331 = vunpack.c.l.b16 %v126
    %v332 = vunpack.c.l.b16 %v127
    %v333 = vunpack.c.l.b16 %v128
    %v334 = vunpack.c.l.b16 %v129
    %v335 = vunpack.c.l.b16 %v130
    %v336 = vunpack.c.l.b16 %v131
    %v337 = vunpack.c.l.b16 %v132
    %v338 = vunpack.c.l.b16 %v133
    %v339 = vunpack.c.l.b16 %v134
    %v340 = vunpack.c.l.b16 %v135
    %v341 = vunpack.c.l.b16 %v136
    %v342 = vunpack.c.l.b16 %v137
    %v343 = vunpack.c.l.b16 %v138
    %v344 = vunpack.c.l.b16 %v139
    %v345 = vunpack.c.l.b16 %v140
    %v346 = vunpack.c.l.b16 %v141
    %v347 = vunpack.c.l.b16 %v142
    %v348 = vunpack.c.l.b16 %v143
    %v349 = vunpack.c.l.b16 %v144
    %v350 = vunpack.c.l.b16 %v145
    %v351 = vunpack.c.l.b16 %v146
    %v352 = vunpack.c.l.b16 %v147
    %v353 = vunpack.c.l.b16 %v148
    %v354 = vunpack.c.l.b16 %v149
    %v355 = vunpack.c.l.b16 %v150
    %v356 = vunpack.c.l.b16 %v151
    %v357 = vunpack.c.l.b16 %v152
    %v358 = vunpack.c.l.b16 %v153
    %v359 = vunpack.c.l.b16 %v154
    %v360 = vunpack.c.l.b16 %v155
    %v361 = vunpack.c.l.b16 %v156
    %v362 = vunpack.c.l.b16 %v157
    %v363 = vunpack.c.l.b16 %v158
    %v364 = vunpack.c.l.b16 %v159
    %v365 = vunpack.c.l.b16 %v160
    %v366 = vunpack.c.l.b16 %v161
    %v367 = vunpack.c.l.b16 %v162
    %v368 = vunpack.c.l.b16 %v163
    %v369 = vunpack.c.l.b16 %v164
    %v370 = vunpack.c.l.b16 %v165
    %v371 = vunpack.c.l.b16 %v166
    %v372 = vunpack.c.l.b16 %v167
    %v373 = vunpack.c.l.b16 %v168
    %v374 = vpack.c.b16 %v279, %v278
    %v375 = vpack.c.b16 %v281, %v280
    %v376 = vpack.c.b16 %v283, %v282
    %v377 = vpack.c.b16 %v285, %v284
    %v378 = vpack.c.b16 %v287, %v286
    %v379 = vpack.c.b16 %v289, %v288
    %v380 = vpack.c.b16 %v291, %v290
    %v381 = vpack.c.b16 %v293, %v292
    %v382 = vpack.c.b16 %v295, %v294
    %v383 = vpack.c.b16 %v297, %v296
    %v384 = vpack.c.b16 %v299, %v298
    %v385 = vpack.c.b16 %v301, %v300
    %v386 = vpack.c.b16 %v303, %v302
    %v387 = vpack.c.b16 %v305, %v304
    %v388 = vpack.c.b16 %v307, %v306
    %v389 = vpack.c.b16 %v309, %v308
    %v390 = vpack.c.b16 %v311, %v310
    %v391 = vpack.c.b16 %v313, %v312
    %v392 = vpack.c.b16 %v315, %v314
    %v393 = vpack.c.b16 %v317, %v316
    %v394 = vpack.c.b16 %v319, %v318
    %v395 = vpack.c.b16 %v321, %v320
    %v396 = vpack.c.b16 %v323, %v322
    %v397 = vpack.c.b16 %v325, %v324
    %v398 = vpack.c.b16 %v327, %v326
    %v399 = vpack.c.b16 %v329, %v328
    %v400 = vpack.c.b16 %v331, %v330
    %v401 = vpack.c.b16 %v333, %v332
    %v402 = vpack.c.b16 %v335, %v334
    %v403 = vpack.c.b16 %v337, %v336
    %v404 = vpack.c.b16 %v339, %v338
    %v405 = vpack.c.b16 %v341, %v340
    %v406 = vpack.c.b16 %v343, %v342
    %v407 = vpack.c.b16 %v345, %v344
    %v408 = vpack.c.b16 %v347, %v346
    %v409 = vpack.c.b16 %v349, %v348
    %v410 = vpack.c.b16 %v351, %v350
    %v411 = vpack.c.b16 %v353, %v352
    %v412 = vpack.c.b16 %v355, %v354
    %v413 = vpack.c.b16 %v357, %v356
    %v414 = vpack.c.b16 %v359, %v358
    %v415 = vpack.c.b16 %v361, %v360
    %v416 = vpack.c.b16 %v363, %v362
    %v417 = vpack.c.b16 %v365, %v364
    %v418 = vpack.c.b16 %v367, %v366
    %v419 = vpack.c.b16 %v369, %v368
    %v420 = vpack.c.b16 %v371, %v370
    %v421 = vpack.c.b16 %v373, %v372
    %470 = vmatprep.subr.bf16.mxu0 0
    %471 = vmatpush1.bf16.msra.mxu0 %v374
    %472 = vmatprep.subr.bf16.mxu0 0
    %473 = vmatpush1.bf16.msra.mxu0 %v375
    %474 = vmatprep.subr.bf16.mxu0 0
    %475 = vmatpush1.bf16.msra.mxu0 %v376
    %476 = vmatprep.subr.bf16.mxu0 0
    %477 = vmatpush1.bf16.msra.mxu0 %v377
    %478 = vmatprep.subr.bf16.mxu0 0
    %479 = vmatpush1.bf16.msra.mxu0 %v378
    %480 = vmatprep.subr.bf16.mxu0 0
    %481 = vmatpush1.bf16.msra.mxu0 %v379
    %482 = vmatprep.subr.bf16.mxu0 0
    %483 = vmatpush1.bf16.msra.mxu0 %v380
    %484 = vmatprep.subr.bf16.mxu0 0
    %485 = vmatpush1.bf16.msra.mxu0 %v381
    %486 = vmatprep.subr.bf16.mxu0 0
    %487 = vmatpush1.bf16.msra.mxu0 %v382
    %488 = vmatprep.subr.bf16.mxu0 0
    %489 = vmatpush1.bf16.msra.mxu0 %v383
    %490 = vmatprep.subr.bf16.mxu0 0
    %491 = vmatpush1.bf16.msra.mxu0 %v384
    %492 = vmatprep.subr.bf16.mxu0 0
    %493 = vmatpush1.bf16.msra.mxu0 %v385
    %494 = vmatprep.subr.bf16.mxu0 0
    %495 = vmatpush1.bf16.msra.mxu0 %v386
    %496 = vmatprep.subr.bf16.mxu0 0
    %497 = vmatpush1.bf16.msra.mxu0 %v387
    %498 = vmatprep.subr.bf16.mxu0 0
    %499 = vmatpush1.bf16.msra.mxu0 %v388
    %500 = vmatprep.subr.bf16.mxu0 0
    %501 = vmatpush1.bf16.msra.mxu0 %v389
    %502 = vmatprep.mubr.bf16.mxu0 %v171
    %503 = vmatmul.mubr.bf16.gmra.mrb[0].mxu0 %v170
    %v504 = vpop.f32.mrb[0].mxu0
    %v505 = vadd.f32 %v180, %v504
    %v506 = vpop.f32.mrb[0].mxu0
    %v507 = vpop.f32.mrb[0].mxu0
    %v508 = vpop.f32.mrb[0].mxu0
    %509 = vdwg.mxu0
    %510 = vmatprep.subr.bf16.mxu0 0
    %511 = vmatpush1.bf16.msra.mxu0 %v390
    %512 = vmatprep.subr.bf16.mxu0 0
    %513 = vmatpush1.bf16.msra.mxu0 %v391
    %514 = vmatprep.subr.bf16.mxu0 0
    %515 = vmatpush1.bf16.msra.mxu0 %v392
    %516 = vmatprep.subr.bf16.mxu0 0
    %517 = vmatpush1.bf16.msra.mxu0 %v393
    %518 = vmatprep.subr.bf16.mxu0 0
    %519 = vmatpush1.bf16.msra.mxu0 %v394
    %520 = vmatprep.subr.bf16.mxu0 0
    %521 = vmatpush1.bf16.msra.mxu0 %v395
    %522 = vmatprep.subr.bf16.mxu0 0
    %523 = vmatpush1.bf16.msra.mxu0 %v396
    %524 = vmatprep.subr.bf16.mxu0 0
    %525 = vmatpush1.bf16.msra.mxu0 %v397
    %526 = vmatprep.subr.bf16.mxu0 0
    %527 = vmatpush1.bf16.msra.mxu0 %v398
    %528 = vmatprep.subr.bf16.mxu0 0
    %529 = vmatpush1.bf16.msra.mxu0 %v399
    %530 = vmatprep.subr.bf16.mxu0 0
    %531 = vmatpush1.bf16.msra.mxu0 %v400
    %532 = vmatprep.subr.bf16.mxu0 0
    %533 = vmatpush1.bf16.msra.mxu0 %v401
    %534 = vmatprep.subr.bf16.mxu0 0
    %535 = vmatpush1.bf16.msra.mxu0 %v402
    %536 = vmatprep.subr.bf16.mxu0 0
    %537 = vmatpush1.bf16.msra.mxu0 %v403
    %538 = vmatprep.subr.bf16.mxu0 0
    %539 = vmatpush1.bf16.msra.mxu0 %v404
    %540 = vmatprep.subr.bf16.mxu0 0
    %541 = vmatpush1.bf16.msra.mxu0 %v405
    %542 = vmatprep.mubr.bf16.mxu0 %v173
    %543 = vmatmul.mubr.bf16.gmra.mrb[0].mxu0 %v172
    %v544 = vpop.f32.mrb[0].mxu0
    %v545 = vadd.f32 %v505, %v544
    %v546 = vpop.f32.mrb[0].mxu0
    %v547 = vpop.f32.mrb[0].mxu0
    %v548 = vpop.f32.mrb[0].mxu0
    %549 = vdwg.mxu0
    %550 = vmatprep.subr.bf16.mxu0 0
    %551 = vmatpush1.bf16.msra.mxu0 %v406
    %552 = vmatprep.subr.bf16.mxu0 0
    %553 = vmatpush1.bf16.msra.mxu0 %v407
    %554 = vmatprep.subr.bf16.mxu0 0
    %555 = vmatpush1.bf16.msra.mxu0 %v408
    %556 = vmatprep.subr.bf16.mxu0 0
    %557 = vmatpush1.bf16.msra.mxu0 %v409
    %558 = vmatprep.subr.bf16.mxu0 0
    %559 = vmatpush1.bf16.msra.mxu0 %v410
    %560 = vmatprep.subr.bf16.mxu0 0
    %561 = vmatpush1.bf16.msra.mxu0 %v411
    %562 = vmatprep.subr.bf16.mxu0 0
    %563 = vmatpush1.bf16.msra.mxu0 %v412
    %564 = vmatprep.subr.bf16.mxu0 0
    %565 = vmatpush1.bf16.msra.mxu0 %v413
    %566 = vmatprep.subr.bf16.mxu0 0
    %567 = vmatpush1.bf16.msra.mxu0 %v414
    %568 = vmatprep.subr.bf16.mxu0 0
    %569 = vmatpush1.bf16.msra.mxu0 %v415
    %570 = vmatprep.subr.bf16.mxu0 0
    %571 = vmatpush1.bf16.msra.mxu0 %v416
    %572 = vmatprep.subr.bf16.mxu0 0
    %573 = vmatpush1.bf16.msra.mxu0 %v417
    %574 = vmatprep.subr.bf16.mxu0 0
    %575 = vmatpush1.bf16.msra.mxu0 %v418
    %576 = vmatprep.subr.bf16.mxu0 0
    %577 = vmatpush1.bf16.msra.mxu0 %v419
    %578 = vmatprep.subr.bf16.mxu0 0
    %579 = vmatpush1.bf16.msra.mxu0 %v420
    %580 = vmatprep.subr.bf16.mxu0 0
    %581 = vmatpush1.bf16.msra.mxu0 %v421
    %582 = vmatprep.mubr.bf16.mxu0 %v175
    %583 = vmatmul.mubr.bf16.gmra.mrb[0].mxu0 %v174
    %v584 = vpop.f32.mrb[0].mxu0
    %v585 = vadd.f32 %v545, %v584
    %v586 = vpop.f32.mrb[0].mxu0
    %v587 = vpop.f32.mrb[0].mxu0
    %v588 = vpop.f32.mrb[0].mxu0
    %589 = vdwg.mxu0
    %v590 = vld [vmem:[%s3] sm:$0x1f]
    %v592 = vrot.slane %v590, 1
    %v594 = vadd.f32 %v585, %v592
    %v595 = vrot.slane %v590, 5
    %v597 = vadd.f32 %v585, %v595
    %v599 = vrot.slane %v594, 7
    %v601 = vrot.slane %v590, 3
    %v604 = vrot.slane %v597, 6
    %vm606 = vcmask 1040384
    %v607 = vsel %vm606, %v590, %v599
    %vm608 = vcmask 1044480
    %v609 = vsel %vm608, %v607, %v601
    %vm610 = vcmask 1045504
    %v611 = vsel %vm610, %v609, %v604
    %v612 = vld [vmem:[%s4] sm:$0x1]
    %v613 = vld [vmem:[%s5] sm:$0x1]
    %vm614 = vcmask 523264
    %v615 = vsel %vm614, %v611, 0.0
    %616 = vadd.xlane.f32.xlu0 %v615
    %v617 = vpop.xlane.xlu0 %616
    %vm618 = vcmask 517120
    %v619 = vsel %vm618, %v604, 0.0
    %620 = vadd.xlane.f32.xlu0 %v619
    %v621 = vpop.xlane.xlu0 %620
    %v622 = vrcp.pop 64.0
    %v623 = vmul.f32 %v617, %v622
    %v624 = vmul.f32 %v621, %v622
    %v625 = vsub.f32 %v611, %v623
    %v626 = vsub.f32 %v604, %v624
    %v627 = vmul.f32 %v625, %v625
    %v628 = vmul.f32 %v626, %v626
    %v629 = vsel %vm614, %v627, 0.0
    %630 = vadd.xlane.f32.xlu0 %v629
    %v631 = vpop.xlane.xlu0 %630
    %v632 = vsel %vm618, %v628, 0.0
    %633 = vadd.xlane.f32.xlu0 %v632
    %v634 = vpop.xlane.xlu0 %633
    %v635 = vmul.f32 %v631, %v622
    %v636 = vmul.f32 %v634, %v622
    %v637 = vadd.f32 %v635, 1e-06
    %v638 = vadd.f32 %v636, 1e-06
    %v639 = vrsqrt.pop %v637
    %v640 = vrsqrt.pop %v638
    %v641 = vmul.f32 %v625, %v639
    %v642 = vmul.f32 %v626, %v640
    %v644 = vlaneseq
    %v645 = vshrl.u32 %v644, 7
    %v646 = vsub.s32 0, %v645
    %v647 = vrot.slane %v612, %v646
    %v649 = vmul.f32 %v641, %v647
    %v650 = vmul.f32 %v642, %v647
    %v652 = vlaneseq
    %v653 = vshrl.u32 %v652, 7
    %v654 = vsub.s32 0, %v653
    %v655 = vrot.slane %v613, %v654
    %v657 = vadd.f32 %v649, %v655
    %v658 = vadd.f32 %v650, %v655
    %v659 = vld [vmem:[%s6] sm:$0xff]
    %v660 = vld [vmem:[%s6 + $0x8] sm:$0xff]
    %v661 = vld [vmem:[%s6 + $0x10] sm:$0xff]
    %v662 = vld [vmem:[%s6 + $0x18] sm:$0xff]
    %v663 = vld [vmem:[%s6 + $0x20] sm:$0xff]
    %v664 = vld [vmem:[%s6 + $0x28] sm:$0xff]
    %v665 = vld [vmem:[%s6 + $0x30] sm:$0xff]
    %v666 = vld [vmem:[%s6 + $0x38] sm:$0xff]
    %v667 = vld [vmem:[%s7] sm:$0x3]
    %v668 = vpack.c.bf16 %v658, %v657
    %v670 = vlaneseq
    %v671 = vshrl.u32 %v670, 7
    %v672 = vsub.s32 0, %v671
    %v673 = vrot.slane %v667, %v672
    %v674 = vlaneseq
    %v675 = vshrl.u32 %v674, 7
    %v676 = vsub.s32 1, %v675
    %v677 = vrot.slane %v667, %v676
    %v688 = vunpack.c.l.b16 %v659
    %v689 = vunpack.c.h.b16 %v659
    %v690 = vunpack.c.l.b16 %v660
    %v691 = vunpack.c.h.b16 %v660
    %v692 = vunpack.c.l.b16 %v661
    %v693 = vunpack.c.h.b16 %v661
    %v694 = vunpack.c.l.b16 %v662
    %v695 = vunpack.c.h.b16 %v662
    %v696 = vunpack.c.l.b16 %v663
    %v697 = vunpack.c.h.b16 %v663
    %v698 = vunpack.c.l.b16 %v664
    %v699 = vunpack.c.h.b16 %v664
    %v700 = vunpack.c.l.b16 %v665
    %v701 = vunpack.c.h.b16 %v665
    %v702 = vunpack.c.l.b16 %v666
    %v703 = vunpack.c.h.b16 %v666
    %v704 = vpack.c.b16 %v690, %v688
    %v705 = vpack.c.b16 %v691, %v689
    %v706 = vpack.c.b16 %v694, %v692
    %v707 = vpack.c.b16 %v695, %v693
    %v708 = vpack.c.b16 %v698, %v696
    %v709 = vpack.c.b16 %v699, %v697
    %v710 = vpack.c.b16 %v702, %v700
    %v711 = vpack.c.b16 %v703, %v701
    %v721 = vsel %vm614, %v668, 0
    %723 = vmatprep.subr.bf16.mxu0 %v705
    %724 = vmatpush1.bf16.msra.mxu0 %v704
    %725 = vmatprep.subr.bf16.mxu0 %v707
    %726 = vmatpush1.bf16.msra.mxu0 %v706
    %727 = vmatprep.subr.bf16.mxu0 %v709
    %728 = vmatpush1.bf16.msra.mxu0 %v708
    %729 = vmatprep.subr.bf16.mxu0 %v711
    %730 = vmatpush1.bf16.msra.mxu0 %v710
    %731 = vmatprep.subr.bf16.mxu0 0
    %732 = vmatpush1.bf16.msra.mxu0 0
    %733 = vmatprep.subr.bf16.mxu0 0
    %734 = vmatpush1.bf16.msra.mxu0 0
    %735 = vmatprep.subr.bf16.mxu0 0
    %736 = vmatpush1.bf16.msra.mxu0 0
    %737 = vmatprep.subr.bf16.mxu0 0
    %738 = vmatpush1.bf16.msra.mxu0 0
    %739 = vmatprep.subr.bf16.mxu0 0
    %740 = vmatpush1.bf16.msra.mxu0 0
    %741 = vmatprep.subr.bf16.mxu0 0
    %742 = vmatpush1.bf16.msra.mxu0 0
    %743 = vmatprep.subr.bf16.mxu0 0
    %744 = vmatpush1.bf16.msra.mxu0 0
    %745 = vmatprep.subr.bf16.mxu0 0
    %746 = vmatpush1.bf16.msra.mxu0 0
    %747 = vmatprep.subr.bf16.mxu0 0
    %748 = vmatpush1.bf16.msra.mxu0 0
    %749 = vmatprep.subr.bf16.mxu0 0
    %750 = vmatpush1.bf16.msra.mxu0 0
    %751 = vmatprep.subr.bf16.mxu0 0
    %752 = vmatpush1.bf16.msra.mxu0 0
    %753 = vmatprep.subr.bf16.mxu0 0
    %754 = vmatpush1.bf16.msra.mxu0 0
    %755 = vmatprep.mubr.bf16.mxu0 0
    %756 = vmatmul.mubr.bf16.gmra.mrb[0].mxu0 %v721
    %v757 = vpop.f32.mrb[0].mxu0
    %v758 = vadd.f32 %v673, %v757
    %v759 = vpop.f32.mrb[0].mxu0
    %v760 = vadd.f32 %v677, %v759
    %v761 = vpop.f32.mrb[0].mxu0
    %v762 = vadd.f32 %v673, %v761
    %v763 = vpop.f32.mrb[0].mxu0
    %v764 = vadd.f32 %v677, %v763
    %765 = vdwg.mxu0
    %v766 = vpack.c.bf16 %v758, %v758
    %v767 = vpack.c.bf16 %v760, %v760
    %769 = vrot.lane.b32.xlu0 %v766, 64
    %v770 = vpop.permute.xlu0 %769
    %vm771 = vcmask 261120
    %v773 = vsel %vm771, %v766, 0
    %v776 = vsel %vm771, %v770, 0
    %778 = vmatprep.subr.bf16.mxu0 0
    %779 = vmatpush1.bf16.xpose.msra.mxu0 %v776
    %780 = vmatprep.subr.bf16.mxu0 0
    %781 = vmatpush1.bf16.xpose.msra.mxu0 0
    %782 = vmatprep.subr.bf16.mxu0 0
    %783 = vmatpush1.bf16.xpose.msra.mxu0 0
    %784 = vmatprep.subr.bf16.mxu0 0
    %785 = vmatpush1.bf16.xpose.msra.mxu0 0
    %786 = vmatprep.subr.bf16.mxu0 0
    %787 = vmatpush1.bf16.xpose.msra.mxu0 0
    %788 = vmatprep.subr.bf16.mxu0 0
    %789 = vmatpush1.bf16.xpose.msra.mxu0 0
    %790 = vmatprep.subr.bf16.mxu0 0
    %791 = vmatpush1.bf16.xpose.msra.mxu0 0
    %792 = vmatprep.subr.bf16.mxu0 0
    %793 = vmatpush1.bf16.xpose.msra.mxu0 0
    %794 = vmatprep.subr.bf16.mxu0 0
    %795 = vmatpush1.bf16.xpose.msra.mxu0 0
    %796 = vmatprep.subr.bf16.mxu0 0
    %797 = vmatpush1.bf16.xpose.msra.mxu0 0
    %798 = vmatprep.subr.bf16.mxu0 0
    %799 = vmatpush1.bf16.xpose.msra.mxu0 0
    %800 = vmatprep.subr.bf16.mxu0 0
    %801 = vmatpush1.bf16.xpose.msra.mxu0 0
    %802 = vmatprep.subr.bf16.mxu0 0
    %803 = vmatpush1.bf16.xpose.msra.mxu0 0
    %804 = vmatprep.subr.bf16.mxu0 0
    %805 = vmatpush1.bf16.xpose.msra.mxu0 0
    %806 = vmatprep.subr.bf16.mxu0 0
    %807 = vmatpush1.bf16.xpose.msra.mxu0 0
    %808 = vmatprep.subr.bf16.mxu0 0
    %809 = vmatpush1.bf16.xpose.msra.mxu0 0
    %810 = vmatprep.mubr.bf16.mxu0 0
    %811 = vmatmul.mubr.bf16.gmra.mrb[0].mxu0 %v773
    %v812 = vpop.f32.mrb[0].mxu0
    %v813 = vadd.f32 0.0, %v812
    %v814 = vpop.f32.mrb[0].mxu0
    %v815 = vpop.f32.mrb[0].mxu0
    %v816 = vpop.f32.mrb[0].mxu0
    %817 = vdwg.mxu0
    %v818 = vmul.f32 %v813, 0.17677669
    %vm819 = vcmask 36864
    %v820 = vsel %vm819, %v818, -inf
    %821 = vmax.xlane.f32.xlu0 %v820
    %v822 = vpop.xlane.xlu0 %821
    %v823 = vsub.f32 %v818, %v822
    %v824 = vmul.f32 %v823, 1.442695
    %v825 = vpow.pop %v824
    %v826 = vsel %vm819, %v825, 0.0
    %827 = vadd.xlane.f32.xlu0 %v826
    %v828 = vpop.xlane.xlu0 %827
    %v829 = vrcp.pop %v828
    %v830 = vmul.f32 %v825, %v829
    %v831 = vpack.c.bf16 %v830, %v830
    %vm832 = vcmask 39936
    %v834 = vsel %vm832, %v831, 0
    %vm836 = vcmask 1041408
    %vm837 = vcmask 1042432
    %v838 = vsel %vm836, 4294967295, 65535
    %v839 = vsel %vm837, %v838, 0
    %v841 = vand.u32 %v767, %v839
    %843 = vmatprep.subr.bf16.mxu0 0
    %844 = vmatpush1.bf16.msra.mxu0 %v841
    %845 = vmatprep.subr.bf16.mxu0 0
    %846 = vmatpush1.bf16.msra.mxu0 0
    %847 = vmatprep.subr.bf16.mxu0 0
    %848 = vmatpush1.bf16.msra.mxu0 0
    %849 = vmatprep.subr.bf16.mxu0 0
    %850 = vmatpush1.bf16.msra.mxu0 0
    %851 = vmatprep.subr.bf16.mxu0 0
    %852 = vmatpush1.bf16.msra.mxu0 0
    %853 = vmatprep.subr.bf16.mxu0 0
    %854 = vmatpush1.bf16.msra.mxu0 0
    %855 = vmatprep.subr.bf16.mxu0 0
    %856 = vmatpush1.bf16.msra.mxu0 0
    %857 = vmatprep.subr.bf16.mxu0 0
    %858 = vmatpush1.bf16.msra.mxu0 0
    %859 = vmatprep.subr.bf16.mxu0 0
    %860 = vmatpush1.bf16.msra.mxu0 0
    %861 = vmatprep.subr.bf16.mxu0 0
    %862 = vmatpush1.bf16.msra.mxu0 0
    %863 = vmatprep.subr.bf16.mxu0 0
    %864 = vmatpush1.bf16.msra.mxu0 0
    %865 = vmatprep.subr.bf16.mxu0 0
    %866 = vmatpush1.bf16.msra.mxu0 0
    %867 = vmatprep.subr.bf16.mxu0 0
    %868 = vmatpush1.bf16.msra.mxu0 0
    %869 = vmatprep.subr.bf16.mxu0 0
    %870 = vmatpush1.bf16.msra.mxu0 0
    %871 = vmatprep.subr.bf16.mxu0 0
    %872 = vmatpush1.bf16.msra.mxu0 0
    %873 = vmatprep.subr.bf16.mxu0 0
    %874 = vmatpush1.bf16.msra.mxu0 0
    %875 = vmatprep.mubr.bf16.mxu0 0
    %876 = vmatmul.mubr.bf16.gmra.mrb[0].mxu0 %v834
    %v877 = vpop.f32.mrb[0].mxu0
    %v878 = vadd.f32 0.0, %v877
    %v879 = vpop.f32.mrb[0].mxu0
    %v880 = vpop.f32.mrb[0].mxu0
    %v881 = vpop.f32.mrb[0].mxu0
    %882 = vdwg.mxu0
    %883 = vrot.lane.b32.xlu0 %v766, 96
    %v884 = vpop.permute.xlu0 %883
    %885 = vrot.lane.b32.xlu0 %v766, 32
    %v886 = vpop.permute.xlu0 %885
    %v888 = vsel %vm771, %v884, 0
    %v891 = vsel %vm771, %v886, 0
    %893 = vmatprep.subr.bf16.mxu0 0
    %894 = vmatpush1.bf16.xpose.msra.mxu0 %v891
    %895 = vmatprep.subr.bf16.mxu0 0
    %896 = vmatpush1.bf16.xpose.msra.mxu0 0
    %897 = vmatprep.subr.bf16.mxu0 0
    %898 = vmatpush1.bf16.xpose.msra.mxu0 0
    %899 = vmatprep.subr.bf16.mxu0 0
    %900 = vmatpush1.bf16.xpose.msra.mxu0 0
    %901 = vmatprep.subr.bf16.mxu0 0
    %902 = vmatpush1.bf16.xpose.msra.mxu0 0
    %903 = vmatprep.subr.bf16.mxu0 0
    %904 = vmatpush1.bf16.xpose.msra.mxu0 0
    %905 = vmatprep.subr.bf16.mxu0 0
    %906 = vmatpush1.bf16.xpose.msra.mxu0 0
    %907 = vmatprep.subr.bf16.mxu0 0
    %908 = vmatpush1.bf16.xpose.msra.mxu0 0
    %909 = vmatprep.subr.bf16.mxu0 0
    %910 = vmatpush1.bf16.xpose.msra.mxu0 0
    %911 = vmatprep.subr.bf16.mxu0 0
    %912 = vmatpush1.bf16.xpose.msra.mxu0 0
    %913 = vmatprep.subr.bf16.mxu0 0
    %914 = vmatpush1.bf16.xpose.msra.mxu0 0
    %915 = vmatprep.subr.bf16.mxu0 0
    %916 = vmatpush1.bf16.xpose.msra.mxu0 0
    %917 = vmatprep.subr.bf16.mxu0 0
    %918 = vmatpush1.bf16.xpose.msra.mxu0 0
    %919 = vmatprep.subr.bf16.mxu0 0
    %920 = vmatpush1.bf16.xpose.msra.mxu0 0
    %921 = vmatprep.subr.bf16.mxu0 0
    %922 = vmatpush1.bf16.xpose.msra.mxu0 0
    %923 = vmatprep.subr.bf16.mxu0 0
    %924 = vmatpush1.bf16.xpose.msra.mxu0 0
    %925 = vmatprep.mubr.bf16.mxu0 0
    %926 = vmatmul.mubr.bf16.gmra.mrb[0].mxu0 %v888
    %v927 = vpop.f32.mrb[0].mxu0
    %v928 = vadd.f32 0.0, %v927
    %v929 = vpop.f32.mrb[0].mxu0
    %v930 = vpop.f32.mrb[0].mxu0
    %v931 = vpop.f32.mrb[0].mxu0
    %932 = vdwg.mxu0
    %v933 = vmul.f32 %v928, 0.17677669
    %v934 = vsel %vm819, %v933, -inf
    %935 = vmax.xlane.f32.xlu0 %v934
    %v936 = vpop.xlane.xlu0 %935
    %v937 = vsub.f32 %v933, %v936
    %v938 = vmul.f32 %v937, 1.442695
    %v939 = vpow.pop %v938
    %v940 = vsel %vm819, %v939, 0.0
    %941 = vadd.xlane.f32.xlu0 %v940
    %v942 = vpop.xlane.xlu0 %941
    %v943 = vrcp.pop %v942
    %v944 = vmul.f32 %v939, %v943
    %v945 = vpack.c.bf16 %v944, %v944
    %947 = vrot.lane.b32.xlu0 %v767, 96
    %v948 = vpop.permute.xlu0 %947
    %v950 = vsel %vm832, %v945, 0
    %v953 = vand.u32 %v948, %v839
    %955 = vmatprep.subr.bf16.mxu0 0
    %956 = vmatpush1.bf16.msra.mxu0 %v953
    %957 = vmatprep.subr.bf16.mxu0 0
    %958 = vmatpush1.bf16.msra.mxu0 0
    %959 = vmatprep.subr.bf16.mxu0 0
    %960 = vmatpush1.bf16.msra.mxu0 0
    %961 = vmatprep.subr.bf16.mxu0 0
    %962 = vmatpush1.bf16.msra.mxu0 0
    %963 = vmatprep.subr.bf16.mxu0 0
    %964 = vmatpush1.bf16.msra.mxu0 0
    %965 = vmatprep.subr.bf16.mxu0 0
    %966 = vmatpush1.bf16.msra.mxu0 0
    %967 = vmatprep.subr.bf16.mxu0 0
    %968 = vmatpush1.bf16.msra.mxu0 0
    %969 = vmatprep.subr.bf16.mxu0 0
    %970 = vmatpush1.bf16.msra.mxu0 0
    %971 = vmatprep.subr.bf16.mxu0 0
    %972 = vmatpush1.bf16.msra.mxu0 0
    %973 = vmatprep.subr.bf16.mxu0 0
    %974 = vmatpush1.bf16.msra.mxu0 0
    %975 = vmatprep.subr.bf16.mxu0 0
    %976 = vmatpush1.bf16.msra.mxu0 0
    %977 = vmatprep.subr.bf16.mxu0 0
    %978 = vmatpush1.bf16.msra.mxu0 0
    %979 = vmatprep.subr.bf16.mxu0 0
    %980 = vmatpush1.bf16.msra.mxu0 0
    %981 = vmatprep.subr.bf16.mxu0 0
    %982 = vmatpush1.bf16.msra.mxu0 0
    %983 = vmatprep.subr.bf16.mxu0 0
    %984 = vmatpush1.bf16.msra.mxu0 0
    %985 = vmatprep.subr.bf16.mxu0 0
    %986 = vmatpush1.bf16.msra.mxu0 0
    %987 = vmatprep.mubr.bf16.mxu0 0
    %988 = vmatmul.mubr.bf16.gmra.mrb[0].mxu0 %v950
    %v989 = vpop.f32.mrb[0].mxu0
    %v990 = vadd.f32 0.0, %v989
    %v991 = vpop.f32.mrb[0].mxu0
    %v992 = vpop.f32.mrb[0].mxu0
    %v993 = vpop.f32.mrb[0].mxu0
    %994 = vdwg.mxu0
    %996 = vrot.lane.b32.xlu0 %v990, 32
    %v997 = vpop.permute.xlu0 %996
    %v999 = vsel %vm771, %v878, %v997
    %v1000 = vpack.c.bf16 %v762, %v758
    %v1001 = vpack.c.bf16 %v764, %v760
    %v1003 = vshrl.u32 %v1000, 16
    %v1005 = vrot.slane %v1003, 2
    %v1006 = vshll.u32 %v1000, 16
    %v1008 = vrot.slane %v1006, 3
    %v1009 = vor.u32 %v1005, %v1008
    %1010 = vrot.lane.b32.xlu0 %v1009, 64
    %v1011 = vpop.permute.xlu0 %1010
    %v1013 = vsel %vm771, %v1009, 0
    %v1016 = vsel %vm771, %v1011, 0
    %1018 = vmatprep.subr.bf16.mxu0 0
    %1019 = vmatpush1.bf16.xpose.msra.mxu0 %v1016
    %1020 = vmatprep.subr.bf16.mxu0 0
    %1021 = vmatpush1.bf16.xpose.msra.mxu0 0
    %1022 = vmatprep.subr.bf16.mxu0 0
    %1023 = vmatpush1.bf16.xpose.msra.mxu0 0
    %1024 = vmatprep.subr.bf16.mxu0 0
    %1025 = vmatpush1.bf16.xpose.msra.mxu0 0
    %1026 = vmatprep.subr.bf16.mxu0 0
    %1027 = vmatpush1.bf16.xpose.msra.mxu0 0
    %1028 = vmatprep.subr.bf16.mxu0 0
    %1029 = vmatpush1.bf16.xpose.msra.mxu0 0
    %1030 = vmatprep.subr.bf16.mxu0 0
    %1031 = vmatpush1.bf16.xpose.msra.mxu0 0
    %1032 = vmatprep.subr.bf16.mxu0 0
    %1033 = vmatpush1.bf16.xpose.msra.mxu0 0
    %1034 = vmatprep.subr.bf16.mxu0 0
    %1035 = vmatpush1.bf16.xpose.msra.mxu0 0
    %1036 = vmatprep.subr.bf16.mxu0 0
    %1037 = vmatpush1.bf16.xpose.msra.mxu0 0
    %1038 = vmatprep.subr.bf16.mxu0 0
    %1039 = vmatpush1.bf16.xpose.msra.mxu0 0
    %1040 = vmatprep.subr.bf16.mxu0 0
    %1041 = vmatpush1.bf16.xpose.msra.mxu0 0
    %1042 = vmatprep.subr.bf16.mxu0 0
    %1043 = vmatpush1.bf16.xpose.msra.mxu0 0
    %1044 = vmatprep.subr.bf16.mxu0 0
    %1045 = vmatpush1.bf16.xpose.msra.mxu0 0
    %1046 = vmatprep.subr.bf16.mxu0 0
    %1047 = vmatpush1.bf16.xpose.msra.mxu0 0
    %1048 = vmatprep.subr.bf16.mxu0 0
    %1049 = vmatpush1.bf16.xpose.msra.mxu0 0
    %1050 = vmatprep.mubr.bf16.mxu0 0
    %1051 = vmatmul.mubr.bf16.gmra.mrb[0].mxu0 %v1013
    %v1052 = vpop.f32.mrb[0].mxu0
    %v1053 = vadd.f32 0.0, %v1052
    %v1054 = vpop.f32.mrb[0].mxu0
    %v1055 = vpop.f32.mrb[0].mxu0
    %v1056 = vpop.f32.mrb[0].mxu0
    %1057 = vdwg.mxu0
    %v1058 = vmul.f32 %v1053, 0.17677669
    %v1059 = vsel %vm819, %v1058, -inf
    %1060 = vmax.xlane.f32.xlu0 %v1059
    %v1061 = vpop.xlane.xlu0 %1060
    %v1062 = vsub.f32 %v1058, %v1061
    %v1063 = vmul.f32 %v1062, 1.442695
    %v1064 = vpow.pop %v1063
    %v1065 = vsel %vm819, %v1064, 0.0
    %1066 = vadd.xlane.f32.xlu0 %v1065
    %v1067 = vpop.xlane.xlu0 %1066
    %v1068 = vrcp.pop %v1067
    %v1069 = vmul.f32 %v1064, %v1068
    %v1070 = vpack.c.bf16 %v1069, %v1069
    %v1072 = vshrl.u32 %v1001, 16
    %v1074 = vrot.slane %v1072, 2
    %v1075 = vshll.u32 %v1001, 16
    %v1077 = vrot.slane %v1075, 3
    %v1078 = vor.u32 %v1074, %v1077
    %v1080 = vsel %vm832, %v1070, 0
    %v1083 = vand.u32 %v1078, %v839
    %1085 = vmatprep.subr.bf16.mxu0 0
    %1086 = vmatpush1.bf16.msra.mxu0 %v1083
    %1087 = vmatprep.subr.bf16.mxu0 0
    %1088 = vmatpush1.bf16.msra.mxu0 0
    %1089 = vmatprep.subr.bf16.mxu0 0
    %1090 = vmatpush1.bf16.msra.mxu0 0
    %1091 = vmatprep.subr.bf16.mxu0 0
    %1092 = vmatpush1.bf16.msra.mxu0 0
    %1093 = vmatprep.subr.bf16.mxu0 0
    %1094 = vmatpush1.bf16.msra.mxu0 0
    %1095 = vmatprep.subr.bf16.mxu0 0
    %1096 = vmatpush1.bf16.msra.mxu0 0
    %1097 = vmatprep.subr.bf16.mxu0 0
    %1098 = vmatpush1.bf16.msra.mxu0 0
    %1099 = vmatprep.subr.bf16.mxu0 0
    %1100 = vmatpush1.bf16.msra.mxu0 0
    %1101 = vmatprep.subr.bf16.mxu0 0
    %1102 = vmatpush1.bf16.msra.mxu0 0
    %1103 = vmatprep.subr.bf16.mxu0 0
    %1104 = vmatpush1.bf16.msra.mxu0 0
    %1105 = vmatprep.subr.bf16.mxu0 0
    %1106 = vmatpush1.bf16.msra.mxu0 0
    %1107 = vmatprep.subr.bf16.mxu0 0
    %1108 = vmatpush1.bf16.msra.mxu0 0
    %1109 = vmatprep.subr.bf16.mxu0 0
    %1110 = vmatpush1.bf16.msra.mxu0 0
    %1111 = vmatprep.subr.bf16.mxu0 0
    %1112 = vmatpush1.bf16.msra.mxu0 0
    %1113 = vmatprep.subr.bf16.mxu0 0
    %1114 = vmatpush1.bf16.msra.mxu0 0
    %1115 = vmatprep.subr.bf16.mxu0 0
    %1116 = vmatpush1.bf16.msra.mxu0 0
    %1117 = vmatprep.mubr.bf16.mxu0 0
    %1118 = vmatmul.mubr.bf16.gmra.mrb[0].mxu0 %v1080
    %v1119 = vpop.f32.mrb[0].mxu0
    %v1120 = vadd.f32 0.0, %v1119
    %v1121 = vpop.f32.mrb[0].mxu0
    %v1122 = vpop.f32.mrb[0].mxu0
    %v1123 = vpop.f32.mrb[0].mxu0
    %1124 = vdwg.mxu0
    %1125 = vrot.lane.b32.xlu0 %v1009, 96
    %v1126 = vpop.permute.xlu0 %1125
    %1127 = vrot.lane.b32.xlu0 %v1009, 32
    %v1128 = vpop.permute.xlu0 %1127
    %v1130 = vsel %vm771, %v1126, 0
    %v1133 = vsel %vm771, %v1128, 0
    %1135 = vmatprep.subr.bf16.mxu0 0
    %1136 = vmatpush1.bf16.xpose.msra.mxu0 %v1133
    %1137 = vmatprep.subr.bf16.mxu0 0
    %1138 = vmatpush1.bf16.xpose.msra.mxu0 0
    %1139 = vmatprep.subr.bf16.mxu0 0
    %1140 = vmatpush1.bf16.xpose.msra.mxu0 0
    %1141 = vmatprep.subr.bf16.mxu0 0
    %1142 = vmatpush1.bf16.xpose.msra.mxu0 0
    %1143 = vmatprep.subr.bf16.mxu0 0
    %1144 = vmatpush1.bf16.xpose.msra.mxu0 0
    %1145 = vmatprep.subr.bf16.mxu0 0
    %1146 = vmatpush1.bf16.xpose.msra.mxu0 0
    %1147 = vmatprep.subr.bf16.mxu0 0
    %1148 = vmatpush1.bf16.xpose.msra.mxu0 0
    %1149 = vmatprep.subr.bf16.mxu0 0
    %1150 = vmatpush1.bf16.xpose.msra.mxu0 0
    %1151 = vmatprep.subr.bf16.mxu0 0
    %1152 = vmatpush1.bf16.xpose.msra.mxu0 0
    %1153 = vmatprep.subr.bf16.mxu0 0
    %1154 = vmatpush1.bf16.xpose.msra.mxu0 0
    %1155 = vmatprep.subr.bf16.mxu0 0
    %1156 = vmatpush1.bf16.xpose.msra.mxu0 0
    %1157 = vmatprep.subr.bf16.mxu0 0
    %1158 = vmatpush1.bf16.xpose.msra.mxu0 0
    %1159 = vmatprep.subr.bf16.mxu0 0
    %1160 = vmatpush1.bf16.xpose.msra.mxu0 0
    %1161 = vmatprep.subr.bf16.mxu0 0
    %1162 = vmatpush1.bf16.xpose.msra.mxu0 0
    %1163 = vmatprep.subr.bf16.mxu0 0
    %1164 = vmatpush1.bf16.xpose.msra.mxu0 0
    %1165 = vmatprep.subr.bf16.mxu0 0
    %1166 = vmatpush1.bf16.xpose.msra.mxu0 0
    %1167 = vmatprep.mubr.bf16.mxu0 0
    %1168 = vmatmul.mubr.bf16.gmra.mrb[0].mxu0 %v1130
    %v1169 = vpop.f32.mrb[0].mxu0
    %v1170 = vadd.f32 0.0, %v1169
    %v1171 = vpop.f32.mrb[0].mxu0
    %v1172 = vpop.f32.mrb[0].mxu0
    %v1173 = vpop.f32.mrb[0].mxu0
    %1174 = vdwg.mxu0
    %v1175 = vmul.f32 %v1170, 0.17677669
    %v1176 = vsel %vm819, %v1175, -inf
    %1177 = vmax.xlane.f32.xlu0 %v1176
    %v1178 = vpop.xlane.xlu0 %1177
    %v1179 = vsub.f32 %v1175, %v1178
    %v1180 = vmul.f32 %v1179, 1.442695
    %v1181 = vpow.pop %v1180
    %v1182 = vsel %vm819, %v1181, 0.0
    %1183 = vadd.xlane.f32.xlu0 %v1182
    %v1184 = vpop.xlane.xlu0 %1183
    %v1185 = vrcp.pop %v1184
    %v1186 = vmul.f32 %v1181, %v1185
    %v1187 = vpack.c.bf16 %v1186, %v1186
    %1188 = vrot.lane.b32.xlu0 %v1078, 96
    %v1189 = vpop.permute.xlu0 %1188
    %v1191 = vsel %vm832, %v1187, 0
    %v1194 = vand.u32 %v1189, %v839
    %1196 = vmatprep.subr.bf16.mxu0 0
    %1197 = vmatpush1.bf16.msra.mxu0 %v1194
    %1198 = vmatprep.subr.bf16.mxu0 0
    %1199 = vmatpush1.bf16.msra.mxu0 0
    %1200 = vmatprep.subr.bf16.mxu0 0
    %1201 = vmatpush1.bf16.msra.mxu0 0
    %1202 = vmatprep.subr.bf16.mxu0 0
    %1203 = vmatpush1.bf16.msra.mxu0 0
    %1204 = vmatprep.subr.bf16.mxu0 0
    %1205 = vmatpush1.bf16.msra.mxu0 0
    %1206 = vmatprep.subr.bf16.mxu0 0
    %1207 = vmatpush1.bf16.msra.mxu0 0
    %1208 = vmatprep.subr.bf16.mxu0 0
    %1209 = vmatpush1.bf16.msra.mxu0 0
    %1210 = vmatprep.subr.bf16.mxu0 0
    %1211 = vmatpush1.bf16.msra.mxu0 0
    %1212 = vmatprep.subr.bf16.mxu0 0
    %1213 = vmatpush1.bf16.msra.mxu0 0
    %1214 = vmatprep.subr.bf16.mxu0 0
    %1215 = vmatpush1.bf16.msra.mxu0 0
    %1216 = vmatprep.subr.bf16.mxu0 0
    %1217 = vmatpush1.bf16.msra.mxu0 0
    %1218 = vmatprep.subr.bf16.mxu0 0
    %1219 = vmatpush1.bf16.msra.mxu0 0
    %1220 = vmatprep.subr.bf16.mxu0 0
    %1221 = vmatpush1.bf16.msra.mxu0 0
    %1222 = vmatprep.subr.bf16.mxu0 0
    %1223 = vmatpush1.bf16.msra.mxu0 0
    %1224 = vmatprep.subr.bf16.mxu0 0
    %1225 = vmatpush1.bf16.msra.mxu0 0
    %1226 = vmatprep.subr.bf16.mxu0 0
    %1227 = vmatpush1.bf16.msra.mxu0 0
    %1228 = vmatprep.mubr.bf16.mxu0 0
    %1229 = vmatmul.mubr.bf16.gmra.mrb[0].mxu0 %v1191
    %v1230 = vpop.f32.mrb[0].mxu0
    %v1231 = vadd.f32 0.0, %v1230
    %v1232 = vpop.f32.mrb[0].mxu0
    %v1233 = vpop.f32.mrb[0].mxu0
    %v1234 = vpop.f32.mrb[0].mxu0
    %1235 = vdwg.mxu0
    %1237 = vrot.lane.b32.xlu0 %v1231, 32
    %v1238 = vpop.permute.xlu0 %1237
    %v1240 = vsel %vm771, %v1120, %v1238
    %v1242 = vrot.slane %v1240, 3
    %v1244 = vsel %vm608, %v999, %v1242
    %v1245 = vld [vmem:[%s8] sm:$0xf]
    %v1246 = vld [vmem:[%s8 + $0x4] sm:$0xf]
    %v1247 = vld [vmem:[%s8 + $0x8] sm:$0xf]
    %v1248 = vld [vmem:[%s8 + $0xc] sm:$0xf]
    %v1249 = vld [vmem:[%s8 + $0x10] sm:$0xf]
    %v1250 = vld [vmem:[%s8 + $0x14] sm:$0xf]
    %v1251 = vld [vmem:[%s8 + $0x18] sm:$0xf]
    %v1252 = vld [vmem:[%s8 + $0x1c] sm:$0xf]
    %v1253 = vld [vmem:[%s9] sm:$0x1]
    %v1254 = vpack.c.bf16 %v1242, %v1244
    %v1256 = vlaneseq
    %v1257 = vshrl.u32 %v1256, 7
    %v1258 = vsub.s32 0, %v1257
    %v1259 = vrot.slane %v1253, %v1258
    %v1269 = vunpack.c.l.b16 %v1245
    %v1270 = vunpack.c.l.b16 %v1246
    %v1271 = vunpack.c.l.b16 %v1247
    %v1272 = vunpack.c.l.b16 %v1248
    %v1273 = vunpack.c.l.b16 %v1249
    %v1274 = vunpack.c.l.b16 %v1250
    %v1275 = vunpack.c.l.b16 %v1251
    %v1276 = vunpack.c.l.b16 %v1252
    %v1277 = vpack.c.b16 %v1270, %v1269
    %v1278 = vpack.c.b16 %v1272, %v1271
    %v1279 = vpack.c.b16 %v1274, %v1273
    %v1280 = vpack.c.b16 %v1276, %v1275
    %v1286 = vsel %vm614, %v1254, 0
    %1288 = vmatprep.subr.bf16.mxu0 0
    %1289 = vmatpush1.bf16.msra.mxu0 %v1277
    %1290 = vmatprep.subr.bf16.mxu0 0
    %1291 = vmatpush1.bf16.msra.mxu0 %v1278
    %1292 = vmatprep.subr.bf16.mxu0 0
    %1293 = vmatpush1.bf16.msra.mxu0 %v1279
    %1294 = vmatprep.subr.bf16.mxu0 0
    %1295 = vmatpush1.bf16.msra.mxu0 %v1280
    %1296 = vmatprep.subr.bf16.mxu0 0
    %1297 = vmatpush1.bf16.msra.mxu0 0
    %1298 = vmatprep.subr.bf16.mxu0 0
    %1299 = vmatpush1.bf16.msra.mxu0 0
    %1300 = vmatprep.subr.bf16.mxu0 0
    %1301 = vmatpush1.bf16.msra.mxu0 0
    %1302 = vmatprep.subr.bf16.mxu0 0
    %1303 = vmatpush1.bf16.msra.mxu0 0
    %1304 = vmatprep.subr.bf16.mxu0 0
    %1305 = vmatpush1.bf16.msra.mxu0 0
    %1306 = vmatprep.subr.bf16.mxu0 0
    %1307 = vmatpush1.bf16.msra.mxu0 0
    %1308 = vmatprep.subr.bf16.mxu0 0
    %1309 = vmatpush1.bf16.msra.mxu0 0
    %1310 = vmatprep.subr.bf16.mxu0 0
    %1311 = vmatpush1.bf16.msra.mxu0 0
    %1312 = vmatprep.subr.bf16.mxu0 0
    %1313 = vmatpush1.bf16.msra.mxu0 0
    %1314 = vmatprep.subr.bf16.mxu0 0
    %1315 = vmatpush1.bf16.msra.mxu0 0
    %1316 = vmatprep.subr.bf16.mxu0 0
    %1317 = vmatpush1.bf16.msra.mxu0 0
    %1318 = vmatprep.subr.bf16.mxu0 0
    %1319 = vmatpush1.bf16.msra.mxu0 0
    %1320 = vmatprep.mubr.bf16.mxu0 0
    %1321 = vmatmul.mubr.bf16.gmra.mrb[0].mxu0 %v1286
    %v1322 = vpop.f32.mrb[0].mxu0
    %v1323 = vadd.f32 %v1259, %v1322
    %v1324 = vpop.f32.mrb[0].mxu0
    %v1325 = vpop.f32.mrb[0].mxu0
    %v1326 = vadd.f32 %v1259, %v1325
    %v1327 = vpop.f32.mrb[0].mxu0
    %1328 = vdwg.mxu0
    %v1329 = vadd.f32 %v611, %v1323
    %v1330 = vadd.f32 %v604, %v1326
    %v1331 = vld [vmem:[%s10] sm:$0x1]
    %v1332 = vld [vmem:[%s11] sm:$0x1]
    %v1333 = vsel %vm614, %v1329, 0.0
    %1334 = vadd.xlane.f32.xlu0 %v1333
    %v1335 = vpop.xlane.xlu0 %1334
    %v1336 = vsel %vm618, %v1330, 0.0
    %1337 = vadd.xlane.f32.xlu0 %v1336
    %v1338 = vpop.xlane.xlu0 %1337
    %v1339 = vmul.f32 %v1335, %v622
    %v1340 = vmul.f32 %v1338, %v622
    %v1341 = vsub.f32 %v1329, %v1339
    %v1342 = vsub.f32 %v1330, %v1340
    %v1343 = vmul.f32 %v1341, %v1341
    %v1344 = vmul.f32 %v1342, %v1342
    %v1345 = vsel %vm614, %v1343, 0.0
    %1346 = vadd.xlane.f32.xlu0 %v1345
    %v1347 = vpop.xlane.xlu0 %1346
    %v1348 = vsel %vm618, %v1344, 0.0
    %1349 = vadd.xlane.f32.xlu0 %v1348
    %v1350 = vpop.xlane.xlu0 %1349
    %v1351 = vmul.f32 %v1347, %v622
    %v1352 = vmul.f32 %v1350, %v622
    %v1353 = vadd.f32 %v1351, 1e-06
    %v1354 = vadd.f32 %v1352, 1e-06
    %v1355 = vrsqrt.pop %v1353
    %v1356 = vrsqrt.pop %v1354
    %v1357 = vmul.f32 %v1341, %v1355
    %v1358 = vmul.f32 %v1342, %v1356
    %v1360 = vlaneseq
    %v1361 = vshrl.u32 %v1360, 7
    %v1362 = vsub.s32 0, %v1361
    %v1363 = vrot.slane %v1331, %v1362
    %v1365 = vmul.f32 %v1357, %v1363
    %v1366 = vmul.f32 %v1358, %v1363
    %v1368 = vlaneseq
    %v1369 = vshrl.u32 %v1368, 7
    %v1370 = vsub.s32 0, %v1369
    %v1371 = vrot.slane %v1332, %v1370
    %v1373 = vadd.f32 %v1365, %v1371
    %v1374 = vadd.f32 %v1366, %v1371
    %v1375 = vld [vmem:[%s12] sm:$0xff]
    %v1376 = vld [vmem:[%s12 + $0x8] sm:$0xff]
    %v1377 = vld [vmem:[%s12 + $0x10] sm:$0xff]
    %v1378 = vld [vmem:[%s12 + $0x18] sm:$0xff]
    %v1379 = vld [vmem:[%s12 + $0x20] sm:$0xff]
    %v1380 = vld [vmem:[%s12 + $0x28] sm:$0xff]
    %v1381 = vld [vmem:[%s12 + $0x30] sm:$0xff]
    %v1382 = vld [vmem:[%s12 + $0x38] sm:$0xff]
    %v1383 = vld [vmem:[%s13] sm:$0x3]
    %v1384 = vpack.c.bf16 %v1374, %v1373
    %v1386 = vlaneseq
    %v1387 = vshrl.u32 %v1386, 7
    %v1388 = vsub.s32 0, %v1387
    %v1389 = vrot.slane %v1383, %v1388
    %v1390 = vlaneseq
    %v1391 = vshrl.u32 %v1390, 7
    %v1392 = vsub.s32 1, %v1391
    %v1393 = vrot.slane %v1383, %v1392
    %v1404 = vunpack.c.l.b16 %v1375
    %v1405 = vunpack.c.h.b16 %v1375
    %v1406 = vunpack.c.l.b16 %v1376
    %v1407 = vunpack.c.h.b16 %v1376
    %v1408 = vunpack.c.l.b16 %v1377
    %v1409 = vunpack.c.h.b16 %v1377
    %v1410 = vunpack.c.l.b16 %v1378
    %v1411 = vunpack.c.h.b16 %v1378
    %v1412 = vunpack.c.l.b16 %v1379
    %v1413 = vunpack.c.h.b16 %v1379
    %v1414 = vunpack.c.l.b16 %v1380
    %v1415 = vunpack.c.h.b16 %v1380
    %v1416 = vunpack.c.l.b16 %v1381
    %v1417 = vunpack.c.h.b16 %v1381
    %v1418 = vunpack.c.l.b16 %v1382
    %v1419 = vunpack.c.h.b16 %v1382
    %v1420 = vpack.c.b16 %v1406, %v1404
    %v1421 = vpack.c.b16 %v1407, %v1405
    %v1422 = vpack.c.b16 %v1410, %v1408
    %v1423 = vpack.c.b16 %v1411, %v1409
    %v1424 = vpack.c.b16 %v1414, %v1412
    %v1425 = vpack.c.b16 %v1415, %v1413
    %v1426 = vpack.c.b16 %v1418, %v1416
    %v1427 = vpack.c.b16 %v1419, %v1417
    %v1437 = vsel %vm614, %v1384, 0
    %1439 = vmatprep.subr.bf16.mxu0 %v1421
    %1440 = vmatpush1.bf16.msra.mxu0 %v1420
    %1441 = vmatprep.subr.bf16.mxu0 %v1423
    %1442 = vmatpush1.bf16.msra.mxu0 %v1422
    %1443 = vmatprep.subr.bf16.mxu0 %v1425
    %1444 = vmatpush1.bf16.msra.mxu0 %v1424
    %1445 = vmatprep.subr.bf16.mxu0 %v1427
    %1446 = vmatpush1.bf16.msra.mxu0 %v1426
    %1447 = vmatprep.subr.bf16.mxu0 0
    %1448 = vmatpush1.bf16.msra.mxu0 0
    %1449 = vmatprep.subr.bf16.mxu0 0
    %1450 = vmatpush1.bf16.msra.mxu0 0
    %1451 = vmatprep.subr.bf16.mxu0 0
    %1452 = vmatpush1.bf16.msra.mxu0 0
    %1453 = vmatprep.subr.bf16.mxu0 0
    %1454 = vmatpush1.bf16.msra.mxu0 0
    %1455 = vmatprep.subr.bf16.mxu0 0
    %1456 = vmatpush1.bf16.msra.mxu0 0
    %1457 = vmatprep.subr.bf16.mxu0 0
    %1458 = vmatpush1.bf16.msra.mxu0 0
    %1459 = vmatprep.subr.bf16.mxu0 0
    %1460 = vmatpush1.bf16.msra.mxu0 0
    %1461 = vmatprep.subr.bf16.mxu0 0
    %1462 = vmatpush1.bf16.msra.mxu0 0
    %1463 = vmatprep.subr.bf16.mxu0 0
    %1464 = vmatpush1.bf16.msra.mxu0 0
    %1465 = vmatprep.subr.bf16.mxu0 0
    %1466 = vmatpush1.bf16.msra.mxu0 0
    %1467 = vmatprep.subr.bf16.mxu0 0
    %1468 = vmatpush1.bf16.msra.mxu0 0
    %1469 = vmatprep.subr.bf16.mxu0 0
    %1470 = vmatpush1.bf16.msra.mxu0 0
    %1471 = vmatprep.mubr.bf16.mxu0 0
    %1472 = vmatmul.mubr.bf16.gmra.mrb[0].mxu0 %v1437
    %v1473 = vpop.f32.mrb[0].mxu0
    %v1474 = vadd.f32 %v1389, %v1473
    %v1475 = vpop.f32.mrb[0].mxu0
    %v1476 = vadd.f32 %v1393, %v1475
    %v1477 = vpop.f32.mrb[0].mxu0
    %v1478 = vadd.f32 %v1389, %v1477
    %v1479 = vpop.f32.mrb[0].mxu0
    %v1480 = vadd.f32 %v1393, %v1479
    %1481 = vdwg.mxu0
    %v1482 = vmul.f32 %v1474, %v1474
    %v1483 = vmul.f32 %v1476, %v1476
    %v1484 = vmul.f32 %v1478, %v1478
    %v1485 = vmul.f32 %v1480, %v1480
    %v1486 = vmul.f32 %v1474, %v1482
    %v1487 = vmul.f32 %v1476, %v1483
    %v1488 = vmul.f32 %v1478, %v1484
    %v1489 = vmul.f32 %v1480, %v1485
    %v1490 = vmul.f32 %v1486, 0.044715
    %v1491 = vmul.f32 %v1487, 0.044715
    %v1492 = vmul.f32 %v1488, 0.044715
    %v1493 = vmul.f32 %v1489, 0.044715
    %v1494 = vadd.f32 %v1474, %v1490
    %v1495 = vadd.f32 %v1476, %v1491
    %v1496 = vadd.f32 %v1478, %v1492
    %v1497 = vadd.f32 %v1480, %v1493
    %v1498 = vmul.f32 %v1494, 0.7978846
    %v1499 = vmul.f32 %v1495, 0.7978846
    %v1500 = vmul.f32 %v1496, 0.7978846
    %v1501 = vmul.f32 %v1497, 0.7978846
    %v1502 = vtanh.pop %v1498
    %v1503 = vtanh.pop %v1499
    %v1504 = vtanh.pop %v1500
    %v1505 = vtanh.pop %v1501
    %v1506 = vadd.f32 %v1502, 1.0
    %v1507 = vadd.f32 %v1503, 1.0
    %v1508 = vadd.f32 %v1504, 1.0
    %v1509 = vadd.f32 %v1505, 1.0
    %v1510 = vmul.f32 %v1506, 0.5
    %v1511 = vmul.f32 %v1507, 0.5
    %v1512 = vmul.f32 %v1508, 0.5
    %v1513 = vmul.f32 %v1509, 0.5
    %v1514 = vmul.f32 %v1474, %v1510
    %v1515 = vmul.f32 %v1476, %v1511
    %v1516 = vmul.f32 %v1478, %v1512
    %v1517 = vmul.f32 %v1480, %v1513
    %v1518 = vld [vmem:[%s14] sm:$0xf]
    %v1519 = vld [vmem:[%s14 + $0x4] sm:$0xf]
    %v1520 = vld [vmem:[%s14 + $0x8] sm:$0xf]
    %v1521 = vld [vmem:[%s14 + $0xc] sm:$0xf]
    %v1522 = vld [vmem:[%s14 + $0x10] sm:$0xf]
    %v1523 = vld [vmem:[%s14 + $0x14] sm:$0xf]
    %v1524 = vld [vmem:[%s14 + $0x18] sm:$0xf]
    %v1525 = vld [vmem:[%s14 + $0x1c] sm:$0xf]
    %v1526 = vld [vmem:[%s14 + $0x20] sm:$0xf]
    %v1527 = vld [vmem:[%s14 + $0x24] sm:$0xf]
    %v1528 = vld [vmem:[%s14 + $0x28] sm:$0xf]
    %v1529 = vld [vmem:[%s14 + $0x2c] sm:$0xf]
    %v1530 = vld [vmem:[%s14 + $0x30] sm:$0xf]
    %v1531 = vld [vmem:[%s14 + $0x34] sm:$0xf]
    %v1532 = vld [vmem:[%s14 + $0x38] sm:$0xf]
    %v1533 = vld [vmem:[%s14 + $0x3c] sm:$0xf]
    %v1534 = vld [vmem:[%s14 + $0x40] sm:$0xf]
    %v1535 = vld [vmem:[%s14 + $0x44] sm:$0xf]
    %v1536 = vld [vmem:[%s14 + $0x48] sm:$0xf]
    %v1537 = vld [vmem:[%s14 + $0x4c] sm:$0xf]
    %v1538 = vld [vmem:[%s14 + $0x50] sm:$0xf]
    %v1539 = vld [vmem:[%s14 + $0x54] sm:$0xf]
    %v1540 = vld [vmem:[%s14 + $0x58] sm:$0xf]
    %v1541 = vld [vmem:[%s14 + $0x5c] sm:$0xf]
    %v1542 = vld [vmem:[%s14 + $0x60] sm:$0xf]
    %v1543 = vld [vmem:[%s14 + $0x64] sm:$0xf]
    %v1544 = vld [vmem:[%s14 + $0x68] sm:$0xf]
    %v1545 = vld [vmem:[%s14 + $0x6c] sm:$0xf]
    %v1546 = vld [vmem:[%s14 + $0x70] sm:$0xf]
    %v1547 = vld [vmem:[%s14 + $0x74] sm:$0xf]
    %v1548 = vld [vmem:[%s14 + $0x78] sm:$0xf]
    %v1549 = vld [vmem:[%s14 + $0x7c] sm:$0xf]
    %v1550 = vld [vmem:[%s15] sm:$0x1]
    %v1551 = vpack.c.bf16 %v1516, %v1514
    %v1552 = vpack.c.bf16 %v1517, %v1515
    %v1554 = vlaneseq
    %v1555 = vshrl.u32 %v1554, 7
    %v1556 = vsub.s32 0, %v1555
    %v1557 = vrot.slane %v1550, %v1556
    %v1591 = vunpack.c.l.b16 %v1518
    %v1592 = vunpack.c.l.b16 %v1519
    %v1593 = vunpack.c.l.b16 %v1520
    %v1594 = vunpack.c.l.b16 %v1521
    %v1595 = vunpack.c.l.b16 %v1522
    %v1596 = vunpack.c.l.b16 %v1523
    %v1597 = vunpack.c.l.b16 %v1524
    %v1598 = vunpack.c.l.b16 %v1525
    %v1599 = vunpack.c.l.b16 %v1526
    %v1600 = vunpack.c.l.b16 %v1527
    %v1601 = vunpack.c.l.b16 %v1528
    %v1602 = vunpack.c.l.b16 %v1529
    %v1603 = vunpack.c.l.b16 %v1530
    %v1604 = vunpack.c.l.b16 %v1531
    %v1605 = vunpack.c.l.b16 %v1532
    %v1606 = vunpack.c.l.b16 %v1533
    %v1607 = vunpack.c.l.b16 %v1534
    %v1608 = vunpack.c.l.b16 %v1535
    %v1609 = vunpack.c.l.b16 %v1536
    %v1610 = vunpack.c.l.b16 %v1537
    %v1611 = vunpack.c.l.b16 %v1538
    %v1612 = vunpack.c.l.b16 %v1539
    %v1613 = vunpack.c.l.b16 %v1540
    %v1614 = vunpack.c.l.b16 %v1541
    %v1615 = vunpack.c.l.b16 %v1542
    %v1616 = vunpack.c.l.b16 %v1543
    %v1617 = vunpack.c.l.b16 %v1544
    %v1618 = vunpack.c.l.b16 %v1545
    %v1619 = vunpack.c.l.b16 %v1546
    %v1620 = vunpack.c.l.b16 %v1547
    %v1621 = vunpack.c.l.b16 %v1548
    %v1622 = vunpack.c.l.b16 %v1549
    %v1623 = vpack.c.b16 %v1592, %v1591
    %v1624 = vpack.c.b16 %v1594, %v1593
    %v1625 = vpack.c.b16 %v1596, %v1595
    %v1626 = vpack.c.b16 %v1598, %v1597
    %v1627 = vpack.c.b16 %v1600, %v1599
    %v1628 = vpack.c.b16 %v1602, %v1601
    %v1629 = vpack.c.b16 %v1604, %v1603
    %v1630 = vpack.c.b16 %v1606, %v1605
    %v1631 = vpack.c.b16 %v1608, %v1607
    %v1632 = vpack.c.b16 %v1610, %v1609
    %v1633 = vpack.c.b16 %v1612, %v1611
    %v1634 = vpack.c.b16 %v1614, %v1613
    %v1635 = vpack.c.b16 %v1616, %v1615
    %v1636 = vpack.c.b16 %v1618, %v1617
    %v1637 = vpack.c.b16 %v1620, %v1619
    %v1638 = vpack.c.b16 %v1622, %v1621
    %1655 = vmatprep.subr.bf16.mxu0 0
    %1656 = vmatpush1.bf16.msra.mxu0 %v1623
    %1657 = vmatprep.subr.bf16.mxu0 0
    %1658 = vmatpush1.bf16.msra.mxu0 %v1624
    %1659 = vmatprep.subr.bf16.mxu0 0
    %1660 = vmatpush1.bf16.msra.mxu0 %v1625
    %1661 = vmatprep.subr.bf16.mxu0 0
    %1662 = vmatpush1.bf16.msra.mxu0 %v1626
    %1663 = vmatprep.subr.bf16.mxu0 0
    %1664 = vmatpush1.bf16.msra.mxu0 %v1627
    %1665 = vmatprep.subr.bf16.mxu0 0
    %1666 = vmatpush1.bf16.msra.mxu0 %v1628
    %1667 = vmatprep.subr.bf16.mxu0 0
    %1668 = vmatpush1.bf16.msra.mxu0 %v1629
    %1669 = vmatprep.subr.bf16.mxu0 0
    %1670 = vmatpush1.bf16.msra.mxu0 %v1630
    %1671 = vmatprep.subr.bf16.mxu0 0
    %1672 = vmatpush1.bf16.msra.mxu0 %v1631
    %1673 = vmatprep.subr.bf16.mxu0 0
    %1674 = vmatpush1.bf16.msra.mxu0 %v1632
    %1675 = vmatprep.subr.bf16.mxu0 0
    %1676 = vmatpush1.bf16.msra.mxu0 %v1633
    %1677 = vmatprep.subr.bf16.mxu0 0
    %1678 = vmatpush1.bf16.msra.mxu0 %v1634
    %1679 = vmatprep.subr.bf16.mxu0 0
    %1680 = vmatpush1.bf16.msra.mxu0 %v1635
    %1681 = vmatprep.subr.bf16.mxu0 0
    %1682 = vmatpush1.bf16.msra.mxu0 %v1636
    %1683 = vmatprep.subr.bf16.mxu0 0
    %1684 = vmatpush1.bf16.msra.mxu0 %v1637
    %1685 = vmatprep.subr.bf16.mxu0 0
    %1686 = vmatpush1.bf16.msra.mxu0 %v1638
    %1687 = vmatprep.mubr.bf16.mxu0 %v1552
    %1688 = vmatmul.mubr.bf16.gmra.mrb[0].mxu0 %v1551
    %v1689 = vpop.f32.mrb[0].mxu0
    %v1690 = vadd.f32 %v1557, %v1689
    %v1691 = vpop.f32.mrb[0].mxu0
    %v1692 = vpop.f32.mrb[0].mxu0
    %v1693 = vadd.f32 %v1557, %v1692
    %v1694 = vpop.f32.mrb[0].mxu0
    %1695 = vdwg.mxu0
    %v1696 = vadd.f32 %v1329, %v1690
    %v1697 = vadd.f32 %v1330, %v1693
    %s1698 = scalar_lea.vmem %s4, 1
    %v1699 = vld [vmem:[%s1698] sm:$0x1]
    %s1700 = scalar_lea.vmem %s5, 1
    %v1701 = vld [vmem:[%s1700] sm:$0x1]
    %v1702 = vsel %vm614, %v1696, 0.0
    %1703 = vadd.xlane.f32.xlu0 %v1702
    %v1704 = vpop.xlane.xlu0 %1703
    %v1705 = vsel %vm618, %v1697, 0.0
    %1706 = vadd.xlane.f32.xlu0 %v1705
    %v1707 = vpop.xlane.xlu0 %1706
    %v1708 = vmul.f32 %v1704, %v622
    %v1709 = vmul.f32 %v1707, %v622
    %v1710 = vsub.f32 %v1696, %v1708
    %v1711 = vsub.f32 %v1697, %v1709
    %v1712 = vmul.f32 %v1710, %v1710
    %v1713 = vmul.f32 %v1711, %v1711
    %v1714 = vsel %vm614, %v1712, 0.0
    %1715 = vadd.xlane.f32.xlu0 %v1714
    %v1716 = vpop.xlane.xlu0 %1715
    %v1717 = vsel %vm618, %v1713, 0.0
    %1718 = vadd.xlane.f32.xlu0 %v1717
    %v1719 = vpop.xlane.xlu0 %1718
    %v1720 = vmul.f32 %v1716, %v622
    %v1721 = vmul.f32 %v1719, %v622
    %v1722 = vadd.f32 %v1720, 1e-06
    %v1723 = vadd.f32 %v1721, 1e-06
    %v1724 = vrsqrt.pop %v1722
    %v1725 = vrsqrt.pop %v1723
    %v1726 = vmul.f32 %v1710, %v1724
    %v1727 = vmul.f32 %v1711, %v1725
    %v1729 = vlaneseq
    %v1730 = vshrl.u32 %v1729, 7
    %v1731 = vsub.s32 0, %v1730
    %v1732 = vrot.slane %v1699, %v1731
    %v1734 = vmul.f32 %v1726, %v1732
    %v1735 = vmul.f32 %v1727, %v1732
    %v1737 = vlaneseq
    %v1738 = vshrl.u32 %v1737, 7
    %v1739 = vsub.s32 0, %v1738
    %v1740 = vrot.slane %v1701, %v1739
    %v1742 = vadd.f32 %v1734, %v1740
    %v1743 = vadd.f32 %v1735, %v1740
    %s1744 = scalar_lea.vmem %s6, 64
    %v1745 = vld [vmem:[%s1744] sm:$0xff]
    %v1746 = vld [vmem:[%s1744 + $0x8] sm:$0xff]
    %v1747 = vld [vmem:[%s1744 + $0x10] sm:$0xff]
    %v1748 = vld [vmem:[%s1744 + $0x18] sm:$0xff]
    %v1749 = vld [vmem:[%s1744 + $0x20] sm:$0xff]
    %v1750 = vld [vmem:[%s1744 + $0x28] sm:$0xff]
    %v1751 = vld [vmem:[%s1744 + $0x30] sm:$0xff]
    %v1752 = vld [vmem:[%s1744 + $0x38] sm:$0xff]
    %s1753 = scalar_lea.vmem %s7, 2
    %v1754 = vld [vmem:[%s1753] sm:$0x3]
    %v1755 = vpack.c.bf16 %v1743, %v1742
    %v1757 = vlaneseq
    %v1758 = vshrl.u32 %v1757, 7
    %v1759 = vsub.s32 0, %v1758
    %v1760 = vrot.slane %v1754, %v1759
    %v1761 = vlaneseq
    %v1762 = vshrl.u32 %v1761, 7
    %v1763 = vsub.s32 1, %v1762
    %v1764 = vrot.slane %v1754, %v1763
    %v1775 = vunpack.c.l.b16 %v1745
    %v1776 = vunpack.c.h.b16 %v1745
    %v1777 = vunpack.c.l.b16 %v1746
    %v1778 = vunpack.c.h.b16 %v1746
    %v1779 = vunpack.c.l.b16 %v1747
    %v1780 = vunpack.c.h.b16 %v1747
    %v1781 = vunpack.c.l.b16 %v1748
    %v1782 = vunpack.c.h.b16 %v1748
    %v1783 = vunpack.c.l.b16 %v1749
    %v1784 = vunpack.c.h.b16 %v1749
    %v1785 = vunpack.c.l.b16 %v1750
    %v1786 = vunpack.c.h.b16 %v1750
    %v1787 = vunpack.c.l.b16 %v1751
    %v1788 = vunpack.c.h.b16 %v1751
    %v1789 = vunpack.c.l.b16 %v1752
    %v1790 = vunpack.c.h.b16 %v1752
    %v1791 = vpack.c.b16 %v1777, %v1775
    %v1792 = vpack.c.b16 %v1778, %v1776
    %v1793 = vpack.c.b16 %v1781, %v1779
    %v1794 = vpack.c.b16 %v1782, %v1780
    %v1795 = vpack.c.b16 %v1785, %v1783
    %v1796 = vpack.c.b16 %v1786, %v1784
    %v1797 = vpack.c.b16 %v1789, %v1787
    %v1798 = vpack.c.b16 %v1790, %v1788
    %v1808 = vsel %vm614, %v1755, 0
    %1810 = vmatprep.subr.bf16.mxu0 %v1792
    %1811 = vmatpush1.bf16.msra.mxu0 %v1791
    %1812 = vmatprep.subr.bf16.mxu0 %v1794
    %1813 = vmatpush1.bf16.msra.mxu0 %v1793
    %1814 = vmatprep.subr.bf16.mxu0 %v1796
    %1815 = vmatpush1.bf16.msra.mxu0 %v1795
    %1816 = vmatprep.subr.bf16.mxu0 %v1798
    %1817 = vmatpush1.bf16.msra.mxu0 %v1797
    %1818 = vmatprep.subr.bf16.mxu0 0
    %1819 = vmatpush1.bf16.msra.mxu0 0
    %1820 = vmatprep.subr.bf16.mxu0 0
    %1821 = vmatpush1.bf16.msra.mxu0 0
    %1822 = vmatprep.subr.bf16.mxu0 0
    %1823 = vmatpush1.bf16.msra.mxu0 0
    %1824 = vmatprep.subr.bf16.mxu0 0
    %1825 = vmatpush1.bf16.msra.mxu0 0
    %1826 = vmatprep.subr.bf16.mxu0 0
    %1827 = vmatpush1.bf16.msra.mxu0 0
    %1828 = vmatprep.subr.bf16.mxu0 0
    %1829 = vmatpush1.bf16.msra.mxu0 0
    %1830 = vmatprep.subr.bf16.mxu0 0
    %1831 = vmatpush1.bf16.msra.mxu0 0
    %1832 = vmatprep.subr.bf16.mxu0 0
    %1833 = vmatpush1.bf16.msra.mxu0 0
    %1834 = vmatprep.subr.bf16.mxu0 0
    %1835 = vmatpush1.bf16.msra.mxu0 0
    %1836 = vmatprep.subr.bf16.mxu0 0
    %1837 = vmatpush1.bf16.msra.mxu0 0
    %1838 = vmatprep.subr.bf16.mxu0 0
    %1839 = vmatpush1.bf16.msra.mxu0 0
    %1840 = vmatprep.subr.bf16.mxu0 0
    %1841 = vmatpush1.bf16.msra.mxu0 0
    %1842 = vmatprep.mubr.bf16.mxu0 0
    %1843 = vmatmul.mubr.bf16.gmra.mrb[0].mxu0 %v1808
    %v1844 = vpop.f32.mrb[0].mxu0
    %v1845 = vadd.f32 %v1760, %v1844
    %v1846 = vpop.f32.mrb[0].mxu0
    %v1847 = vadd.f32 %v1764, %v1846
    %v1848 = vpop.f32.mrb[0].mxu0
    %v1849 = vadd.f32 %v1760, %v1848
    %v1850 = vpop.f32.mrb[0].mxu0
    %v1851 = vadd.f32 %v1764, %v1850
    %1852 = vdwg.mxu0
    %v1853 = vpack.c.bf16 %v1845, %v1845
    %v1854 = vpack.c.bf16 %v1847, %v1847
    %1856 = vrot.lane.b32.xlu0 %v1853, 64
    %v1857 = vpop.permute.xlu0 %1856
    %v1859 = vsel %vm771, %v1853, 0
    %v1862 = vsel %vm771, %v1857, 0
    %1864 = vmatprep.subr.bf16.mxu0 0
    %1865 = vmatpush1.bf16.xpose.msra.mxu0 %v1862
    %1866 = vmatprep.subr.bf16.mxu0 0
    %1867 = vmatpush1.bf16.xpose.msra.mxu0 0
    %1868 = vmatprep.subr.bf16.mxu0 0
    %1869 = vmatpush1.bf16.xpose.msra.mxu0 0
    %1870 = vmatprep.subr.bf16.mxu0 0
    %1871 = vmatpush1.bf16.xpose.msra.mxu0 0
    %1872 = vmatprep.subr.bf16.mxu0 0
    %1873 = vmatpush1.bf16.xpose.msra.mxu0 0
    %1874 = vmatprep.subr.bf16.mxu0 0
    %1875 = vmatpush1.bf16.xpose.msra.mxu0 0
    %1876 = vmatprep.subr.bf16.mxu0 0
    %1877 = vmatpush1.bf16.xpose.msra.mxu0 0
    %1878 = vmatprep.subr.bf16.mxu0 0
    %1879 = vmatpush1.bf16.xpose.msra.mxu0 0
    %1880 = vmatprep.subr.bf16.mxu0 0
    %1881 = vmatpush1.bf16.xpose.msra.mxu0 0
    %1882 = vmatprep.subr.bf16.mxu0 0
    %1883 = vmatpush1.bf16.xpose.msra.mxu0 0
    %1884 = vmatprep.subr.bf16.mxu0 0
    %1885 = vmatpush1.bf16.xpose.msra.mxu0 0
    %1886 = vmatprep.subr.bf16.mxu0 0
    %1887 = vmatpush1.bf16.xpose.msra.mxu0 0
    %1888 = vmatprep.subr.bf16.mxu0 0
    %1889 = vmatpush1.bf16.xpose.msra.mxu0 0
    %1890 = vmatprep.subr.bf16.mxu0 0
    %1891 = vmatpush1.bf16.xpose.msra.mxu0 0
    %1892 = vmatprep.subr.bf16.mxu0 0
    %1893 = vmatpush1.bf16.xpose.msra.mxu0 0
    %1894 = vmatprep.subr.bf16.mxu0 0
    %1895 = vmatpush1.bf16.xpose.msra.mxu0 0
    %1896 = vmatprep.mubr.bf16.mxu0 0
    %1897 = vmatmul.mubr.bf16.gmra.mrb[0].mxu0 %v1859
    %v1898 = vpop.f32.mrb[0].mxu0
    %v1899 = vadd.f32 0.0, %v1898
    %v1900 = vpop.f32.mrb[0].mxu0
    %v1901 = vpop.f32.mrb[0].mxu0
    %v1902 = vpop.f32.mrb[0].mxu0
    %1903 = vdwg.mxu0
    %v1904 = vmul.f32 %v1899, 0.17677669
    %v1905 = vsel %vm819, %v1904, -inf
    %1906 = vmax.xlane.f32.xlu0 %v1905
    %v1907 = vpop.xlane.xlu0 %1906
    %v1908 = vsub.f32 %v1904, %v1907
    %v1909 = vmul.f32 %v1908, 1.442695
    %v1910 = vpow.pop %v1909
    %v1911 = vsel %vm819, %v1910, 0.0
    %1912 = vadd.xlane.f32.xlu0 %v1911
    %v1913 = vpop.xlane.xlu0 %1912
    %v1914 = vrcp.pop %v1913
    %v1915 = vmul.f32 %v1910, %v1914
    %v1916 = vpack.c.bf16 %v1915, %v1915
    %v1918 = vsel %vm832, %v1916, 0
    %v1921 = vand.u32 %v1854, %v839
    %1923 = vmatprep.subr.bf16.mxu0 0
    %1924 = vmatpush1.bf16.msra.mxu0 %v1921
    %1925 = vmatprep.subr.bf16.mxu0 0
    %1926 = vmatpush1.bf16.msra.mxu0 0
    %1927 = vmatprep.subr.bf16.mxu0 0
    %1928 = vmatpush1.bf16.msra.mxu0 0
    %1929 = vmatprep.subr.bf16.mxu0 0
    %1930 = vmatpush1.bf16.msra.mxu0 0
    %1931 = vmatprep.subr.bf16.mxu0 0
    %1932 = vmatpush1.bf16.msra.mxu0 0
    %1933 = vmatprep.subr.bf16.mxu0 0
    %1934 = vmatpush1.bf16.msra.mxu0 0
    %1935 = vmatprep.subr.bf16.mxu0 0
    %1936 = vmatpush1.bf16.msra.mxu0 0
    %1937 = vmatprep.subr.bf16.mxu0 0
    %1938 = vmatpush1.bf16.msra.mxu0 0
    %1939 = vmatprep.subr.bf16.mxu0 0
    %1940 = vmatpush1.bf16.msra.mxu0 0
    %1941 = vmatprep.subr.bf16.mxu0 0
    %1942 = vmatpush1.bf16.msra.mxu0 0
    %1943 = vmatprep.subr.bf16.mxu0 0
    %1944 = vmatpush1.bf16.msra.mxu0 0
    %1945 = vmatprep.subr.bf16.mxu0 0
    %1946 = vmatpush1.bf16.msra.mxu0 0
    %1947 = vmatprep.subr.bf16.mxu0 0
    %1948 = vmatpush1.bf16.msra.mxu0 0
    %1949 = vmatprep.subr.bf16.mxu0 0
    %1950 = vmatpush1.bf16.msra.mxu0 0
    %1951 = vmatprep.subr.bf16.mxu0 0
    %1952 = vmatpush1.bf16.msra.mxu0 0
    %1953 = vmatprep.subr.bf16.mxu0 0
    %1954 = vmatpush1.bf16.msra.mxu0 0
    %1955 = vmatprep.mubr.bf16.mxu0 0
    %1956 = vmatmul.mubr.bf16.gmra.mrb[0].mxu0 %v1918
    %v1957 = vpop.f32.mrb[0].mxu0
    %v1958 = vadd.f32 0.0, %v1957
    %v1959 = vpop.f32.mrb[0].mxu0
    %v1960 = vpop.f32.mrb[0].mxu0
    %v1961 = vpop.f32.mrb[0].mxu0
    %1962 = vdwg.mxu0
    %1963 = vrot.lane.b32.xlu0 %v1853, 96
    %v1964 = vpop.permute.xlu0 %1963
    %1965 = vrot.lane.b32.xlu0 %v1853, 32
    %v1966 = vpop.permute.xlu0 %1965
    %v1968 = vsel %vm771, %v1964, 0
    %v1971 = vsel %vm771, %v1966, 0
    %1973 = vmatprep.subr.bf16.mxu0 0
    %1974 = vmatpush1.bf16.xpose.msra.mxu0 %v1971
    %1975 = vmatprep.subr.bf16.mxu0 0
    %1976 = vmatpush1.bf16.xpose.msra.mxu0 0
    %1977 = vmatprep.subr.bf16.mxu0 0
    %1978 = vmatpush1.bf16.xpose.msra.mxu0 0
    %1979 = vmatprep.subr.bf16.mxu0 0
    %1980 = vmatpush1.bf16.xpose.msra.mxu0 0
    %1981 = vmatprep.subr.bf16.mxu0 0
    %1982 = vmatpush1.bf16.xpose.msra.mxu0 0
    %1983 = vmatprep.subr.bf16.mxu0 0
    %1984 = vmatpush1.bf16.xpose.msra.mxu0 0
    %1985 = vmatprep.subr.bf16.mxu0 0
    %1986 = vmatpush1.bf16.xpose.msra.mxu0 0
    %1987 = vmatprep.subr.bf16.mxu0 0
    %1988 = vmatpush1.bf16.xpose.msra.mxu0 0
    %1989 = vmatprep.subr.bf16.mxu0 0
    %1990 = vmatpush1.bf16.xpose.msra.mxu0 0
    %1991 = vmatprep.subr.bf16.mxu0 0
    %1992 = vmatpush1.bf16.xpose.msra.mxu0 0
    %1993 = vmatprep.subr.bf16.mxu0 0
    %1994 = vmatpush1.bf16.xpose.msra.mxu0 0
    %1995 = vmatprep.subr.bf16.mxu0 0
    %1996 = vmatpush1.bf16.xpose.msra.mxu0 0
    %1997 = vmatprep.subr.bf16.mxu0 0
    %1998 = vmatpush1.bf16.xpose.msra.mxu0 0
    %1999 = vmatprep.subr.bf16.mxu0 0
    %2000 = vmatpush1.bf16.xpose.msra.mxu0 0
    %2001 = vmatprep.subr.bf16.mxu0 0
    %2002 = vmatpush1.bf16.xpose.msra.mxu0 0
    %2003 = vmatprep.subr.bf16.mxu0 0
    %2004 = vmatpush1.bf16.xpose.msra.mxu0 0
    %2005 = vmatprep.mubr.bf16.mxu0 0
    %2006 = vmatmul.mubr.bf16.gmra.mrb[0].mxu0 %v1968
    %v2007 = vpop.f32.mrb[0].mxu0
    %v2008 = vadd.f32 0.0, %v2007
    %v2009 = vpop.f32.mrb[0].mxu0
    %v2010 = vpop.f32.mrb[0].mxu0
    %v2011 = vpop.f32.mrb[0].mxu0
    %2012 = vdwg.mxu0
    %v2013 = vmul.f32 %v2008, 0.17677669
    %v2014 = vsel %vm819, %v2013, -inf
    %2015 = vmax.xlane.f32.xlu0 %v2014
    %v2016 = vpop.xlane.xlu0 %2015
    %v2017 = vsub.f32 %v2013, %v2016
    %v2018 = vmul.f32 %v2017, 1.442695
    %v2019 = vpow.pop %v2018
    %v2020 = vsel %vm819, %v2019, 0.0
    %2021 = vadd.xlane.f32.xlu0 %v2020
    %v2022 = vpop.xlane.xlu0 %2021
    %v2023 = vrcp.pop %v2022
    %v2024 = vmul.f32 %v2019, %v2023
    %v2025 = vpack.c.bf16 %v2024, %v2024
    %2027 = vrot.lane.b32.xlu0 %v1854, 96
    %v2028 = vpop.permute.xlu0 %2027
    %v2030 = vsel %vm832, %v2025, 0
    %v2033 = vand.u32 %v2028, %v839
    %2035 = vmatprep.subr.bf16.mxu0 0
    %2036 = vmatpush1.bf16.msra.mxu0 %v2033
    %2037 = vmatprep.subr.bf16.mxu0 0
    %2038 = vmatpush1.bf16.msra.mxu0 0
    %2039 = vmatprep.subr.bf16.mxu0 0
    %2040 = vmatpush1.bf16.msra.mxu0 0
    %2041 = vmatprep.subr.bf16.mxu0 0
    %2042 = vmatpush1.bf16.msra.mxu0 0
    %2043 = vmatprep.subr.bf16.mxu0 0
    %2044 = vmatpush1.bf16.msra.mxu0 0
    %2045 = vmatprep.subr.bf16.mxu0 0
    %2046 = vmatpush1.bf16.msra.mxu0 0
    %2047 = vmatprep.subr.bf16.mxu0 0
    %2048 = vmatpush1.bf16.msra.mxu0 0
    %2049 = vmatprep.subr.bf16.mxu0 0
    %2050 = vmatpush1.bf16.msra.mxu0 0
    %2051 = vmatprep.subr.bf16.mxu0 0
    %2052 = vmatpush1.bf16.msra.mxu0 0
    %2053 = vmatprep.subr.bf16.mxu0 0
    %2054 = vmatpush1.bf16.msra.mxu0 0
    %2055 = vmatprep.subr.bf16.mxu0 0
    %2056 = vmatpush1.bf16.msra.mxu0 0
    %2057 = vmatprep.subr.bf16.mxu0 0
    %2058 = vmatpush1.bf16.msra.mxu0 0
    %2059 = vmatprep.subr.bf16.mxu0 0
    %2060 = vmatpush1.bf16.msra.mxu0 0
    %2061 = vmatprep.subr.bf16.mxu0 0
    %2062 = vmatpush1.bf16.msra.mxu0 0
    %2063 = vmatprep.subr.bf16.mxu0 0
    %2064 = vmatpush1.bf16.msra.mxu0 0
    %2065 = vmatprep.subr.bf16.mxu0 0
    %2066 = vmatpush1.bf16.msra.mxu0 0
    %2067 = vmatprep.mubr.bf16.mxu0 0
    %2068 = vmatmul.mubr.bf16.gmra.mrb[0].mxu0 %v2030
    %v2069 = vpop.f32.mrb[0].mxu0
    %v2070 = vadd.f32 0.0, %v2069
    %v2071 = vpop.f32.mrb[0].mxu0
    %v2072 = vpop.f32.mrb[0].mxu0
    %v2073 = vpop.f32.mrb[0].mxu0
    %2074 = vdwg.mxu0
    %2076 = vrot.lane.b32.xlu0 %v2070, 32
    %v2077 = vpop.permute.xlu0 %2076
    %v2079 = vsel %vm771, %v1958, %v2077
    %v2080 = vpack.c.bf16 %v1849, %v1845
    %v2081 = vpack.c.bf16 %v1851, %v1847
    %v2083 = vshrl.u32 %v2080, 16
    %v2085 = vrot.slane %v2083, 2
    %v2086 = vshll.u32 %v2080, 16
    %v2088 = vrot.slane %v2086, 3
    %v2089 = vor.u32 %v2085, %v2088
    %2090 = vrot.lane.b32.xlu0 %v2089, 64
    %v2091 = vpop.permute.xlu0 %2090
    %v2093 = vsel %vm771, %v2089, 0
    %v2096 = vsel %vm771, %v2091, 0
    %2098 = vmatprep.subr.bf16.mxu0 0
    %2099 = vmatpush1.bf16.xpose.msra.mxu0 %v2096
    %2100 = vmatprep.subr.bf16.mxu0 0
    %2101 = vmatpush1.bf16.xpose.msra.mxu0 0
    %2102 = vmatprep.subr.bf16.mxu0 0
    %2103 = vmatpush1.bf16.xpose.msra.mxu0 0
    %2104 = vmatprep.subr.bf16.mxu0 0
    %2105 = vmatpush1.bf16.xpose.msra.mxu0 0
    %2106 = vmatprep.subr.bf16.mxu0 0
    %2107 = vmatpush1.bf16.xpose.msra.mxu0 0
    %2108 = vmatprep.subr.bf16.mxu0 0
    %2109 = vmatpush1.bf16.xpose.msra.mxu0 0
    %2110 = vmatprep.subr.bf16.mxu0 0
    %2111 = vmatpush1.bf16.xpose.msra.mxu0 0
    %2112 = vmatprep.subr.bf16.mxu0 0
    %2113 = vmatpush1.bf16.xpose.msra.mxu0 0
    %2114 = vmatprep.subr.bf16.mxu0 0
    %2115 = vmatpush1.bf16.xpose.msra.mxu0 0
    %2116 = vmatprep.subr.bf16.mxu0 0
    %2117 = vmatpush1.bf16.xpose.msra.mxu0 0
    %2118 = vmatprep.subr.bf16.mxu0 0
    %2119 = vmatpush1.bf16.xpose.msra.mxu0 0
    %2120 = vmatprep.subr.bf16.mxu0 0
    %2121 = vmatpush1.bf16.xpose.msra.mxu0 0
    %2122 = vmatprep.subr.bf16.mxu0 0
    %2123 = vmatpush1.bf16.xpose.msra.mxu0 0
    %2124 = vmatprep.subr.bf16.mxu0 0
    %2125 = vmatpush1.bf16.xpose.msra.mxu0 0
    %2126 = vmatprep.subr.bf16.mxu0 0
    %2127 = vmatpush1.bf16.xpose.msra.mxu0 0
    %2128 = vmatprep.subr.bf16.mxu0 0
    %2129 = vmatpush1.bf16.xpose.msra.mxu0 0
    %2130 = vmatprep.mubr.bf16.mxu0 0
    %2131 = vmatmul.mubr.bf16.gmra.mrb[0].mxu0 %v2093
    %v2132 = vpop.f32.mrb[0].mxu0
    %v2133 = vadd.f32 0.0, %v2132
    %v2134 = vpop.f32.mrb[0].mxu0
    %v2135 = vpop.f32.mrb[0].mxu0
    %v2136 = vpop.f32.mrb[0].mxu0
    %2137 = vdwg.mxu0
    %v2138 = vmul.f32 %v2133, 0.17677669
    %v2139 = vsel %vm819, %v2138, -inf
    %2140 = vmax.xlane.f32.xlu0 %v2139
    %v2141 = vpop.xlane.xlu0 %2140
    %v2142 = vsub.f32 %v2138, %v2141
    %v2143 = vmul.f32 %v2142, 1.442695
    %v2144 = vpow.pop %v2143
    %v2145 = vsel %vm819, %v2144, 0.0
    %2146 = vadd.xlane.f32.xlu0 %v2145
    %v2147 = vpop.xlane.xlu0 %2146
    %v2148 = vrcp.pop %v2147
    %v2149 = vmul.f32 %v2144, %v2148
    %v2150 = vpack.c.bf16 %v2149, %v2149
    %v2152 = vshrl.u32 %v2081, 16
    %v2154 = vrot.slane %v2152, 2
    %v2155 = vshll.u32 %v2081, 16
    %v2157 = vrot.slane %v2155, 3
    %v2158 = vor.u32 %v2154, %v2157
    %v2160 = vsel %vm832, %v2150, 0
    %v2163 = vand.u32 %v2158, %v839
    %2165 = vmatprep.subr.bf16.mxu0 0
    %2166 = vmatpush1.bf16.msra.mxu0 %v2163
    %2167 = vmatprep.subr.bf16.mxu0 0
    %2168 = vmatpush1.bf16.msra.mxu0 0
    %2169 = vmatprep.subr.bf16.mxu0 0
    %2170 = vmatpush1.bf16.msra.mxu0 0
    %2171 = vmatprep.subr.bf16.mxu0 0
    %2172 = vmatpush1.bf16.msra.mxu0 0
    %2173 = vmatprep.subr.bf16.mxu0 0
    %2174 = vmatpush1.bf16.msra.mxu0 0
    %2175 = vmatprep.subr.bf16.mxu0 0
    %2176 = vmatpush1.bf16.msra.mxu0 0
    %2177 = vmatprep.subr.bf16.mxu0 0
    %2178 = vmatpush1.bf16.msra.mxu0 0
    %2179 = vmatprep.subr.bf16.mxu0 0
    %2180 = vmatpush1.bf16.msra.mxu0 0
    %2181 = vmatprep.subr.bf16.mxu0 0
    %2182 = vmatpush1.bf16.msra.mxu0 0
    %2183 = vmatprep.subr.bf16.mxu0 0
    %2184 = vmatpush1.bf16.msra.mxu0 0
    %2185 = vmatprep.subr.bf16.mxu0 0
    %2186 = vmatpush1.bf16.msra.mxu0 0
    %2187 = vmatprep.subr.bf16.mxu0 0
    %2188 = vmatpush1.bf16.msra.mxu0 0
    %2189 = vmatprep.subr.bf16.mxu0 0
    %2190 = vmatpush1.bf16.msra.mxu0 0
    %2191 = vmatprep.subr.bf16.mxu0 0
    %2192 = vmatpush1.bf16.msra.mxu0 0
    %2193 = vmatprep.subr.bf16.mxu0 0
    %2194 = vmatpush1.bf16.msra.mxu0 0
    %2195 = vmatprep.subr.bf16.mxu0 0
    %2196 = vmatpush1.bf16.msra.mxu0 0
    %2197 = vmatprep.mubr.bf16.mxu0 0
    %2198 = vmatmul.mubr.bf16.gmra.mrb[0].mxu0 %v2160
    %v2199 = vpop.f32.mrb[0].mxu0
    %v2200 = vadd.f32 0.0, %v2199
    %v2201 = vpop.f32.mrb[0].mxu0
    %v2202 = vpop.f32.mrb[0].mxu0
    %v2203 = vpop.f32.mrb[0].mxu0
    %2204 = vdwg.mxu0
    %2205 = vrot.lane.b32.xlu0 %v2089, 96
    %v2206 = vpop.permute.xlu0 %2205
    %2207 = vrot.lane.b32.xlu0 %v2089, 32
    %v2208 = vpop.permute.xlu0 %2207
    %v2210 = vsel %vm771, %v2206, 0
    %v2213 = vsel %vm771, %v2208, 0
    %2215 = vmatprep.subr.bf16.mxu0 0
    %2216 = vmatpush1.bf16.xpose.msra.mxu0 %v2213
    %2217 = vmatprep.subr.bf16.mxu0 0
    %2218 = vmatpush1.bf16.xpose.msra.mxu0 0
    %2219 = vmatprep.subr.bf16.mxu0 0
    %2220 = vmatpush1.bf16.xpose.msra.mxu0 0
    %2221 = vmatprep.subr.bf16.mxu0 0
    %2222 = vmatpush1.bf16.xpose.msra.mxu0 0
    %2223 = vmatprep.subr.bf16.mxu0 0
    %2224 = vmatpush1.bf16.xpose.msra.mxu0 0
    %2225 = vmatprep.subr.bf16.mxu0 0
    %2226 = vmatpush1.bf16.xpose.msra.mxu0 0
    %2227 = vmatprep.subr.bf16.mxu0 0
    %2228 = vmatpush1.bf16.xpose.msra.mxu0 0
    %2229 = vmatprep.subr.bf16.mxu0 0
    %2230 = vmatpush1.bf16.xpose.msra.mxu0 0
    %2231 = vmatprep.subr.bf16.mxu0 0
    %2232 = vmatpush1.bf16.xpose.msra.mxu0 0
    %2233 = vmatprep.subr.bf16.mxu0 0
    %2234 = vmatpush1.bf16.xpose.msra.mxu0 0
    %2235 = vmatprep.subr.bf16.mxu0 0
    %2236 = vmatpush1.bf16.xpose.msra.mxu0 0
    %2237 = vmatprep.subr.bf16.mxu0 0
    %2238 = vmatpush1.bf16.xpose.msra.mxu0 0
    %2239 = vmatprep.subr.bf16.mxu0 0
    %2240 = vmatpush1.bf16.xpose.msra.mxu0 0
    %2241 = vmatprep.subr.bf16.mxu0 0
    %2242 = vmatpush1.bf16.xpose.msra.mxu0 0
    %2243 = vmatprep.subr.bf16.mxu0 0
    %2244 = vmatpush1.bf16.xpose.msra.mxu0 0
    %2245 = vmatprep.subr.bf16.mxu0 0
    %2246 = vmatpush1.bf16.xpose.msra.mxu0 0
    %2247 = vmatprep.mubr.bf16.mxu0 0
    %2248 = vmatmul.mubr.bf16.gmra.mrb[0].mxu0 %v2210
    %v2249 = vpop.f32.mrb[0].mxu0
    %v2250 = vadd.f32 0.0, %v2249
    %v2251 = vpop.f32.mrb[0].mxu0
    %v2252 = vpop.f32.mrb[0].mxu0
    %v2253 = vpop.f32.mrb[0].mxu0
    %2254 = vdwg.mxu0
    %v2255 = vmul.f32 %v2250, 0.17677669
    %v2256 = vsel %vm819, %v2255, -inf
    %2257 = vmax.xlane.f32.xlu0 %v2256
    %v2258 = vpop.xlane.xlu0 %2257
    %v2259 = vsub.f32 %v2255, %v2258
    %v2260 = vmul.f32 %v2259, 1.442695
    %v2261 = vpow.pop %v2260
    %v2262 = vsel %vm819, %v2261, 0.0
    %2263 = vadd.xlane.f32.xlu0 %v2262
    %v2264 = vpop.xlane.xlu0 %2263
    %v2265 = vrcp.pop %v2264
    %v2266 = vmul.f32 %v2261, %v2265
    %v2267 = vpack.c.bf16 %v2266, %v2266
    %2268 = vrot.lane.b32.xlu0 %v2158, 96
    %v2269 = vpop.permute.xlu0 %2268
    %v2271 = vsel %vm832, %v2267, 0
    %v2274 = vand.u32 %v2269, %v839
    %2276 = vmatprep.subr.bf16.mxu0 0
    %2277 = vmatpush1.bf16.msra.mxu0 %v2274
    %2278 = vmatprep.subr.bf16.mxu0 0
    %2279 = vmatpush1.bf16.msra.mxu0 0
    %2280 = vmatprep.subr.bf16.mxu0 0
    %2281 = vmatpush1.bf16.msra.mxu0 0
    %2282 = vmatprep.subr.bf16.mxu0 0
    %2283 = vmatpush1.bf16.msra.mxu0 0
    %2284 = vmatprep.subr.bf16.mxu0 0
    %2285 = vmatpush1.bf16.msra.mxu0 0
    %2286 = vmatprep.subr.bf16.mxu0 0
    %2287 = vmatpush1.bf16.msra.mxu0 0
    %2288 = vmatprep.subr.bf16.mxu0 0
    %2289 = vmatpush1.bf16.msra.mxu0 0
    %2290 = vmatprep.subr.bf16.mxu0 0
    %2291 = vmatpush1.bf16.msra.mxu0 0
    %2292 = vmatprep.subr.bf16.mxu0 0
    %2293 = vmatpush1.bf16.msra.mxu0 0
    %2294 = vmatprep.subr.bf16.mxu0 0
    %2295 = vmatpush1.bf16.msra.mxu0 0
    %2296 = vmatprep.subr.bf16.mxu0 0
    %2297 = vmatpush1.bf16.msra.mxu0 0
    %2298 = vmatprep.subr.bf16.mxu0 0
    %2299 = vmatpush1.bf16.msra.mxu0 0
    %2300 = vmatprep.subr.bf16.mxu0 0
    %2301 = vmatpush1.bf16.msra.mxu0 0
    %2302 = vmatprep.subr.bf16.mxu0 0
    %2303 = vmatpush1.bf16.msra.mxu0 0
    %2304 = vmatprep.subr.bf16.mxu0 0
    %2305 = vmatpush1.bf16.msra.mxu0 0
    %2306 = vmatprep.subr.bf16.mxu0 0
    %2307 = vmatpush1.bf16.msra.mxu0 0
    %2308 = vmatprep.mubr.bf16.mxu0 0
    %2309 = vmatmul.mubr.bf16.gmra.mrb[0].mxu0 %v2271
    %v2310 = vpop.f32.mrb[0].mxu0
    %v2311 = vadd.f32 0.0, %v2310
    %v2312 = vpop.f32.mrb[0].mxu0
    %v2313 = vpop.f32.mrb[0].mxu0
    %v2314 = vpop.f32.mrb[0].mxu0
    %2315 = vdwg.mxu0
    %2317 = vrot.lane.b32.xlu0 %v2311, 32
    %v2318 = vpop.permute.xlu0 %2317
    %v2320 = vsel %vm771, %v2200, %v2318
    %v2322 = vrot.slane %v2320, 3
    %v2324 = vsel %vm608, %v2079, %v2322
    %s2325 = scalar_lea.vmem %s8, 32
    %v2326 = vld [vmem:[%s2325] sm:$0xf]
    %v2327 = vld [vmem:[%s2325 + $0x4] sm:$0xf]
    %v2328 = vld [vmem:[%s2325 + $0x8] sm:$0xf]
    %v2329 = vld [vmem:[%s2325 + $0xc] sm:$0xf]
    %v2330 = vld [vmem:[%s2325 + $0x10] sm:$0xf]
    %v2331 = vld [vmem:[%s2325 + $0x14] sm:$0xf]
    %v2332 = vld [vmem:[%s2325 + $0x18] sm:$0xf]
    %v2333 = vld [vmem:[%s2325 + $0x1c] sm:$0xf]
    %s2334 = scalar_lea.vmem %s9, 1
    %v2335 = vld [vmem:[%s2334] sm:$0x1]
    %v2336 = vpack.c.bf16 %v2322, %v2324
    %v2338 = vlaneseq
    %v2339 = vshrl.u32 %v2338, 7
    %v2340 = vsub.s32 0, %v2339
    %v2341 = vrot.slane %v2335, %v2340
    %v2351 = vunpack.c.l.b16 %v2326
    %v2352 = vunpack.c.l.b16 %v2327
    %v2353 = vunpack.c.l.b16 %v2328
    %v2354 = vunpack.c.l.b16 %v2329
    %v2355 = vunpack.c.l.b16 %v2330
    %v2356 = vunpack.c.l.b16 %v2331
    %v2357 = vunpack.c.l.b16 %v2332
    %v2358 = vunpack.c.l.b16 %v2333
    %v2359 = vpack.c.b16 %v2352, %v2351
    %v2360 = vpack.c.b16 %v2354, %v2353
    %v2361 = vpack.c.b16 %v2356, %v2355
    %v2362 = vpack.c.b16 %v2358, %v2357
    %v2368 = vsel %vm614, %v2336, 0
    %2370 = vmatprep.subr.bf16.mxu0 0
    %2371 = vmatpush1.bf16.msra.mxu0 %v2359
    %2372 = vmatprep.subr.bf16.mxu0 0
    %2373 = vmatpush1.bf16.msra.mxu0 %v2360
    %2374 = vmatprep.subr.bf16.mxu0 0
    %2375 = vmatpush1.bf16.msra.mxu0 %v2361
    %2376 = vmatprep.subr.bf16.mxu0 0
    %2377 = vmatpush1.bf16.msra.mxu0 %v2362
    %2378 = vmatprep.subr.bf16.mxu0 0
    %2379 = vmatpush1.bf16.msra.mxu0 0
    %2380 = vmatprep.subr.bf16.mxu0 0
    %2381 = vmatpush1.bf16.msra.mxu0 0
    %2382 = vmatprep.subr.bf16.mxu0 0
    %2383 = vmatpush1.bf16.msra.mxu0 0
    %2384 = vmatprep.subr.bf16.mxu0 0
    %2385 = vmatpush1.bf16.msra.mxu0 0
    %2386 = vmatprep.subr.bf16.mxu0 0
    %2387 = vmatpush1.bf16.msra.mxu0 0
    %2388 = vmatprep.subr.bf16.mxu0 0
    %2389 = vmatpush1.bf16.msra.mxu0 0
    %2390 = vmatprep.subr.bf16.mxu0 0
    %2391 = vmatpush1.bf16.msra.mxu0 0
    %2392 = vmatprep.subr.bf16.mxu0 0
    %2393 = vmatpush1.bf16.msra.mxu0 0
    %2394 = vmatprep.subr.bf16.mxu0 0
    %2395 = vmatpush1.bf16.msra.mxu0 0
    %2396 = vmatprep.subr.bf16.mxu0 0
    %2397 = vmatpush1.bf16.msra.mxu0 0
    %2398 = vmatprep.subr.bf16.mxu0 0
    %2399 = vmatpush1.bf16.msra.mxu0 0
    %2400 = vmatprep.subr.bf16.mxu0 0
    %2401 = vmatpush1.bf16.msra.mxu0 0
    %2402 = vmatprep.mubr.bf16.mxu0 0
    %2403 = vmatmul.mubr.bf16.gmra.mrb[0].mxu0 %v2368
    %v2404 = vpop.f32.mrb[0].mxu0
    %v2405 = vadd.f32 %v2341, %v2404
    %v2406 = vpop.f32.mrb[0].mxu0
    %v2407 = vpop.f32.mrb[0].mxu0
    %v2408 = vadd.f32 %v2341, %v2407
    %v2409 = vpop.f32.mrb[0].mxu0
    %2410 = vdwg.mxu0
    %v2411 = vadd.f32 %v1696, %v2405
    %v2412 = vadd.f32 %v1697, %v2408
    %s2413 = scalar_lea.vmem %s10, 1
    %v2414 = vld [vmem:[%s2413] sm:$0x1]
    %s2415 = scalar_lea.vmem %s11, 1
    %v2416 = vld [vmem:[%s2415] sm:$0x1]
    %v2417 = vsel %vm614, %v2411, 0.0
    %2418 = vadd.xlane.f32.xlu0 %v2417
    %v2419 = vpop.xlane.xlu0 %2418
    %v2420 = vsel %vm618, %v2412, 0.0
    %2421 = vadd.xlane.f32.xlu0 %v2420
    %v2422 = vpop.xlane.xlu0 %2421
    %v2423 = vmul.f32 %v2419, %v622
    %v2424 = vmul.f32 %v2422, %v622
    %v2425 = vsub.f32 %v2411, %v2423
    %v2426 = vsub.f32 %v2412, %v2424
    %v2427 = vmul.f32 %v2425, %v2425
    %v2428 = vmul.f32 %v2426, %v2426
    %v2429 = vsel %vm614, %v2427, 0.0
    %2430 = vadd.xlane.f32.xlu0 %v2429
    %v2431 = vpop.xlane.xlu0 %2430
    %v2432 = vsel %vm618, %v2428, 0.0
    %2433 = vadd.xlane.f32.xlu0 %v2432
    %v2434 = vpop.xlane.xlu0 %2433
    %v2435 = vmul.f32 %v2431, %v622
    %v2436 = vmul.f32 %v2434, %v622
    %v2437 = vadd.f32 %v2435, 1e-06
    %v2438 = vadd.f32 %v2436, 1e-06
    %v2439 = vrsqrt.pop %v2437
    %v2440 = vrsqrt.pop %v2438
    %v2441 = vmul.f32 %v2425, %v2439
    %v2442 = vmul.f32 %v2426, %v2440
    %v2444 = vlaneseq
    %v2445 = vshrl.u32 %v2444, 7
    %v2446 = vsub.s32 0, %v2445
    %v2447 = vrot.slane %v2414, %v2446
    %v2449 = vmul.f32 %v2441, %v2447
    %v2450 = vmul.f32 %v2442, %v2447
    %v2452 = vlaneseq
    %v2453 = vshrl.u32 %v2452, 7
    %v2454 = vsub.s32 0, %v2453
    %v2455 = vrot.slane %v2416, %v2454
    %v2457 = vadd.f32 %v2449, %v2455
    %v2458 = vadd.f32 %v2450, %v2455
    %s2459 = scalar_lea.vmem %s12, 64
    %v2460 = vld [vmem:[%s2459] sm:$0xff]
    %v2461 = vld [vmem:[%s2459 + $0x8] sm:$0xff]
    %v2462 = vld [vmem:[%s2459 + $0x10] sm:$0xff]
    %v2463 = vld [vmem:[%s2459 + $0x18] sm:$0xff]
    %v2464 = vld [vmem:[%s2459 + $0x20] sm:$0xff]
    %v2465 = vld [vmem:[%s2459 + $0x28] sm:$0xff]
    %v2466 = vld [vmem:[%s2459 + $0x30] sm:$0xff]
    %v2467 = vld [vmem:[%s2459 + $0x38] sm:$0xff]
    %s2468 = scalar_lea.vmem %s13, 2
    %v2469 = vld [vmem:[%s2468] sm:$0x3]
    %v2470 = vpack.c.bf16 %v2458, %v2457
    %v2472 = vlaneseq
    %v2473 = vshrl.u32 %v2472, 7
    %v2474 = vsub.s32 0, %v2473
    %v2475 = vrot.slane %v2469, %v2474
    %v2476 = vlaneseq
    %v2477 = vshrl.u32 %v2476, 7
    %v2478 = vsub.s32 1, %v2477
    %v2479 = vrot.slane %v2469, %v2478
    %v2490 = vunpack.c.l.b16 %v2460
    %v2491 = vunpack.c.h.b16 %v2460
    %v2492 = vunpack.c.l.b16 %v2461
    %v2493 = vunpack.c.h.b16 %v2461
    %v2494 = vunpack.c.l.b16 %v2462
    %v2495 = vunpack.c.h.b16 %v2462
    %v2496 = vunpack.c.l.b16 %v2463
    %v2497 = vunpack.c.h.b16 %v2463
    %v2498 = vunpack.c.l.b16 %v2464
    %v2499 = vunpack.c.h.b16 %v2464
    %v2500 = vunpack.c.l.b16 %v2465
    %v2501 = vunpack.c.h.b16 %v2465
    %v2502 = vunpack.c.l.b16 %v2466
    %v2503 = vunpack.c.h.b16 %v2466
    %v2504 = vunpack.c.l.b16 %v2467
    %v2505 = vunpack.c.h.b16 %v2467
    %v2506 = vpack.c.b16 %v2492, %v2490
    %v2507 = vpack.c.b16 %v2493, %v2491
    %v2508 = vpack.c.b16 %v2496, %v2494
    %v2509 = vpack.c.b16 %v2497, %v2495
    %v2510 = vpack.c.b16 %v2500, %v2498
    %v2511 = vpack.c.b16 %v2501, %v2499
    %v2512 = vpack.c.b16 %v2504, %v2502
    %v2513 = vpack.c.b16 %v2505, %v2503
    %v2523 = vsel %vm614, %v2470, 0
    %2525 = vmatprep.subr.bf16.mxu0 %v2507
    %2526 = vmatpush1.bf16.msra.mxu0 %v2506
    %2527 = vmatprep.subr.bf16.mxu0 %v2509
    %2528 = vmatpush1.bf16.msra.mxu0 %v2508
    %2529 = vmatprep.subr.bf16.mxu0 %v2511
    %2530 = vmatpush1.bf16.msra.mxu0 %v2510
    %2531 = vmatprep.subr.bf16.mxu0 %v2513
    %2532 = vmatpush1.bf16.msra.mxu0 %v2512
    %2533 = vmatprep.subr.bf16.mxu0 0
    %2534 = vmatpush1.bf16.msra.mxu0 0
    %2535 = vmatprep.subr.bf16.mxu0 0
    %2536 = vmatpush1.bf16.msra.mxu0 0
    %2537 = vmatprep.subr.bf16.mxu0 0
    %2538 = vmatpush1.bf16.msra.mxu0 0
    %2539 = vmatprep.subr.bf16.mxu0 0
    %2540 = vmatpush1.bf16.msra.mxu0 0
    %2541 = vmatprep.subr.bf16.mxu0 0
    %2542 = vmatpush1.bf16.msra.mxu0 0
    %2543 = vmatprep.subr.bf16.mxu0 0
    %2544 = vmatpush1.bf16.msra.mxu0 0
    %2545 = vmatprep.subr.bf16.mxu0 0
    %2546 = vmatpush1.bf16.msra.mxu0 0
    %2547 = vmatprep.subr.bf16.mxu0 0
    %2548 = vmatpush1.bf16.msra.mxu0 0
    %2549 = vmatprep.subr.bf16.mxu0 0
    %2550 = vmatpush1.bf16.msra.mxu0 0
    %2551 = vmatprep.subr.bf16.mxu0 0
    %2552 = vmatpush1.bf16.msra.mxu0 0
    %2553 = vmatprep.subr.bf16.mxu0 0
    %2554 = vmatpush1.bf16.msra.mxu0 0
    %2555 = vmatprep.subr.bf16.mxu0 0
    %2556 = vmatpush1.bf16.msra.mxu0 0
    %2557 = vmatprep.mubr.bf16.mxu0 0
    %2558 = vmatmul.mubr.bf16.gmra.mrb[0].mxu0 %v2523
    %v2559 = vpop.f32.mrb[0].mxu0
    %v2560 = vadd.f32 %v2475, %v2559
    %v2561 = vpop.f32.mrb[0].mxu0
    %v2562 = vadd.f32 %v2479, %v2561
    %v2563 = vpop.f32.mrb[0].mxu0
    %v2564 = vadd.f32 %v2475, %v2563
    %v2565 = vpop.f32.mrb[0].mxu0
    %v2566 = vadd.f32 %v2479, %v2565
    %2567 = vdwg.mxu0
    %v2568 = vmul.f32 %v2560, %v2560
    %v2569 = vmul.f32 %v2562, %v2562
    %v2570 = vmul.f32 %v2564, %v2564
    %v2571 = vmul.f32 %v2566, %v2566
    %v2572 = vmul.f32 %v2560, %v2568
    %v2573 = vmul.f32 %v2562, %v2569
    %v2574 = vmul.f32 %v2564, %v2570
    %v2575 = vmul.f32 %v2566, %v2571
    %v2576 = vmul.f32 %v2572, 0.044715
    %v2577 = vmul.f32 %v2573, 0.044715
    %v2578 = vmul.f32 %v2574, 0.044715
    %v2579 = vmul.f32 %v2575, 0.044715
    %v2580 = vadd.f32 %v2560, %v2576
    %v2581 = vadd.f32 %v2562, %v2577
    %v2582 = vadd.f32 %v2564, %v2578
    %v2583 = vadd.f32 %v2566, %v2579
    %v2584 = vmul.f32 %v2580, 0.7978846
    %v2585 = vmul.f32 %v2581, 0.7978846
    %v2586 = vmul.f32 %v2582, 0.7978846
    %v2587 = vmul.f32 %v2583, 0.7978846
    %v2588 = vtanh.pop %v2584
    %v2589 = vtanh.pop %v2585
    %v2590 = vtanh.pop %v2586
    %v2591 = vtanh.pop %v2587
    %v2592 = vadd.f32 %v2588, 1.0
    %v2593 = vadd.f32 %v2589, 1.0
    %v2594 = vadd.f32 %v2590, 1.0
    %v2595 = vadd.f32 %v2591, 1.0
    %v2596 = vmul.f32 %v2592, 0.5
    %v2597 = vmul.f32 %v2593, 0.5
    %v2598 = vmul.f32 %v2594, 0.5
    %v2599 = vmul.f32 %v2595, 0.5
    %v2600 = vmul.f32 %v2560, %v2596
    %v2601 = vmul.f32 %v2562, %v2597
    %v2602 = vmul.f32 %v2564, %v2598
    %v2603 = vmul.f32 %v2566, %v2599
    %s2604 = scalar_lea.vmem %s14, 128
    %v2605 = vld [vmem:[%s2604] sm:$0xf]
    %v2606 = vld [vmem:[%s2604 + $0x4] sm:$0xf]
    %v2607 = vld [vmem:[%s2604 + $0x8] sm:$0xf]
    %v2608 = vld [vmem:[%s2604 + $0xc] sm:$0xf]
    %v2609 = vld [vmem:[%s2604 + $0x10] sm:$0xf]
    %v2610 = vld [vmem:[%s2604 + $0x14] sm:$0xf]
    %v2611 = vld [vmem:[%s2604 + $0x18] sm:$0xf]
    %v2612 = vld [vmem:[%s2604 + $0x1c] sm:$0xf]
    %v2613 = vld [vmem:[%s2604 + $0x20] sm:$0xf]
    %v2614 = vld [vmem:[%s2604 + $0x24] sm:$0xf]
    %v2615 = vld [vmem:[%s2604 + $0x28] sm:$0xf]
    %v2616 = vld [vmem:[%s2604 + $0x2c] sm:$0xf]
    %v2617 = vld [vmem:[%s2604 + $0x30] sm:$0xf]
    %v2618 = vld [vmem:[%s2604 + $0x34] sm:$0xf]
    %v2619 = vld [vmem:[%s2604 + $0x38] sm:$0xf]
    %v2620 = vld [vmem:[%s2604 + $0x3c] sm:$0xf]
    %v2621 = vld [vmem:[%s2604 + $0x40] sm:$0xf]
    %v2622 = vld [vmem:[%s2604 + $0x44] sm:$0xf]
    %v2623 = vld [vmem:[%s2604 + $0x48] sm:$0xf]
    %v2624 = vld [vmem:[%s2604 + $0x4c] sm:$0xf]
    %v2625 = vld [vmem:[%s2604 + $0x50] sm:$0xf]
    %v2626 = vld [vmem:[%s2604 + $0x54] sm:$0xf]
    %v2627 = vld [vmem:[%s2604 + $0x58] sm:$0xf]
    %v2628 = vld [vmem:[%s2604 + $0x5c] sm:$0xf]
    %v2629 = vld [vmem:[%s2604 + $0x60] sm:$0xf]
    %v2630 = vld [vmem:[%s2604 + $0x64] sm:$0xf]
    %v2631 = vld [vmem:[%s2604 + $0x68] sm:$0xf]
    %v2632 = vld [vmem:[%s2604 + $0x6c] sm:$0xf]
    %v2633 = vld [vmem:[%s2604 + $0x70] sm:$0xf]
    %v2634 = vld [vmem:[%s2604 + $0x74] sm:$0xf]
    %v2635 = vld [vmem:[%s2604 + $0x78] sm:$0xf]
    %v2636 = vld [vmem:[%s2604 + $0x7c] sm:$0xf]
    %s2637 = scalar_lea.vmem %s15, 1
    %v2638 = vld [vmem:[%s2637] sm:$0x1]
    %v2639 = vpack.c.bf16 %v2602, %v2600
    %v2640 = vpack.c.bf16 %v2603, %v2601
    %v2642 = vlaneseq
    %v2643 = vshrl.u32 %v2642, 7
    %v2644 = vsub.s32 0, %v2643
    %v2645 = vrot.slane %v2638, %v2644
    %v2679 = vunpack.c.l.b16 %v2605
    %v2680 = vunpack.c.l.b16 %v2606
    %v2681 = vunpack.c.l.b16 %v2607
    %v2682 = vunpack.c.l.b16 %v2608
    %v2683 = vunpack.c.l.b16 %v2609
    %v2684 = vunpack.c.l.b16 %v2610
    %v2685 = vunpack.c.l.b16 %v2611
    %v2686 = vunpack.c.l.b16 %v2612
    %v2687 = vunpack.c.l.b16 %v2613
    %v2688 = vunpack.c.l.b16 %v2614
    %v2689 = vunpack.c.l.b16 %v2615
    %v2690 = vunpack.c.l.b16 %v2616
    %v2691 = vunpack.c.l.b16 %v2617
    %v2692 = vunpack.c.l.b16 %v2618
    %v2693 = vunpack.c.l.b16 %v2619
    %v2694 = vunpack.c.l.b16 %v2620
    %v2695 = vunpack.c.l.b16 %v2621
    %v2696 = vunpack.c.l.b16 %v2622
    %v2697 = vunpack.c.l.b16 %v2623
    %v2698 = vunpack.c.l.b16 %v2624
    %v2699 = vunpack.c.l.b16 %v2625
    %v2700 = vunpack.c.l.b16 %v2626
    %v2701 = vunpack.c.l.b16 %v2627
    %v2702 = vunpack.c.l.b16 %v2628
    %v2703 = vunpack.c.l.b16 %v2629
    %v2704 = vunpack.c.l.b16 %v2630
    %v2705 = vunpack.c.l.b16 %v2631
    %v2706 = vunpack.c.l.b16 %v2632
    %v2707 = vunpack.c.l.b16 %v2633
    %v2708 = vunpack.c.l.b16 %v2634
    %v2709 = vunpack.c.l.b16 %v2635
    %v2710 = vunpack.c.l.b16 %v2636
    %v2711 = vpack.c.b16 %v2680, %v2679
    %v2712 = vpack.c.b16 %v2682, %v2681
    %v2713 = vpack.c.b16 %v2684, %v2683
    %v2714 = vpack.c.b16 %v2686, %v2685
    %v2715 = vpack.c.b16 %v2688, %v2687
    %v2716 = vpack.c.b16 %v2690, %v2689
    %v2717 = vpack.c.b16 %v2692, %v2691
    %v2718 = vpack.c.b16 %v2694, %v2693
    %v2719 = vpack.c.b16 %v2696, %v2695
    %v2720 = vpack.c.b16 %v2698, %v2697
    %v2721 = vpack.c.b16 %v2700, %v2699
    %v2722 = vpack.c.b16 %v2702, %v2701
    %v2723 = vpack.c.b16 %v2704, %v2703
    %v2724 = vpack.c.b16 %v2706, %v2705
    %v2725 = vpack.c.b16 %v2708, %v2707
    %v2726 = vpack.c.b16 %v2710, %v2709
    %2743 = vmatprep.subr.bf16.mxu0 0
    %2744 = vmatpush1.bf16.msra.mxu0 %v2711
    %2745 = vmatprep.subr.bf16.mxu0 0
    %2746 = vmatpush1.bf16.msra.mxu0 %v2712
    %2747 = vmatprep.subr.bf16.mxu0 0
    %2748 = vmatpush1.bf16.msra.mxu0 %v2713
    %2749 = vmatprep.subr.bf16.mxu0 0
    %2750 = vmatpush1.bf16.msra.mxu0 %v2714
    %2751 = vmatprep.subr.bf16.mxu0 0
    %2752 = vmatpush1.bf16.msra.mxu0 %v2715
    %2753 = vmatprep.subr.bf16.mxu0 0
    %2754 = vmatpush1.bf16.msra.mxu0 %v2716
    %2755 = vmatprep.subr.bf16.mxu0 0
    %2756 = vmatpush1.bf16.msra.mxu0 %v2717
    %2757 = vmatprep.subr.bf16.mxu0 0
    %2758 = vmatpush1.bf16.msra.mxu0 %v2718
    %2759 = vmatprep.subr.bf16.mxu0 0
    %2760 = vmatpush1.bf16.msra.mxu0 %v2719
    %2761 = vmatprep.subr.bf16.mxu0 0
    %2762 = vmatpush1.bf16.msra.mxu0 %v2720
    %2763 = vmatprep.subr.bf16.mxu0 0
    %2764 = vmatpush1.bf16.msra.mxu0 %v2721
    %2765 = vmatprep.subr.bf16.mxu0 0
    %2766 = vmatpush1.bf16.msra.mxu0 %v2722
    %2767 = vmatprep.subr.bf16.mxu0 0
    %2768 = vmatpush1.bf16.msra.mxu0 %v2723
    %2769 = vmatprep.subr.bf16.mxu0 0
    %2770 = vmatpush1.bf16.msra.mxu0 %v2724
    %2771 = vmatprep.subr.bf16.mxu0 0
    %2772 = vmatpush1.bf16.msra.mxu0 %v2725
    %2773 = vmatprep.subr.bf16.mxu0 0
    %2774 = vmatpush1.bf16.msra.mxu0 %v2726
    %2775 = vmatprep.mubr.bf16.mxu0 %v2640
    %2776 = vmatmul.mubr.bf16.gmra.mrb[0].mxu0 %v2639
    %v2777 = vpop.f32.mrb[0].mxu0
    %v2778 = vadd.f32 %v2645, %v2777
    %v2779 = vpop.f32.mrb[0].mxu0
    %v2780 = vpop.f32.mrb[0].mxu0
    %v2781 = vpop.f32.mrb[0].mxu0
    %2782 = vdwg.mxu0
    %v2783 = vadd.f32 %v2411, %v2778
    %v2784 = vld [vmem:[%s16] sm:$0x1]
    %v2785 = vld [vmem:[%s17] sm:$0x1]
    %v2786 = vsel %vm614, %v2783, 0.0
    %2787 = vadd.xlane.f32.xlu0 %v2786
    %v2788 = vpop.xlane.xlu0 %2787
    %v2789 = vmul.f32 %v2788, %v622
    %v2790 = vsub.f32 %v2783, %v2789
    %v2791 = vmul.f32 %v2790, %v2790
    %v2792 = vsel %vm614, %v2791, 0.0
    %2793 = vadd.xlane.f32.xlu0 %v2792
    %v2794 = vpop.xlane.xlu0 %2793
    %v2795 = vmul.f32 %v2794, %v622
    %v2796 = vadd.f32 %v2795, 1e-06
    %v2797 = vrsqrt.pop %v2796
    %v2798 = vmul.f32 %v2790, %v2797
    %v2800 = vlaneseq
    %v2801 = vshrl.u32 %v2800, 7
    %v2802 = vsub.s32 0, %v2801
    %v2803 = vrot.slane %v2784, %v2802
    %v2805 = vmul.f32 %v2798, %v2803
    %v2807 = vlaneseq
    %v2808 = vshrl.u32 %v2807, 7
    %v2809 = vsub.s32 0, %v2808
    %v2810 = vrot.slane %v2785, %v2809
    %v2812 = vadd.f32 %v2805, %v2810
    %v2814 = vrot.slane %v2812, 4
    %v2816 = vsel %vm606, %v2812, %v2814
    %v2817 = vld [vmem:[%s18] sm:$0xf]
    %v2818 = vld [vmem:[%s18 + $0x4] sm:$0xf]
    %v2819 = vld [vmem:[%s18 + $0x8] sm:$0xf]
    %v2820 = vld [vmem:[%s18 + $0xc] sm:$0xf]
    %v2821 = vld [vmem:[%s18 + $0x10] sm:$0xf]
    %v2822 = vld [vmem:[%s18 + $0x14] sm:$0xf]
    %v2823 = vld [vmem:[%s18 + $0x18] sm:$0xf]
    %v2824 = vld [vmem:[%s18 + $0x1c] sm:$0xf]
    %v2825 = vld [vmem:[%s19] sm:$0x1]
    %v2826 = vpack.c.bf16 %v2816, %v2816
    %v2828 = vlaneseq
    %v2829 = vshrl.u32 %v2828, 7
    %v2830 = vsub.s32 0, %v2829
    %v2831 = vrot.slane %v2825, %v2830
    %v2841 = vunpack.c.l.b16 %v2817
    %v2842 = vunpack.c.l.b16 %v2818
    %v2843 = vunpack.c.l.b16 %v2819
    %v2844 = vunpack.c.l.b16 %v2820
    %v2845 = vunpack.c.l.b16 %v2821
    %v2846 = vunpack.c.l.b16 %v2822
    %v2847 = vunpack.c.l.b16 %v2823
    %v2848 = vunpack.c.l.b16 %v2824
    %v2849 = vpack.c.b16 %v2842, %v2841
    %v2850 = vpack.c.b16 %v2844, %v2843
    %v2851 = vpack.c.b16 %v2846, %v2845
    %v2852 = vpack.c.b16 %v2848, %v2847
    %v2858 = vsel %vm614, %v2826, 0
    %2860 = vmatprep.subr.bf16.mxu0 0
    %2861 = vmatpush1.bf16.msra.mxu0 %v2849
    %2862 = vmatprep.subr.bf16.mxu0 0
    %2863 = vmatpush1.bf16.msra.mxu0 %v2850
    %2864 = vmatprep.subr.bf16.mxu0 0
    %2865 = vmatpush1.bf16.msra.mxu0 %v2851
    %2866 = vmatprep.subr.bf16.mxu0 0
    %2867 = vmatpush1.bf16.msra.mxu0 %v2852
    %2868 = vmatprep.subr.bf16.mxu0 0
    %2869 = vmatpush1.bf16.msra.mxu0 0
    %2870 = vmatprep.subr.bf16.mxu0 0
    %2871 = vmatpush1.bf16.msra.mxu0 0
    %2872 = vmatprep.subr.bf16.mxu0 0
    %2873 = vmatpush1.bf16.msra.mxu0 0
    %2874 = vmatprep.subr.bf16.mxu0 0
    %2875 = vmatpush1.bf16.msra.mxu0 0
    %2876 = vmatprep.subr.bf16.mxu0 0
    %2877 = vmatpush1.bf16.msra.mxu0 0
    %2878 = vmatprep.subr.bf16.mxu0 0
    %2879 = vmatpush1.bf16.msra.mxu0 0
    %2880 = vmatprep.subr.bf16.mxu0 0
    %2881 = vmatpush1.bf16.msra.mxu0 0
    %2882 = vmatprep.subr.bf16.mxu0 0
    %2883 = vmatpush1.bf16.msra.mxu0 0
    %2884 = vmatprep.subr.bf16.mxu0 0
    %2885 = vmatpush1.bf16.msra.mxu0 0
    %2886 = vmatprep.subr.bf16.mxu0 0
    %2887 = vmatpush1.bf16.msra.mxu0 0
    %2888 = vmatprep.subr.bf16.mxu0 0
    %2889 = vmatpush1.bf16.msra.mxu0 0
    %2890 = vmatprep.subr.bf16.mxu0 0
    %2891 = vmatpush1.bf16.msra.mxu0 0
    %2892 = vmatprep.mubr.bf16.mxu0 0
    %2893 = vmatmul.mubr.bf16.gmra.mrb[0].mxu0 %v2858
    %v2894 = vpop.f32.mrb[0].mxu0
    %v2895 = vadd.f32 %v2831, %v2894
    %v2896 = vpop.f32.mrb[0].mxu0
    %v2897 = vpop.f32.mrb[0].mxu0
    %v2898 = vpop.f32.mrb[0].mxu0
    %2899 = vdwg.mxu0
    %2900 = vst [vmem:[#allocation2] sm:$0x3] %v2895
    // Predicated region
    $region82: #{vit_forward.1} parent=1 // pred_check
      _
    $region83: #{vit_forward.1} parent=1 // pred_check_branch
      %2902 = sbr.rel (0) target = $region85
    $region84: #{vit_forward.1} parent=1 // pred_region
      %s2904 = ssub.s32 32, 32
      %2905 = vsyncadd [#allocation3], %s2904
      %s2907 = sshll.u32 [#allocation2], 4
      %s2908 = int_to_ptr.vmem [resolvable:$true] %s2907
      %2910 = dma.vmem_to_hbm [thread:$0]  %s2908, 32, %s20, [#allocation3]
    $region85: #{vit_forward.1} parent=1 // pred_fallthru
      _
    // Predicated region
    $region86: #{vit_forward.1} parent=1 // pred_check
      _
    $region87: #{vit_forward.1} parent=1 // pred_check_branch
      %2912 = sbr.rel (0) target = $region89
    $region88: #{vit_forward.1} parent=1 // pred_region
      %2913 = dma.done [#allocation3], 32
    $region89: #{vit_forward.1} parent=1 // pred_fallthru
      _
    %2914 = vsyncpa [#allocation3], 1

</llo_original>
